<compile_context>
chip_gen: v6e
topology: v6e:2x2x1
jax: 0.10.0
libtpu: 0.0.40
codegen_flags: <defaults>
</compile_context>

<pallas_src>
import functools

import jax
import jax.numpy as jnp
from jax.experimental import pallas as pl
from jax.experimental.pallas import tpu as pltpu

C_IN = 512          # SA_Module(512) / Linear(512, 384) are hard-coded in the module
C_QK = C_IN // 8    # 64
FC_DIM = 384
N_CLASSES = 10
NCP = 128           # classifier lanes padded to 128 (lane-dense output stores)
F32 = jnp.float32
BF16 = jnp.bfloat16


def _pick_batch_tile(batch, n_pixels, target_rows=256):
  """Largest divisor Bt of `batch` with Bt*N <= target_rows, preferring >= 2
  grid steps so the parallel grid axis can shard across v7x's two TCs."""
  cap = max(1, target_rows // max(n_pixels, 1))
  divs = [d for d in range(1, batch + 1) if batch % d == 0 and d <= cap]
  multi = [d for d in divs if batch // d >= 2]
  return max(multi) if multi else max(divs)


def _network_kernel(
    # inputs: per-block feature tiles + shared parameters
    x_ref, hha_ref,
    wq_ref, bq_ref, wk_ref, bk_ref, wv_ref, bv_ref,
    gamma_ref,
    wr_ref, br_ref, wh_ref, bh_ref,
    wc_ref, bc_ref, war_ref, bar_ref, wad_ref, bad_ref,
    # outputs
    logits_ref, concat_ref,
):
  bt, n, c = x_ref.shape
  x = x_ref[...]                                     # (Bt, N, C) bf16
  hha = hha_ref[...]                                 # (Bt, N, C) bf16
  x_flat = x.reshape(bt * n, c)                      # (Bt*N, C)  bf16

  # --- SA_Module: 1x1 convs == flattened per-pixel matmuls (fills MXU M dim)
  q = jnp.dot(x_flat, wq_ref[...], preferred_element_type=F32) + bq_ref[...]
  k = jnp.dot(x_flat, wk_ref[...], preferred_element_type=F32) + bk_ref[...]
  v = jnp.dot(x_flat, wv_ref[...], preferred_element_type=F32) + bv_ref[...]
  q = q.reshape(bt, n, C_QK)
  k = k.reshape(bt, n, C_QK)
  v = v.reshape(bt, n, c)

  # energy[b, i, j] = <q_bi, k_bj>   (== torch.bmm(proj_query, proj_key))
  energy = jnp.einsum("bic,bjc->bij", q, k, preferred_element_type=F32)

  # stable softmax over keys (kept in f32; reciprocal on the EUP)
  e_max = jnp.max(energy, axis=-1, keepdims=True)
  e_exp = jnp.exp(energy - e_max)
  denom = jnp.sum(e_exp, axis=-1, keepdims=True)
  att = e_exp * pl.reciprocal(denom, approx=True)    # (Bt, N, N)

  # --- fused attention aggregation + AdaptiveAvgPool2d((1,1)) --------------
  # mean_i out[b, :, i] = (mean_i att[b, i, :]) @ V[b]   (everything linear)
  att_mean = jnp.mean(att, axis=1, keepdims=True)                  # (Bt, 1, N)
  out_mean = jnp.einsum("bqk,bkc->bqc", att_mean, v,
                        preferred_element_type=F32)                # (Bt, 1, C)
  x_mean = jnp.mean(x.astype(F32), axis=1, keepdims=True)          # (Bt, 1, C)
  hha_mean = jnp.mean(hha.astype(F32), axis=1, keepdims=True)      # (Bt, 1, C)

  g = gamma_ref[0]                                                 # SMEM scalar
  rgb_emb = (g * out_mean + x_mean).reshape(bt, c)                 # (Bt, C)
  hha_emb = (g * out_mean + hha_mean).reshape(bt, c)               # (Bt, C)

  # --- fc6 heads: Dropout(identity) -> Linear(512,384) -> ReLU -> Dropout ---
  rgb_enc = jnp.maximum(
      jnp.dot(rgb_emb.astype(BF16), wr_ref[...],
              preferred_element_type=F32) + br_ref[...], 0.0)      # (Bt, 384)
  hha_enc = jnp.maximum(
      jnp.dot(hha_emb.astype(BF16), wh_ref[...],
              preferred_element_type=F32) + bh_ref[...], 0.0)      # (Bt, 384)

  # --- classifiers (weights column-padded to NCP lanes) ---------------------
  # concat classifier on [rgb_enc, hha_enc] via the two 384-row weight halves.
  model = (jnp.dot(rgb_enc, wc_ref[0:FC_DIM, :], preferred_element_type=F32)
           + jnp.dot(hha_enc, wc_ref[FC_DIM:2 * FC_DIM, :],
                     preferred_element_type=F32)
           + bc_ref[...])                                          # (Bt, NCP)
  aux_r = jnp.dot(rgb_enc, war_ref[...], preferred_element_type=F32) + bar_ref[...]
  aux_d = jnp.dot(hha_enc, wad_ref[...], preferred_element_type=F32) + bad_ref[...]
  model = (model + aux_r + aux_d) * (1.0 / 3.0)

  # lane-dense packed stores (384 / 768 lanes, unmasked vst)
  logits_ref[0] = jnp.concatenate([model, aux_r, aux_d], axis=-1)  # (Bt, 3*NCP)
  concat_ref[0] = jnp.concatenate([rgb_enc, hha_enc], axis=-1)     # (Bt, 768)


def network_forward(rgb_feat, hha_feat, params, *, target_rows=256):
  """rgb_feat / hha_feat: (B, 512, H, W) NCHW backbone features (float32)."""
  B, C, H, W = rgb_feat.shape
  assert C == C_IN
  N = H * W

  # glue: NCHW -> (B, N, C) channels-last, bf16 to halve transpose+DMA bytes
  x_nc = jnp.transpose(rgb_feat.astype(BF16).reshape(B, C, N), (0, 2, 1))
  h_nc = jnp.transpose(hha_feat.astype(BF16).reshape(B, C, N), (0, 2, 1))

  Bt = _pick_batch_tile(B, N, target_rows)
  G = B // Bt

  p = params
  pad_cols = lambda w: jnp.pad(w.astype(F32), ((0, 0), (0, NCP - w.shape[1])))

  # weights pre-transposed to (in, out) so the kernel does row-major x @ W
  args = (
      x_nc, h_nc,
      p["wq"].T.astype(BF16), p["bq"].reshape(1, -1).astype(F32),
      p["wk"].T.astype(BF16), p["bk"].reshape(1, -1).astype(F32),
      p["wv"].T.astype(BF16), p["bv"].reshape(1, -1).astype(F32),
      p["gamma"].reshape(1).astype(F32),
      p["wr"].T.astype(BF16), p["br"].reshape(1, -1).astype(F32),
      p["wh"].T.astype(BF16), p["bh"].reshape(1, -1).astype(F32),
      pad_cols(p["wc"].T), pad_cols(p["bc"].reshape(1, -1)),
      pad_cols(p["war"].T), pad_cols(p["bar"].reshape(1, -1)),
      pad_cols(p["wad"].T), pad_cols(p["bad"].reshape(1, -1)),
  )

  def full(shape):  # constant (never-changing) parameter block
    return pl.BlockSpec(shape, lambda *_: (0,) * len(shape))

  feat = pl.BlockSpec((Bt, N, C), lambda b: (b, 0, 0))
  in_specs = [
      feat, feat,
      full((C, C_QK)), full((1, C_QK)),               # query conv
      full((C, C_QK)), full((1, C_QK)),               # key conv
      full((C, C)), full((1, C)),                     # value conv
      pl.BlockSpec(memory_space=pltpu.MemorySpace.SMEM),   # gamma scalar
      full((C, FC_DIM)), full((1, FC_DIM)),           # rgb_fc6
      full((C, FC_DIM)), full((1, FC_DIM)),           # hha_fc6
      full((2 * FC_DIM, NCP)), full((1, NCP)),        # concat_classifier (padded)
      full((FC_DIM, NCP)), full((1, NCP)),            # aux_rgb_classifier (padded)
      full((FC_DIM, NCP)), full((1, NCP)),            # aux_d_classifier (padded)
  ]
  out_specs = [
      pl.BlockSpec((1, Bt, 3 * NCP), lambda b: (b, 0, 0)),
      pl.BlockSpec((1, Bt, 2 * FC_DIM), lambda b: (b, 0, 0)),
  ]
  out_shape = (
      jax.ShapeDtypeStruct((G, Bt, 3 * NCP), F32),
      jax.ShapeDtypeStruct((G, Bt, 2 * FC_DIM), F32),
  )

  logits, concat = pl.pallas_call(
      _network_kernel,
      out_shape=out_shape,
      grid_spec=pltpu.PrefetchScalarGridSpec(
          num_scalar_prefetch=0,
          grid=(G,),
          in_specs=in_specs,
          out_specs=out_specs,
      ),
      compiler_params=pltpu.CompilerParams(
          dimension_semantics=("parallel",)),
  )(*args)

  logits = logits.reshape(B, 3 * NCP)
  concat = concat.reshape(B, 2 * FC_DIM)
  model = logits[:, 0:N_CLASSES]
  aux_r = logits[:, NCP:NCP + N_CLASSES]
  aux_d = logits[:, 2 * NCP:2 * NCP + N_CLASSES]
  return model, aux_r, aux_d, concat


def init_params(key):
  ks = jax.random.split(key, 20)
  n = lambda k, shape, s=0.02: s * jax.random.normal(k, shape, dtype=F32)
  return {
      # SA_Module (PyTorch Conv2d 1x1 weight (out,in,1,1) -> stored as (out,in))
      "wq": n(ks[0], (C_QK, C_IN)), "bq": n(ks[1], (C_QK,)),
      "wk": n(ks[2], (C_QK, C_IN)), "bk": n(ks[3], (C_QK,)),
      "wv": n(ks[4], (C_IN, C_IN)), "bv": n(ks[5], (C_IN,)),
      # PyTorch init is gamma = 0; use a nonzero value so the attention path
      # actually affects the output numerically.
      "gamma": jnp.array([0.1], dtype=F32),
      # fc6 heads, Linear weight stored (out, in) as in PyTorch
      "wr": n(ks[6], (FC_DIM, C_IN)), "br": n(ks[7], (FC_DIM,)),
      "wh": n(ks[8], (FC_DIM, C_IN)), "bh": n(ks[9], (FC_DIM,)),
      # classifiers
      "wc": n(ks[10], (N_CLASSES, 2 * FC_DIM)), "bc": n(ks[11], (N_CLASSES,)),
      "war": n(ks[12], (N_CLASSES, FC_DIM)), "bar": n(ks[13], (N_CLASSES,)),
      "wad": n(ks[14], (N_CLASSES, FC_DIM)), "bad": n(ks[15], (N_CLASSES,)),
  }


def reference_forward(rgb_feat, hha_feat, p):
  """Pure-JAX f32 mirror of the PyTorch forward (NCHW), for correctness check."""
  B, C, H, W = rgb_feat.shape
  N = H * W
  x = rgb_feat.reshape(B, C, N)
  hha = hha_feat.reshape(B, C, N)

  q = jnp.einsum("oc,bcn->bon", p["wq"], x) + p["bq"][None, :, None]
  k = jnp.einsum("oc,bcn->bon", p["wk"], x) + p["bk"][None, :, None]
  v = jnp.einsum("oc,bcn->bon", p["wv"], x) + p["bv"][None, :, None]
  proj_query = jnp.transpose(q, (0, 2, 1))                 # (B, N, C/8)
  energy = jnp.einsum("bnc,bcm->bnm", proj_query, k)       # (B, N, N)
  att = jax.nn.softmax(energy, axis=-1)
  out = jnp.einsum("bcj,bij->bci", v, att)                 # bmm(V, att^T)

  g = p["gamma"][0]
  rgb_out = g * out + x
  hha_out = g * out + hha
  rgb_emb = jnp.mean(rgb_out, axis=-1)                     # (B, C)
  hha_emb = jnp.mean(hha_out, axis=-1)

  rgb_enc = jax.nn.relu(rgb_emb @ p["wr"].T + p["br"])
  hha_enc = jax.nn.relu(hha_emb @ p["wh"].T + p["bh"])
  concat = jnp.concatenate([rgb_enc, hha_enc], axis=1)
  model = concat @ p["wc"].T + p["bc"]
  aux_r = rgb_enc @ p["war"].T + p["bar"]
  aux_d = hha_enc @ p["wad"].T + p["bad"]
  model = (model + aux_r + aux_d) / 3.0
  return model, aux_r, aux_d, concat


if __name__ == "__main__":
  key = jax.random.PRNGKey(0)
  k_param, k_data = jax.random.split(key)
  params = init_params(k_param)

  # B=2 exercises Bt=1 (grid=2); B=8 exercises the batched path (Bt=4, grid=2)
  for (B, H, W) in [(2, 4, 4), (8, 4, 4)]:
    k_rgb, k_hha = jax.random.split(jax.random.fold_in(k_data, B))
    rgb_feat = jax.random.normal(k_rgb, (B, C_IN, H, W), dtype=F32)
    hha_feat = jax.random.normal(k_hha, (B, C_IN, H, W), dtype=F32)

    fwd = jax.jit(functools.partial(network_forward, params=params))
    outs = jax.block_until_ready(fwd(rgb_feat, hha_feat))

    refs = reference_forward(rgb_feat, hha_feat, params)
    for got, want in zip(outs, refs):
      assert got.shape == want.shape, (got.shape, want.shape)
      # bf16 matmul inputs (f32 accumulation) -> relaxed tolerance vs f32 ref
      err = float(jnp.max(jnp.abs(got.astype(F32) - want)))
      assert jnp.allclose(got.astype(F32), want, rtol=5e-2, atol=5e-3), err

  print("KERNEL_OK")
</pallas_src>

<mosaic_0001>
module attributes {stable_mosaic.version = 11 : i64} {
  func.func @_network_kernel(%arg0: i32, %arg1: memref<1x16x512xbf16, #tpu.memory_space<vmem>>, %arg2: memref<1x16x512xbf16, #tpu.memory_space<vmem>>, %arg3: memref<512x64xbf16, #tpu.memory_space<vmem>>, %arg4: memref<1x64xf32, #tpu.memory_space<vmem>>, %arg5: memref<512x64xbf16, #tpu.memory_space<vmem>>, %arg6: memref<1x64xf32, #tpu.memory_space<vmem>>, %arg7: memref<512x512xbf16, #tpu.memory_space<vmem>>, %arg8: memref<1x512xf32, #tpu.memory_space<vmem>>, %arg9: memref<1xf32, #tpu.memory_space<smem>>, %arg10: memref<512x384xbf16, #tpu.memory_space<vmem>>, %arg11: memref<1x384xf32, #tpu.memory_space<vmem>>, %arg12: memref<512x384xbf16, #tpu.memory_space<vmem>>, %arg13: memref<1x384xf32, #tpu.memory_space<vmem>>, %arg14: memref<768x128xf32, #tpu.memory_space<vmem>>, %arg15: memref<1x128xf32, #tpu.memory_space<vmem>>, %arg16: memref<384x128xf32, #tpu.memory_space<vmem>>, %arg17: memref<1x128xf32, #tpu.memory_space<vmem>>, %arg18: memref<384x128xf32, #tpu.memory_space<vmem>>, %arg19: memref<1x128xf32, #tpu.memory_space<vmem>>, %arg20: memref<1x1x384xf32, #tpu.memory_space<vmem>>, %arg21: memref<1x1x768xf32, #tpu.memory_space<vmem>>) attributes {dimension_semantics = [#tpu.dimension_semantics<parallel>], iteration_bounds = array<i64: 2>, scalar_prefetch = 0 : i64, scratch_operands = 0 : i64, tpu.core_type = #tpu.core_type<tc>, window_params = [{transform_indices = @transform_0, window_bounds = array<i64: 1, 16, 512>}, {transform_indices = @transform_1, window_bounds = array<i64: 1, 16, 512>}, {pipeline_mode = #tpu.pipeline_mode<synchronous>, transform_indices = @transform_2, window_bounds = array<i64: 512, 64>}, {pipeline_mode = #tpu.pipeline_mode<synchronous>, transform_indices = @transform_3, window_bounds = array<i64: 1, 64>}, {pipeline_mode = #tpu.pipeline_mode<synchronous>, transform_indices = @transform_4, window_bounds = array<i64: 512, 64>}, {pipeline_mode = #tpu.pipeline_mode<synchronous>, transform_indices = @transform_5, window_bounds = array<i64: 1, 64>}, {pipeline_mode = #tpu.pipeline_mode<synchronous>, transform_indices = @transform_6, window_bounds = array<i64: 512, 512>}, {pipeline_mode = #tpu.pipeline_mode<synchronous>, transform_indices = @transform_7, window_bounds = array<i64: 1, 512>}, {transform_indices = @transform_8, window_bounds = array<i64: 1>}, {pipeline_mode = #tpu.pipeline_mode<synchronous>, transform_indices = @transform_9, window_bounds = array<i64: 512, 384>}, {pipeline_mode = #tpu.pipeline_mode<synchronous>, transform_indices = @transform_10, window_bounds = array<i64: 1, 384>}, {pipeline_mode = #tpu.pipeline_mode<synchronous>, transform_indices = @transform_11, window_bounds = array<i64: 512, 384>}, {pipeline_mode = #tpu.pipeline_mode<synchronous>, transform_indices = @transform_12, window_bounds = array<i64: 1, 384>}, {pipeline_mode = #tpu.pipeline_mode<synchronous>, transform_indices = @transform_13, window_bounds = array<i64: 768, 128>}, {pipeline_mode = #tpu.pipeline_mode<synchronous>, transform_indices = @transform_14, window_bounds = array<i64: 1, 128>}, {pipeline_mode = #tpu.pipeline_mode<synchronous>, transform_indices = @transform_15, window_bounds = array<i64: 384, 128>}, {pipeline_mode = #tpu.pipeline_mode<synchronous>, transform_indices = @transform_16, window_bounds = array<i64: 1, 128>}, {pipeline_mode = #tpu.pipeline_mode<synchronous>, transform_indices = @transform_17, window_bounds = array<i64: 384, 128>}, {pipeline_mode = #tpu.pipeline_mode<synchronous>, transform_indices = @transform_18, window_bounds = array<i64: 1, 128>}, {transform_indices = @transform_19, window_bounds = array<i64: 1, 1, 384>}, {transform_indices = @transform_20, window_bounds = array<i64: 1, 1, 768>}]} {
    %c0 = arith.constant 0 : index
    %c0_0 = arith.constant 0 : index
    %c0_1 = arith.constant 0 : index
    %0 = vector.load %arg1[%c0, %c0_0, %c0_1] : memref<1x16x512xbf16, #tpu.memory_space<vmem>>, vector<1x16x512xbf16>
    %c0_2 = arith.constant 0 : index
    %c0_3 = arith.constant 0 : index
    %c0_4 = arith.constant 0 : index
    %1 = vector.load %arg2[%c0_2, %c0_3, %c0_4] : memref<1x16x512xbf16, #tpu.memory_space<vmem>>, vector<1x16x512xbf16>
    %2 = vector.shape_cast %0 : vector<1x16x512xbf16> to vector<16x512xbf16>
    %c0_5 = arith.constant 0 : index
    %c0_6 = arith.constant 0 : index
    %3 = vector.load %arg3[%c0_5, %c0_6] : memref<512x64xbf16, #tpu.memory_space<vmem>>, vector<512x64xbf16>
    %cst = arith.constant dense<0.000000e+00> : vector<16x64xf32>
    %4 = tpu.matmul %2, %3, %cst {dimension_numbers = #tpu.dot_dimension_numbers<[1], [0], [0], [1], [0, 0, 1, 1], [], []>} : vector<16x512xbf16>, vector<512x64xbf16>, vector<16x64xf32> -> vector<16x64xf32>
    %c0_7 = arith.constant 0 : index
    %c0_8 = arith.constant 0 : index
    %5 = vector.load %arg4[%c0_7, %c0_8] : memref<1x64xf32, #tpu.memory_space<vmem>>, vector<1x64xf32>
    %6 = vector.broadcast %5 : vector<1x64xf32> to vector<16x64xf32>
    %7 = arith.addf %4, %6 : vector<16x64xf32>
    %c0_9 = arith.constant 0 : index
    %c0_10 = arith.constant 0 : index
    %8 = vector.load %arg5[%c0_9, %c0_10] : memref<512x64xbf16, #tpu.memory_space<vmem>>, vector<512x64xbf16>
    %cst_11 = arith.constant dense<0.000000e+00> : vector<16x64xf32>
    %9 = tpu.matmul %2, %8, %cst_11 {dimension_numbers = #tpu.dot_dimension_numbers<[1], [0], [0], [1], [0, 0, 1, 1], [], []>} : vector<16x512xbf16>, vector<512x64xbf16>, vector<16x64xf32> -> vector<16x64xf32>
    %c0_12 = arith.constant 0 : index
    %c0_13 = arith.constant 0 : index
    %10 = vector.load %arg6[%c0_12, %c0_13] : memref<1x64xf32, #tpu.memory_space<vmem>>, vector<1x64xf32>
    %11 = vector.broadcast %10 : vector<1x64xf32> to vector<16x64xf32>
    %12 = arith.addf %9, %11 : vector<16x64xf32>
    %c0_14 = arith.constant 0 : index
    %c0_15 = arith.constant 0 : index
    %13 = vector.load %arg7[%c0_14, %c0_15] : memref<512x512xbf16, #tpu.memory_space<vmem>>, vector<512x512xbf16>
    %cst_16 = arith.constant dense<0.000000e+00> : vector<16x512xf32>
    %14 = tpu.matmul %2, %13, %cst_16 {dimension_numbers = #tpu.dot_dimension_numbers<[1], [0], [0], [1], [0, 0, 1, 1], [], []>} : vector<16x512xbf16>, vector<512x512xbf16>, vector<16x512xf32> -> vector<16x512xf32>
    %c0_17 = arith.constant 0 : index
    %c0_18 = arith.constant 0 : index
    %15 = vector.load %arg8[%c0_17, %c0_18] : memref<1x512xf32, #tpu.memory_space<vmem>>, vector<1x512xf32>
    %16 = vector.broadcast %15 : vector<1x512xf32> to vector<16x512xf32>
    %17 = arith.addf %14, %16 : vector<16x512xf32>
    %18 = vector.shape_cast %7 : vector<16x64xf32> to vector<1x16x64xf32>
    %19 = vector.shape_cast %12 : vector<16x64xf32> to vector<1x16x64xf32>
    %20 = vector.shape_cast %17 : vector<16x512xf32> to vector<1x16x512xf32>
    "tpu.trace_start"() <{level = 10 : i32, message = "bic,bjc->bij"}> : () -> ()
    %cst_19 = arith.constant dense<0.000000e+00> : vector<1x16x16xf32>
    %21 = tpu.matmul %18, %19, %cst_19 {dimension_numbers = #tpu.dot_dimension_numbers<[2], [2], [1], [1], [0, 0, 0, 1, 1, 1], [0], [0]>} : vector<1x16x64xf32>, vector<1x16x64xf32>, vector<1x16x16xf32> -> vector<1x16x16xf32>
    "tpu.trace_stop"() : () -> ()
    %cst_20 = arith.constant dense<0xFF800000> : vector<1x16xf32>
    %22 = vector.multi_reduction <maximumf>, %21, %cst_20 [2] : vector<1x16x16xf32> to vector<1x16xf32>
    %23 = vector.shape_cast %22 : vector<1x16xf32> to vector<1x16x1xf32>
    %24 = vector.broadcast %23 : vector<1x16x1xf32> to vector<1x16x16xf32>
    %25 = arith.subf %21, %24 : vector<1x16x16xf32>
    %26 = math.exp %25 : vector<1x16x16xf32>
    %cst_21 = arith.constant dense<0.000000e+00> : vector<1x16xf32>
    %27 = vector.multi_reduction <add>, %26, %cst_21 [2] : vector<1x16x16xf32> to vector<1x16xf32>
    %28 = vector.shape_cast %27 : vector<1x16xf32> to vector<1x16x1xf32>
    %29 = tpu.reciprocal %28 {approx = true} : vector<1x16x1xf32> -> vector<1x16x1xf32>
    %30 = vector.broadcast %29 : vector<1x16x1xf32> to vector<1x16x16xf32>
    %31 = arith.mulf %26, %30 : vector<1x16x16xf32>
    %cst_22 = arith.constant dense<0.000000e+00> : vector<1x16xf32>
    %32 = vector.multi_reduction <add>, %31, %cst_22 [1] : vector<1x16x16xf32> to vector<1x16xf32>
    %33 = vector.shape_cast %32 : vector<1x16xf32> to vector<1x1x16xf32>
    %cst_23 = arith.constant 1.600000e+01 : f32
    %34 = vector.broadcast %cst_23 : f32 to vector<1x1x16xf32>
    %35 = arith.divf %33, %34 : vector<1x1x16xf32>
    "tpu.trace_start"() <{level = 10 : i32, message = "bqk,bkc->bqc"}> : () -> ()
    %cst_24 = arith.constant dense<0.000000e+00> : vector<1x1x512xf32>
    %36 = tpu.matmul %35, %20, %cst_24 {dimension_numbers = #tpu.dot_dimension_numbers<[2], [1], [1], [2], [0, 0, 0, 1, 1, 2], [0], [0]>} : vector<1x1x16xf32>, vector<1x16x512xf32>, vector<1x1x512xf32> -> vector<1x1x512xf32>
    "tpu.trace_stop"() : () -> ()
    %37 = arith.extf %0 : vector<1x16x512xbf16> to vector<1x16x512xf32>
    %cst_25 = arith.constant dense<0.000000e+00> : vector<1x512xf32>
    %38 = vector.multi_reduction <add>, %37, %cst_25 [1] : vector<1x16x512xf32> to vector<1x512xf32>
    %39 = vector.shape_cast %38 : vector<1x512xf32> to vector<1x1x512xf32>
    %cst_26 = arith.constant 1.600000e+01 : f32
    %40 = vector.broadcast %cst_26 : f32 to vector<1x1x512xf32>
    %41 = arith.divf %39, %40 : vector<1x1x512xf32>
    %42 = arith.extf %1 : vector<1x16x512xbf16> to vector<1x16x512xf32>
    %cst_27 = arith.constant dense<0.000000e+00> : vector<1x512xf32>
    %43 = vector.multi_reduction <add>, %42, %cst_27 [1] : vector<1x16x512xf32> to vector<1x512xf32>
    %44 = vector.shape_cast %43 : vector<1x512xf32> to vector<1x1x512xf32>
    %cst_28 = arith.constant 1.600000e+01 : f32
    %45 = vector.broadcast %cst_28 : f32 to vector<1x1x512xf32>
    %46 = arith.divf %44, %45 : vector<1x1x512xf32>
    %c0_29 = arith.constant 0 : index
    %47 = memref.load %arg9[%c0_29] : memref<1xf32, #tpu.memory_space<smem>>
    %48 = vector.broadcast %47 : f32 to vector<1x1x512xf32>
    %49 = arith.mulf %48, %36 : vector<1x1x512xf32>
    %50 = arith.addf %49, %41 : vector<1x1x512xf32>
    %51 = vector.shape_cast %50 : vector<1x1x512xf32> to vector<1x512xf32>
    %52 = vector.broadcast %47 : f32 to vector<1x1x512xf32>
    %53 = arith.mulf %52, %36 : vector<1x1x512xf32>
    %54 = arith.addf %53, %46 : vector<1x1x512xf32>
    %55 = vector.shape_cast %54 : vector<1x1x512xf32> to vector<1x512xf32>
    %56 = arith.truncf %51 : vector<1x512xf32> to vector<1x512xbf16>
    %c0_30 = arith.constant 0 : index
    %c0_31 = arith.constant 0 : index
    %57 = vector.load %arg10[%c0_30, %c0_31] : memref<512x384xbf16, #tpu.memory_space<vmem>>, vector<512x384xbf16>
    %cst_32 = arith.constant dense<0.000000e+00> : vector<1x384xf32>
    %58 = tpu.matmul %56, %57, %cst_32 {dimension_numbers = #tpu.dot_dimension_numbers<[1], [0], [0], [1], [0, 0, 1, 1], [], []>} : vector<1x512xbf16>, vector<512x384xbf16>, vector<1x384xf32> -> vector<1x384xf32>
    %c0_33 = arith.constant 0 : index
    %c0_34 = arith.constant 0 : index
    %59 = vector.load %arg11[%c0_33, %c0_34] : memref<1x384xf32, #tpu.memory_space<vmem>>, vector<1x384xf32>
    %60 = arith.addf %58, %59 : vector<1x384xf32>
    %cst_35 = arith.constant 0.000000e+00 : f32
    %61 = vector.broadcast %cst_35 : f32 to vector<1x384xf32>
    %62 = arith.maximumf %60, %61 : vector<1x384xf32>
    %63 = arith.truncf %55 : vector<1x512xf32> to vector<1x512xbf16>
    %c0_36 = arith.constant 0 : index
    %c0_37 = arith.constant 0 : index
    %64 = vector.load %arg12[%c0_36, %c0_37] : memref<512x384xbf16, #tpu.memory_space<vmem>>, vector<512x384xbf16>
    %cst_38 = arith.constant dense<0.000000e+00> : vector<1x384xf32>
    %65 = tpu.matmul %63, %64, %cst_38 {dimension_numbers = #tpu.dot_dimension_numbers<[1], [0], [0], [1], [0, 0, 1, 1], [], []>} : vector<1x512xbf16>, vector<512x384xbf16>, vector<1x384xf32> -> vector<1x384xf32>
    %c0_39 = arith.constant 0 : index
    %c0_40 = arith.constant 0 : index
    %66 = vector.load %arg13[%c0_39, %c0_40] : memref<1x384xf32, #tpu.memory_space<vmem>>, vector<1x384xf32>
    %67 = arith.addf %65, %66 : vector<1x384xf32>
    %cst_41 = arith.constant 0.000000e+00 : f32
    %68 = vector.broadcast %cst_41 : f32 to vector<1x384xf32>
    %69 = arith.maximumf %67, %68 : vector<1x384xf32>
    %c0_42 = arith.constant 0 : index
    %c0_43 = arith.constant 0 : index
    %70 = vector.load %arg14[%c0_42, %c0_43] : memref<768x128xf32, #tpu.memory_space<vmem>>, vector<384x128xf32>
    %cst_44 = arith.constant dense<0.000000e+00> : vector<1x128xf32>
    %71 = tpu.matmul %62, %70, %cst_44 {dimension_numbers = #tpu.dot_dimension_numbers<[1], [0], [0], [1], [0, 0, 1, 1], [], []>} : vector<1x384xf32>, vector<384x128xf32>, vector<1x128xf32> -> vector<1x128xf32>
    %c384 = arith.constant 384 : index
    %c0_45 = arith.constant 0 : index
    %72 = vector.load %arg14[%c384, %c0_45] : memref<768x128xf32, #tpu.memory_space<vmem>>, vector<384x128xf32>
    %cst_46 = arith.constant dense<0.000000e+00> : vector<1x128xf32>
    %73 = tpu.matmul %69, %72, %cst_46 {dimension_numbers = #tpu.dot_dimension_numbers<[1], [0], [0], [1], [0, 0, 1, 1], [], []>} : vector<1x384xf32>, vector<384x128xf32>, vector<1x128xf32> -> vector<1x128xf32>
    %74 = arith.addf %71, %73 : vector<1x128xf32>
    %c0_47 = arith.constant 0 : index
    %c0_48 = arith.constant 0 : index
    %75 = vector.load %arg15[%c0_47, %c0_48] : memref<1x128xf32, #tpu.memory_space<vmem>>, vector<1x128xf32>
    %76 = arith.addf %74, %75 : vector<1x128xf32>
    %c0_49 = arith.constant 0 : index
    %c0_50 = arith.constant 0 : index
    %77 = vector.load %arg16[%c0_49, %c0_50] : memref<384x128xf32, #tpu.memory_space<vmem>>, vector<384x128xf32>
    %cst_51 = arith.constant dense<0.000000e+00> : vector<1x128xf32>
    %78 = tpu.matmul %62, %77, %cst_51 {dimension_numbers = #tpu.dot_dimension_numbers<[1], [0], [0], [1], [0, 0, 1, 1], [], []>} : vector<1x384xf32>, vector<384x128xf32>, vector<1x128xf32> -> vector<1x128xf32>
    %c0_52 = arith.constant 0 : index
    %c0_53 = arith.constant 0 : index
    %79 = vector.load %arg17[%c0_52, %c0_53] : memref<1x128xf32, #tpu.memory_space<vmem>>, vector<1x128xf32>
    %80 = arith.addf %78, %79 : vector<1x128xf32>
    %c0_54 = arith.constant 0 : index
    %c0_55 = arith.constant 0 : index
    %81 = vector.load %arg18[%c0_54, %c0_55] : memref<384x128xf32, #tpu.memory_space<vmem>>, vector<384x128xf32>
    %cst_56 = arith.constant dense<0.000000e+00> : vector<1x128xf32>
    %82 = tpu.matmul %69, %81, %cst_56 {dimension_numbers = #tpu.dot_dimension_numbers<[1], [0], [0], [1], [0, 0, 1, 1], [], []>} : vector<1x384xf32>, vector<384x128xf32>, vector<1x128xf32> -> vector<1x128xf32>
    %c0_57 = arith.constant 0 : index
    %c0_58 = arith.constant 0 : index
    %83 = vector.load %arg19[%c0_57, %c0_58] : memref<1x128xf32, #tpu.memory_space<vmem>>, vector<1x128xf32>
    %84 = arith.addf %82, %83 : vector<1x128xf32>
    %85 = arith.addf %76, %80 : vector<1x128xf32>
    %86 = arith.addf %85, %84 : vector<1x128xf32>
    %cst_59 = arith.constant 0.333333343 : f32
    %87 = vector.broadcast %cst_59 : f32 to vector<1x128xf32>
    %88 = arith.mulf %86, %87 : vector<1x128xf32>
    %89 = tpu.concatenate %88, %80, %84 in 1 : vector<1x128xf32>, vector<1x128xf32>, vector<1x128xf32> -> vector<1x384xf32>
    %c0_60 = arith.constant 0 : index
    %c0_61 = arith.constant 0 : index
    %c0_62 = arith.constant 0 : index
    %90 = vector.load %arg20[%c0_60, %c0_61, %c0_62] : memref<1x1x384xf32, #tpu.memory_space<vmem>>, vector<1x1x384xf32>
    %91 = vector.shape_cast %90 : vector<1x1x384xf32> to vector<1x384xf32>
    %92 = vector.shape_cast %89 : vector<1x384xf32> to vector<1x1x384xf32>
    tpu.vector_store %arg20[%c0_60, %c0_61, %c0_62], %92 {strides = array<i32>} : memref<1x1x384xf32, #tpu.memory_space<vmem>>, vector<1x1x384xf32>,
    %93 = tpu.concatenate %62, %69 in 1 : vector<1x384xf32>, vector<1x384xf32> -> vector<1x768xf32>
    %c0_63 = arith.constant 0 : index
    %c0_64 = arith.constant 0 : index
    %c0_65 = arith.constant 0 : index
    %94 = vector.load %arg21[%c0_63, %c0_64, %c0_65] : memref<1x1x768xf32, #tpu.memory_space<vmem>>, vector<1x1x768xf32>
    %95 = vector.shape_cast %94 : vector<1x1x768xf32> to vector<1x768xf32>
    %96 = vector.shape_cast %93 : vector<1x768xf32> to vector<1x1x768xf32>
    tpu.vector_store %arg21[%c0_63, %c0_64, %c0_65], %96 {strides = array<i32>} : memref<1x1x768xf32, #tpu.memory_space<vmem>>, vector<1x1x768xf32>,
    return
  }
  func.func @transform_0(%arg0: i32) -> (i32, i32, i32) {
    %c0_i32 = arith.constant 0 : i32
    %c0_i32_0 = arith.constant 0 : i32
    %c0_i32_1 = arith.constant 0 : i32
    return %arg0, %c0_i32, %c0_i32_0 : i32, i32, i32
  }
  func.func @transform_1(%arg0: i32) -> (i32, i32, i32) {
    %c0_i32 = arith.constant 0 : i32
    %c0_i32_0 = arith.constant 0 : i32
    %c0_i32_1 = arith.constant 0 : i32
    return %arg0, %c0_i32, %c0_i32_0 : i32, i32, i32
  }
  func.func @transform_2(%arg0: i32) -> (i32, i32) {
    %c0_i32 = arith.constant 0 : i32
    %c0_i32_0 = arith.constant 0 : i32
    %c0_i32_1 = arith.constant 0 : i32
    return %c0_i32, %c0_i32_0 : i32, i32
  }
  func.func @transform_3(%arg0: i32) -> (i32, i32) {
    %c0_i32 = arith.constant 0 : i32
    %c0_i32_0 = arith.constant 0 : i32
    %c0_i32_1 = arith.constant 0 : i32
    return %c0_i32, %c0_i32_0 : i32, i32
  }
  func.func @transform_4(%arg0: i32) -> (i32, i32) {
    %c0_i32 = arith.constant 0 : i32
    %c0_i32_0 = arith.constant 0 : i32
    %c0_i32_1 = arith.constant 0 : i32
    return %c0_i32, %c0_i32_0 : i32, i32
  }
  func.func @transform_5(%arg0: i32) -> (i32, i32) {
    %c0_i32 = arith.constant 0 : i32
    %c0_i32_0 = arith.constant 0 : i32
    %c0_i32_1 = arith.constant 0 : i32
    return %c0_i32, %c0_i32_0 : i32, i32
  }
  func.func @transform_6(%arg0: i32) -> (i32, i32) {
    %c0_i32 = arith.constant 0 : i32
    %c0_i32_0 = arith.constant 0 : i32
    %c0_i32_1 = arith.constant 0 : i32
    return %c0_i32, %c0_i32_0 : i32, i32
  }
  func.func @transform_7(%arg0: i32) -> (i32, i32) {
    %c0_i32 = arith.constant 0 : i32
    %c0_i32_0 = arith.constant 0 : i32
    %c0_i32_1 = arith.constant 0 : i32
    return %c0_i32, %c0_i32_0 : i32, i32
  }
  func.func @transform_8(%arg0: i32) -> i32 {
    %c0_i32 = arith.constant 0 : i32
    %c0_i32_0 = arith.constant 0 : i32
    return %c0_i32 : i32
  }
  func.func @transform_9(%arg0: i32) -> (i32, i32) {
    %c0_i32 = arith.constant 0 : i32
    %c0_i32_0 = arith.constant 0 : i32
    %c0_i32_1 = arith.constant 0 : i32
    return %c0_i32, %c0_i32_0 : i32, i32
  }
  func.func @transform_10(%arg0: i32) -> (i32, i32) {
    %c0_i32 = arith.constant 0 : i32
    %c0_i32_0 = arith.constant 0 : i32
    %c0_i32_1 = arith.constant 0 : i32
    return %c0_i32, %c0_i32_0 : i32, i32
  }
  func.func @transform_11(%arg0: i32) -> (i32, i32) {
    %c0_i32 = arith.constant 0 : i32
    %c0_i32_0 = arith.constant 0 : i32
    %c0_i32_1 = arith.constant 0 : i32
    return %c0_i32, %c0_i32_0 : i32, i32
  }
  func.func @transform_12(%arg0: i32) -> (i32, i32) {
    %c0_i32 = arith.constant 0 : i32
    %c0_i32_0 = arith.constant 0 : i32
    %c0_i32_1 = arith.constant 0 : i32
    return %c0_i32, %c0_i32_0 : i32, i32
  }
  func.func @transform_13(%arg0: i32) -> (i32, i32) {
    %c0_i32 = arith.constant 0 : i32
    %c0_i32_0 = arith.constant 0 : i32
    %c0_i32_1 = arith.constant 0 : i32
    return %c0_i32, %c0_i32_0 : i32, i32
  }
  func.func @transform_14(%arg0: i32) -> (i32, i32) {
    %c0_i32 = arith.constant 0 : i32
    %c0_i32_0 = arith.constant 0 : i32
    %c0_i32_1 = arith.constant 0 : i32
    return %c0_i32, %c0_i32_0 : i32, i32
  }
  func.func @transform_15(%arg0: i32) -> (i32, i32) {
    %c0_i32 = arith.constant 0 : i32
    %c0_i32_0 = arith.constant 0 : i32
    %c0_i32_1 = arith.constant 0 : i32
    return %c0_i32, %c0_i32_0 : i32, i32
  }
  func.func @transform_16(%arg0: i32) -> (i32, i32) {
    %c0_i32 = arith.constant 0 : i32
    %c0_i32_0 = arith.constant 0 : i32
    %c0_i32_1 = arith.constant 0 : i32
    return %c0_i32, %c0_i32_0 : i32, i32
  }
  func.func @transform_17(%arg0: i32) -> (i32, i32) {
    %c0_i32 = arith.constant 0 : i32
    %c0_i32_0 = arith.constant 0 : i32
    %c0_i32_1 = arith.constant 0 : i32
    return %c0_i32, %c0_i32_0 : i32, i32
  }
  func.func @transform_18(%arg0: i32) -> (i32, i32) {
    %c0_i32 = arith.constant 0 : i32
    %c0_i32_0 = arith.constant 0 : i32
    %c0_i32_1 = arith.constant 0 : i32
    return %c0_i32, %c0_i32_0 : i32, i32
  }
  func.func @transform_19(%arg0: i32) -> (i32, i32, i32) {
    %c0_i32 = arith.constant 0 : i32
    %c0_i32_0 = arith.constant 0 : i32
    %c0_i32_1 = arith.constant 0 : i32
    return %arg0, %c0_i32, %c0_i32_0 : i32, i32, i32
  }
  func.func @transform_20(%arg0: i32) -> (i32, i32, i32) {
    %c0_i32 = arith.constant 0 : i32
    %c0_i32_0 = arith.constant 0 : i32
    %c0_i32_1 = arith.constant 0 : i32
    return %arg0, %c0_i32, %c0_i32_0 : i32, i32, i32
  }
}

</mosaic_0001>

<llo_original>
// kernel: network_forward.1
$region0: #{network_forward.1}
  #allocation0 [shape = 'u32[]', space=smem, size = 0x4, offset = 0x4, fixed_abs, tag = 'smem constant byte address 0x4 - core index']
  #allocation1 [shape = 'u32[144,128]{1,0:T(1,128)}', space=vmem, size = 0x12000, scoped, tag = 'internal scratch']
  #allocation2 [shape = 'f32[1]{0:T(128)S(6)}', space=smem, size = 0x200, scoped, tag = 'scoped memory for network_forward.1']
  %s0 = inlined_call_operand.vmem [shape: bf16[2,16,512], index: 0, kind: input, shape index: {}]
  %s1 = inlined_call_operand.vmem [shape: bf16[2,16,512], index: 1, kind: input, shape index: {}]
  %s2 = inlined_call_operand.vmem [shape: bf16[512,64], index: 2, kind: input, shape index: {}]
  %s3 = inlined_call_operand.vmem [shape: f32[1,64], index: 3, kind: input, shape index: {}]
  %s4 = inlined_call_operand.hbm [shape: bf16[512,64], index: 4, kind: input, shape index: {}]
  %s5 = inlined_call_operand.vmem [shape: f32[1,64], index: 5, kind: input, shape index: {}]
  %s6 = inlined_call_operand.hbm [shape: bf16[512,512], index: 6, kind: input, shape index: {}]
  %s7 = inlined_call_operand.vmem [shape: f32[1,512], index: 7, kind: input, shape index: {}]
  %s8 = inlined_call_operand.<no memory space> [shape: f32[1], index: 8, kind: input, shape index: {}]
  %s9 = inlined_call_operand.hbm [shape: bf16[512,384], index: 9, kind: input, shape index: {}]
  %s10 = inlined_call_operand.vmem [shape: f32[1,384], index: 10, kind: input, shape index: {}]
  %s11 = inlined_call_operand.hbm [shape: bf16[512,384], index: 11, kind: input, shape index: {}]
  %s12 = inlined_call_operand.vmem [shape: f32[1,384], index: 12, kind: input, shape index: {}]
  %s13 = inlined_call_operand.hbm [shape: f32[768,128], index: 13, kind: input, shape index: {}]
  %s14 = inlined_call_operand.vmem [shape: f32[1,128], index: 14, kind: input, shape index: {}]
  %s15 = inlined_call_operand.hbm [shape: f32[384,128], index: 15, kind: input, shape index: {}]
  %s16 = inlined_call_operand.vmem [shape: f32[1,128], index: 16, kind: input, shape index: {}]
  %s17 = inlined_call_operand.vmem [shape: f32[384,128], index: 17, kind: input, shape index: {}]
  %s18 = inlined_call_operand.vmem [shape: f32[1,128], index: 18, kind: input, shape index: {}]
  %s19 = inlined_call_operand.vmem [shape: f32[2,1,384], index: 19, kind: output, shape index: {0}]
  %s20 = inlined_call_operand.vmem [shape: f32[2,1,768], index: 20, kind: output, shape index: {1}]
  %21 = xla_tuple %s19, %s20
  %s22 = sld [smem:[#allocation0]]
  $region141: #{network_forward.1} parent=0
    _
  %s24 = ssub.s32 1, %s22
  %s25 = scalar_select 0, %s24, %s22
  %26 = sst [smem:[#allocation2]] %s8
  $region1: #{network_forward.1} parent=0
    #allocation3 [shape = 'u8[131072]{0}', space=vmem, size = 0x20000, scoped, tag = 'input window, operand 4, single buffered']
    #allocation4 [shape = 's32[2]{0}', space=sflag, size = 0x8, scoped, tag = 'scoped memory for network_forward.1']
    #allocation5 [shape = 'u8[524288]{0}', space=vmem, size = 0x80000, scoped, tag = 'input window, operand 6, single buffered']
    #allocation6 [shape = 's32[1]{0}', space=sflag, size = 0x4, scoped, tag = 'scoped memory for network_forward.1']
    #allocation7 [shape = 'u8[393216]{0}', space=vmem, size = 0x60000, scoped, tag = 'input window, operand 9, single buffered']
    #allocation8 [shape = 'u8[393216]{0}', space=vmem, size = 0x60000, scoped, tag = 'input window, operand 11, single buffered']
    #allocation9 [shape = 's32[1]{0}', space=sflag, size = 0x4, scoped, tag = 'scoped memory for network_forward.1']
    #allocation10 [shape = 'u8[393216]{0}', space=vmem, size = 0x60000, scoped, tag = 'input window, operand 13, single buffered']
    #allocation11 [shape = 'u8[196608]{0}', space=vmem, size = 0x30000, scoped, tag = 'input window, operand 15, single buffered']
    #allocation12 [shape = 's32[1]{0}', space=sflag, size = 0x4, scoped, tag = 'scoped memory for network_forward.1']
    %27 = vsyncpa [#allocation4], 0
    %28 = vsyncpa [#allocation6], 0
    %29 = vsyncpa [#allocation9], 0
    %30 = vsyncpa [#allocation12], 0
    loop: start=0, step=1, limit=4
    $region2: #{network_forward.1} parent=1 // loop_pre_header
      _
    $region3: #{network_forward.1} parent=1 // loop_header
      %s32 = sphi 0, %s36
      %p33 = scmp.ge.s32.totalorder %s32, 4
      %s42 = sphi 0, %s44
      %s45 = sphi 0, %s42
      %s46 = sphi 0, %s45
      %s62 = sphi 0, %s46
      %s68 = sphi 0, %s70
      %s71 = sphi 0, %s68
      %s72 = sphi 0, %s71
      %s88 = sphi 0, %s72
      %s92 = sphi 0, %s92
      %s94 = sphi 0, %s92
      %s95 = sphi 0, %s94
      %s109 = sphi 0, %s95
      %s113 = sphi 0, %s113
      %s115 = sphi 0, %s113
      %s116 = sphi 0, %s115
      %s130 = sphi 0, %s116
      %s134 = sphi 0, %s134
      %s136 = sphi 0, %s134
      %s137 = sphi 0, %s136
      %s151 = sphi 0, %s137
      %s155 = sphi 0, %s155
      %s157 = sphi 0, %s155
      %s158 = sphi 0, %s157
      %s172 = sphi 0, %s158
      %s176 = sphi 0, %s176
      %s178 = sphi 0, %s176
      %s179 = sphi 0, %s178
      %s193 = sphi 0, %s179
      %s197 = sphi 0, %s197
      %s199 = sphi 0, %s197
      %s200 = sphi 0, %s199
      %s214 = sphi 0, %s200
      %s218 = sphi 0, %s218
      %s220 = sphi 0, %s218
      %s221 = sphi 0, %s220
      %s235 = sphi 0, %s221
      %s239 = sphi 0, %s239
      %s241 = sphi 0, %s239
      %s242 = sphi 0, %s241
      %s256 = sphi 0, %s242
      %s260 = sphi 0, %s260
      %s262 = sphi 0, %s260
      %s263 = sphi 0, %s262
      %s277 = sphi 0, %s263
      %s281 = sphi 0, %s281
      %s283 = sphi 0, %s281
      %s284 = sphi 0, %s283
      %s298 = sphi 0, %s284
      %s302 = sphi 0, %s302
      %s304 = sphi 0, %s302
      %s305 = sphi 0, %s304
      %s319 = sphi 0, %s305
      %s323 = sphi 0, %s323
      %s325 = sphi 0, %s323
      %s326 = sphi 0, %s325
      %s340 = sphi 0, %s326
      %s344 = sphi 0, %s344
      %s346 = sphi 0, %s344
      %s347 = sphi 0, %s346
      %s361 = sphi 0, %s347
      %s365 = sphi 0, %s365
      %s367 = sphi 0, %s365
      %s368 = sphi 0, %s367
      %s382 = sphi 0, %s368
      %s386 = sphi 0, %s386
      %s388 = sphi 0, %s386
      %s389 = sphi 0, %s388
      %s403 = sphi 0, %s389
      %s407 = sphi 0, %s407
      %s409 = sphi 0, %s407
      %s410 = sphi 0, %s409
      %s424 = sphi 0, %s410
      %s428 = sphi 0, %s428
      %s430 = sphi 0, %s428
      %s431 = sphi 0, %s430
      %s445 = sphi 0, %s431
      %s451 = sphi 0, %s453
      %s454 = sphi 0, %s451
      %s455 = sphi 0, %s454
      %s471 = sphi 0, %s455
      %s477 = sphi 0, %s479
      %s480 = sphi 0, %s477
      %s481 = sphi 0, %s480
      %s497 = sphi 0, %s481
    $region4: #{network_forward.1} parent=1 // loop_header_branch
      %35 = sbr.rel (%p33) target = $region8
    $region5: #{network_forward.1} parent=1 // loop_body
      %s37 = ssub.s32 %s32, 1
      %s38 = ssub.s32 %s32, 2
      %s39 = sadd.s32 %s32, 1
      %s40 = ssub.s32 %s32, %s39
      %p41 = scmp.eq.s32.totalorder %s40, 0
      %s43 = sadd.s32 %s42, 1
      %s44 = scalar_select %p41, %s42, %s43
      %p47 = pneg %p41
      %p48 = scmp.eq.s32.totalorder %s32, 1
      %p49 = por %p47, %p48
      %p50 = scmp.ne.s32.totalorder %s42, %s45
      %p51 = scmp.eq.s32.totalorder %s32, 0
      %p52 = por %p50, %p51
      %p53 = scmp.ne.s32.totalorder %s42, %s45
      %p54 = scmp.eq.s32.totalorder %s37, 1
      %p55 = por %p53, %p54
      %p56 = scmp.ne.s32.totalorder %s45, %s46
      %p57 = scmp.eq.s32.totalorder %s37, 0
      %p58 = por %p56, %p57
      %p59 = scmp.ne.s32.totalorder %s45, %s46
      %p60 = scmp.eq.s32.totalorder %s38, 1
      %p61 = por %p59, %p60
      %p63 = scmp.ne.s32.totalorder %s46, %s62
      %p64 = scmp.eq.s32.totalorder %s38, 0
      %p65 = por %p63, %p64
      %s66 = ssub.s32 %s32, %s39
      %p67 = scmp.eq.s32.totalorder %s66, 0
      %s69 = sadd.s32 %s68, 1
      %s70 = scalar_select %p67, %s68, %s69
      %p73 = pneg %p67
      %p74 = scmp.eq.s32.totalorder %s32, 1
      %p75 = por %p73, %p74
      %p76 = scmp.ne.s32.totalorder %s68, %s71
      %p77 = scmp.eq.s32.totalorder %s32, 0
      %p78 = por %p76, %p77
      %p79 = scmp.ne.s32.totalorder %s68, %s71
      %p80 = scmp.eq.s32.totalorder %s37, 1
      %p81 = por %p79, %p80
      %p82 = scmp.ne.s32.totalorder %s71, %s72
      %p83 = scmp.eq.s32.totalorder %s37, 0
      %p84 = por %p82, %p83
      %p85 = scmp.ne.s32.totalorder %s71, %s72
      %p86 = scmp.eq.s32.totalorder %s38, 1
      %p87 = por %p85, %p86
      %p89 = scmp.ne.s32.totalorder %s72, %s88
      %p90 = scmp.eq.s32.totalorder %s38, 0
      %p91 = por %p89, %p90
      %s93 = sadd.s32 %s92, 1
      %p96 = scmp.eq.s32.totalorder %s32, 1
      %p97 = scmp.ne.s32.totalorder %s92, %s94
      %p98 = scmp.eq.s32.totalorder %s32, 0
      %p99 = por %p97, %p98
      %p100 = scmp.ne.s32.totalorder %s92, %s94
      %p101 = scmp.eq.s32.totalorder %s37, 1
      %p102 = por %p100, %p101
      %p103 = scmp.ne.s32.totalorder %s94, %s95
      %p104 = scmp.eq.s32.totalorder %s37, 0
      %p105 = por %p103, %p104
      %p106 = scmp.ne.s32.totalorder %s94, %s95
      %p107 = scmp.eq.s32.totalorder %s38, 1
      %p108 = por %p106, %p107
      %p110 = scmp.ne.s32.totalorder %s95, %s109
      %p111 = scmp.eq.s32.totalorder %s38, 0
      %p112 = por %p110, %p111
      %s114 = sadd.s32 %s113, 1
      %p117 = scmp.eq.s32.totalorder %s32, 1
      %p118 = scmp.ne.s32.totalorder %s113, %s115
      %p119 = scmp.eq.s32.totalorder %s32, 0
      %p120 = por %p118, %p119
      %p121 = scmp.ne.s32.totalorder %s113, %s115
      %p122 = scmp.eq.s32.totalorder %s37, 1
      %p123 = por %p121, %p122
      %p124 = scmp.ne.s32.totalorder %s115, %s116
      %p125 = scmp.eq.s32.totalorder %s37, 0
      %p126 = por %p124, %p125
      %p127 = scmp.ne.s32.totalorder %s115, %s116
      %p128 = scmp.eq.s32.totalorder %s38, 1
      %p129 = por %p127, %p128
      %p131 = scmp.ne.s32.totalorder %s116, %s130
      %p132 = scmp.eq.s32.totalorder %s38, 0
      %p133 = por %p131, %p132
      %s135 = sadd.s32 %s134, 1
      %p138 = scmp.eq.s32.totalorder %s32, 1
      %p139 = scmp.ne.s32.totalorder %s134, %s136
      %p140 = scmp.eq.s32.totalorder %s32, 0
      %p141 = por %p139, %p140
      %p142 = scmp.ne.s32.totalorder %s134, %s136
      %p143 = scmp.eq.s32.totalorder %s37, 1
      %p144 = por %p142, %p143
      %p145 = scmp.ne.s32.totalorder %s136, %s137
      %p146 = scmp.eq.s32.totalorder %s37, 0
      %p147 = por %p145, %p146
      %p148 = scmp.ne.s32.totalorder %s136, %s137
      %p149 = scmp.eq.s32.totalorder %s38, 1
      %p150 = por %p148, %p149
      %p152 = scmp.ne.s32.totalorder %s137, %s151
      %p153 = scmp.eq.s32.totalorder %s38, 0
      %p154 = por %p152, %p153
      %s156 = sadd.s32 %s155, 1
      %p159 = scmp.eq.s32.totalorder %s32, 1
      %p160 = scmp.ne.s32.totalorder %s155, %s157
      %p161 = scmp.eq.s32.totalorder %s32, 0
      %p162 = por %p160, %p161
      %p163 = scmp.ne.s32.totalorder %s155, %s157
      %p164 = scmp.eq.s32.totalorder %s37, 1
      %p165 = por %p163, %p164
      %p166 = scmp.ne.s32.totalorder %s157, %s158
      %p167 = scmp.eq.s32.totalorder %s37, 0
      %p168 = por %p166, %p167
      %p169 = scmp.ne.s32.totalorder %s157, %s158
      %p170 = scmp.eq.s32.totalorder %s38, 1
      %p171 = por %p169, %p170
      %p173 = scmp.ne.s32.totalorder %s158, %s172
      %p174 = scmp.eq.s32.totalorder %s38, 0
      %p175 = por %p173, %p174
      %s177 = sadd.s32 %s176, 1
      %p180 = scmp.eq.s32.totalorder %s32, 1
      %p181 = scmp.ne.s32.totalorder %s176, %s178
      %p182 = scmp.eq.s32.totalorder %s32, 0
      %p183 = por %p181, %p182
      %p184 = scmp.ne.s32.totalorder %s176, %s178
      %p185 = scmp.eq.s32.totalorder %s37, 1
      %p186 = por %p184, %p185
      %p187 = scmp.ne.s32.totalorder %s178, %s179
      %p188 = scmp.eq.s32.totalorder %s37, 0
      %p189 = por %p187, %p188
      %p190 = scmp.ne.s32.totalorder %s178, %s179
      %p191 = scmp.eq.s32.totalorder %s38, 1
      %p192 = por %p190, %p191
      %p194 = scmp.ne.s32.totalorder %s179, %s193
      %p195 = scmp.eq.s32.totalorder %s38, 0
      %p196 = por %p194, %p195
      %s198 = sadd.s32 %s197, 1
      %p201 = scmp.eq.s32.totalorder %s32, 1
      %p202 = scmp.ne.s32.totalorder %s197, %s199
      %p203 = scmp.eq.s32.totalorder %s32, 0
      %p204 = por %p202, %p203
      %p205 = scmp.ne.s32.totalorder %s197, %s199
      %p206 = scmp.eq.s32.totalorder %s37, 1
      %p207 = por %p205, %p206
      %p208 = scmp.ne.s32.totalorder %s199, %s200
      %p209 = scmp.eq.s32.totalorder %s37, 0
      %p210 = por %p208, %p209
      %p211 = scmp.ne.s32.totalorder %s199, %s200
      %p212 = scmp.eq.s32.totalorder %s38, 1
      %p213 = por %p211, %p212
      %p215 = scmp.ne.s32.totalorder %s200, %s214
      %p216 = scmp.eq.s32.totalorder %s38, 0
      %p217 = por %p215, %p216
      %s219 = sadd.s32 %s218, 1
      %p222 = scmp.eq.s32.totalorder %s32, 1
      %p223 = scmp.ne.s32.totalorder %s218, %s220
      %p224 = scmp.eq.s32.totalorder %s32, 0
      %p225 = por %p223, %p224
      %p226 = scmp.ne.s32.totalorder %s218, %s220
      %p227 = scmp.eq.s32.totalorder %s37, 1
      %p228 = por %p226, %p227
      %p229 = scmp.ne.s32.totalorder %s220, %s221
      %p230 = scmp.eq.s32.totalorder %s37, 0
      %p231 = por %p229, %p230
      %p232 = scmp.ne.s32.totalorder %s220, %s221
      %p233 = scmp.eq.s32.totalorder %s38, 1
      %p234 = por %p232, %p233
      %p236 = scmp.ne.s32.totalorder %s221, %s235
      %p237 = scmp.eq.s32.totalorder %s38, 0
      %p238 = por %p236, %p237
      %s240 = sadd.s32 %s239, 1
      %p243 = scmp.eq.s32.totalorder %s32, 1
      %p244 = scmp.ne.s32.totalorder %s239, %s241
      %p245 = scmp.eq.s32.totalorder %s32, 0
      %p246 = por %p244, %p245
      %p247 = scmp.ne.s32.totalorder %s239, %s241
      %p248 = scmp.eq.s32.totalorder %s37, 1
      %p249 = por %p247, %p248
      %p250 = scmp.ne.s32.totalorder %s241, %s242
      %p251 = scmp.eq.s32.totalorder %s37, 0
      %p252 = por %p250, %p251
      %p253 = scmp.ne.s32.totalorder %s241, %s242
      %p254 = scmp.eq.s32.totalorder %s38, 1
      %p255 = por %p253, %p254
      %p257 = scmp.ne.s32.totalorder %s242, %s256
      %p258 = scmp.eq.s32.totalorder %s38, 0
      %p259 = por %p257, %p258
      %s261 = sadd.s32 %s260, 1
      %p264 = scmp.eq.s32.totalorder %s32, 1
      %p265 = scmp.ne.s32.totalorder %s260, %s262
      %p266 = scmp.eq.s32.totalorder %s32, 0
      %p267 = por %p265, %p266
      %p268 = scmp.ne.s32.totalorder %s260, %s262
      %p269 = scmp.eq.s32.totalorder %s37, 1
      %p270 = por %p268, %p269
      %p271 = scmp.ne.s32.totalorder %s262, %s263
      %p272 = scmp.eq.s32.totalorder %s37, 0
      %p273 = por %p271, %p272
      %p274 = scmp.ne.s32.totalorder %s262, %s263
      %p275 = scmp.eq.s32.totalorder %s38, 1
      %p276 = por %p274, %p275
      %p278 = scmp.ne.s32.totalorder %s263, %s277
      %p279 = scmp.eq.s32.totalorder %s38, 0
      %p280 = por %p278, %p279
      %s282 = sadd.s32 %s281, 1
      %p285 = scmp.eq.s32.totalorder %s32, 1
      %p286 = scmp.ne.s32.totalorder %s281, %s283
      %p287 = scmp.eq.s32.totalorder %s32, 0
      %p288 = por %p286, %p287
      %p289 = scmp.ne.s32.totalorder %s281, %s283
      %p290 = scmp.eq.s32.totalorder %s37, 1
      %p291 = por %p289, %p290
      %p292 = scmp.ne.s32.totalorder %s283, %s284
      %p293 = scmp.eq.s32.totalorder %s37, 0
      %p294 = por %p292, %p293
      %p295 = scmp.ne.s32.totalorder %s283, %s284
      %p296 = scmp.eq.s32.totalorder %s38, 1
      %p297 = por %p295, %p296
      %p299 = scmp.ne.s32.totalorder %s284, %s298
      %p300 = scmp.eq.s32.totalorder %s38, 0
      %p301 = por %p299, %p300
      %s303 = sadd.s32 %s302, 1
      %p306 = scmp.eq.s32.totalorder %s32, 1
      %p307 = scmp.ne.s32.totalorder %s302, %s304
      %p308 = scmp.eq.s32.totalorder %s32, 0
      %p309 = por %p307, %p308
      %p310 = scmp.ne.s32.totalorder %s302, %s304
      %p311 = scmp.eq.s32.totalorder %s37, 1
      %p312 = por %p310, %p311
      %p313 = scmp.ne.s32.totalorder %s304, %s305
      %p314 = scmp.eq.s32.totalorder %s37, 0
      %p315 = por %p313, %p314
      %p316 = scmp.ne.s32.totalorder %s304, %s305
      %p317 = scmp.eq.s32.totalorder %s38, 1
      %p318 = por %p316, %p317
      %p320 = scmp.ne.s32.totalorder %s305, %s319
      %p321 = scmp.eq.s32.totalorder %s38, 0
      %p322 = por %p320, %p321
      %s324 = sadd.s32 %s323, 1
      %p327 = scmp.eq.s32.totalorder %s32, 1
      %p328 = scmp.ne.s32.totalorder %s323, %s325
      %p329 = scmp.eq.s32.totalorder %s32, 0
      %p330 = por %p328, %p329
      %p331 = scmp.ne.s32.totalorder %s323, %s325
      %p332 = scmp.eq.s32.totalorder %s37, 1
      %p333 = por %p331, %p332
      %p334 = scmp.ne.s32.totalorder %s325, %s326
      %p335 = scmp.eq.s32.totalorder %s37, 0
      %p336 = por %p334, %p335
      %p337 = scmp.ne.s32.totalorder %s325, %s326
      %p338 = scmp.eq.s32.totalorder %s38, 1
      %p339 = por %p337, %p338
      %p341 = scmp.ne.s32.totalorder %s326, %s340
      %p342 = scmp.eq.s32.totalorder %s38, 0
      %p343 = por %p341, %p342
      %s345 = sadd.s32 %s344, 1
      %p348 = scmp.eq.s32.totalorder %s32, 1
      %p349 = scmp.ne.s32.totalorder %s344, %s346
      %p350 = scmp.eq.s32.totalorder %s32, 0
      %p351 = por %p349, %p350
      %p352 = scmp.ne.s32.totalorder %s344, %s346
      %p353 = scmp.eq.s32.totalorder %s37, 1
      %p354 = por %p352, %p353
      %p355 = scmp.ne.s32.totalorder %s346, %s347
      %p356 = scmp.eq.s32.totalorder %s37, 0
      %p357 = por %p355, %p356
      %p358 = scmp.ne.s32.totalorder %s346, %s347
      %p359 = scmp.eq.s32.totalorder %s38, 1
      %p360 = por %p358, %p359
      %p362 = scmp.ne.s32.totalorder %s347, %s361
      %p363 = scmp.eq.s32.totalorder %s38, 0
      %p364 = por %p362, %p363
      %s366 = sadd.s32 %s365, 1
      %p369 = scmp.eq.s32.totalorder %s32, 1
      %p370 = scmp.ne.s32.totalorder %s365, %s367
      %p371 = scmp.eq.s32.totalorder %s32, 0
      %p372 = por %p370, %p371
      %p373 = scmp.ne.s32.totalorder %s365, %s367
      %p374 = scmp.eq.s32.totalorder %s37, 1
      %p375 = por %p373, %p374
      %p376 = scmp.ne.s32.totalorder %s367, %s368
      %p377 = scmp.eq.s32.totalorder %s37, 0
      %p378 = por %p376, %p377
      %p379 = scmp.ne.s32.totalorder %s367, %s368
      %p380 = scmp.eq.s32.totalorder %s38, 1
      %p381 = por %p379, %p380
      %p383 = scmp.ne.s32.totalorder %s368, %s382
      %p384 = scmp.eq.s32.totalorder %s38, 0
      %p385 = por %p383, %p384
      %s387 = sadd.s32 %s386, 1
      %p390 = scmp.eq.s32.totalorder %s32, 1
      %p391 = scmp.ne.s32.totalorder %s386, %s388
      %p392 = scmp.eq.s32.totalorder %s32, 0
      %p393 = por %p391, %p392
      %p394 = scmp.ne.s32.totalorder %s386, %s388
      %p395 = scmp.eq.s32.totalorder %s37, 1
      %p396 = por %p394, %p395
      %p397 = scmp.ne.s32.totalorder %s388, %s389
      %p398 = scmp.eq.s32.totalorder %s37, 0
      %p399 = por %p397, %p398
      %p400 = scmp.ne.s32.totalorder %s388, %s389
      %p401 = scmp.eq.s32.totalorder %s38, 1
      %p402 = por %p400, %p401
      %p404 = scmp.ne.s32.totalorder %s389, %s403
      %p405 = scmp.eq.s32.totalorder %s38, 0
      %p406 = por %p404, %p405
      %s408 = sadd.s32 %s407, 1
      %p411 = scmp.eq.s32.totalorder %s32, 1
      %p412 = scmp.ne.s32.totalorder %s407, %s409
      %p413 = scmp.eq.s32.totalorder %s32, 0
      %p414 = por %p412, %p413
      %p415 = scmp.ne.s32.totalorder %s407, %s409
      %p416 = scmp.eq.s32.totalorder %s37, 1
      %p417 = por %p415, %p416
      %p418 = scmp.ne.s32.totalorder %s409, %s410
      %p419 = scmp.eq.s32.totalorder %s37, 0
      %p420 = por %p418, %p419
      %p421 = scmp.ne.s32.totalorder %s409, %s410
      %p422 = scmp.eq.s32.totalorder %s38, 1
      %p423 = por %p421, %p422
      %p425 = scmp.ne.s32.totalorder %s410, %s424
      %p426 = scmp.eq.s32.totalorder %s38, 0
      %p427 = por %p425, %p426
      %s429 = sadd.s32 %s428, 1
      %p432 = scmp.eq.s32.totalorder %s32, 1
      %p433 = scmp.ne.s32.totalorder %s428, %s430
      %p434 = scmp.eq.s32.totalorder %s32, 0
      %p435 = por %p433, %p434
      %p436 = scmp.ne.s32.totalorder %s428, %s430
      %p437 = scmp.eq.s32.totalorder %s37, 1
      %p438 = por %p436, %p437
      %p439 = scmp.ne.s32.totalorder %s430, %s431
      %p440 = scmp.eq.s32.totalorder %s37, 0
      %p441 = por %p439, %p440
      %p442 = scmp.ne.s32.totalorder %s430, %s431
      %p443 = scmp.eq.s32.totalorder %s38, 1
      %p444 = por %p442, %p443
      %p446 = scmp.ne.s32.totalorder %s431, %s445
      %p447 = scmp.eq.s32.totalorder %s38, 0
      %p448 = por %p446, %p447
      %s449 = ssub.s32 %s32, %s39
      %p450 = scmp.eq.s32.totalorder %s449, 0
      %s452 = sadd.s32 %s451, 1
      %s453 = scalar_select %p450, %s451, %s452
      %p456 = pneg %p450
      %p457 = scmp.eq.s32.totalorder %s32, 1
      %p458 = por %p456, %p457
      %p459 = scmp.ne.s32.totalorder %s451, %s454
      %p460 = scmp.eq.s32.totalorder %s32, 0
      %p461 = por %p459, %p460
      %p462 = scmp.ne.s32.totalorder %s451, %s454
      %p463 = scmp.eq.s32.totalorder %s37, 1
      %p464 = por %p462, %p463
      %p465 = scmp.ne.s32.totalorder %s454, %s455
      %p466 = scmp.eq.s32.totalorder %s37, 0
      %p467 = por %p465, %p466
      %p468 = scmp.ne.s32.totalorder %s454, %s455
      %p469 = scmp.eq.s32.totalorder %s38, 1
      %p470 = por %p468, %p469
      %p472 = scmp.ne.s32.totalorder %s455, %s471
      %p473 = scmp.eq.s32.totalorder %s38, 0
      %p474 = por %p472, %p473
      %s475 = ssub.s32 %s32, %s39
      %p476 = scmp.eq.s32.totalorder %s475, 0
      %s478 = sadd.s32 %s477, 1
      %s479 = scalar_select %p476, %s477, %s478
      %p482 = pneg %p476
      %p483 = scmp.eq.s32.totalorder %s32, 1
      %p484 = por %p482, %p483
      %p485 = scmp.ne.s32.totalorder %s477, %s480
      %p486 = scmp.eq.s32.totalorder %s32, 0
      %p487 = por %p485, %p486
      %p488 = scmp.ne.s32.totalorder %s477, %s480
      %p489 = scmp.eq.s32.totalorder %s37, 1
      %p490 = por %p488, %p489
      %p491 = scmp.ne.s32.totalorder %s480, %s481
      %p492 = scmp.eq.s32.totalorder %s37, 0
      %p493 = por %p491, %p492
      %p494 = scmp.ne.s32.totalorder %s480, %s481
      %p495 = scmp.eq.s32.totalorder %s38, 1
      %p496 = por %p494, %p495
      %p498 = scmp.ne.s32.totalorder %s481, %s497
      %p499 = scmp.eq.s32.totalorder %s38, 0
      %p500 = por %p498, %p499
      %p501 = scmp.le.s32.totalorder 1, %s32
      %p502 = scmp.lt.s32.totalorder %s32, 3
      %p503 = pnand %p501, %p502
      %p504 = pneg %p503
      // Predicated region
      $region9: #{network_forward.1} parent=5 // pred_check
        _
      $region10: #{network_forward.1} parent=5 // pred_check_branch
        %506 = sbr.rel (%p503) target = $region12
      $region11: #{network_forward.1} parent=5 // pred_region
        %s507 = ssub.s32 %s32, 1
        // Predicated region
        $region13: #{network_forward.1} parent=11 // pred_check
          %p508 = pneg %p105
        $region14: #{network_forward.1} parent=11 // pred_check_branch
          %510 = sbr.rel (%p508) target = $region16
        $region15: #{network_forward.1} parent=11 // pred_region
          _
        $region16: #{network_forward.1} parent=11 // pred_fallthru
          _
        // Predicated region
        $region17: #{network_forward.1} parent=11 // pred_check
          %p511 = pneg %p126
        $region18: #{network_forward.1} parent=11 // pred_check_branch
          %513 = sbr.rel (%p511) target = $region20
        $region19: #{network_forward.1} parent=11 // pred_region
          _
        $region20: #{network_forward.1} parent=11 // pred_fallthru
          _
        // Predicated region
        $region21: #{network_forward.1} parent=11 // pred_check
          %p514 = pneg %p147
        $region22: #{network_forward.1} parent=11 // pred_check_branch
          %516 = sbr.rel (%p514) target = $region24
        $region23: #{network_forward.1} parent=11 // pred_region
          %s518 = ssub.s32 4096, 4096
          %519 = vsyncadd [#allocation4], %s518
          %s520 = sshll.u32 [#allocation3], 4
          %s521 = int_to_ptr.vmem [resolvable:$true] %s520
          %526 = dma.hbm_to_vmem [thread:$0]  %s4, 4096, %s521, [#allocation4], 64, 64, 4
        $region24: #{network_forward.1} parent=11 // pred_fallthru
          _
        // Predicated region
        $region25: #{network_forward.1} parent=11 // pred_check
          %p527 = pneg %p168
        $region26: #{network_forward.1} parent=11 // pred_check_branch
          %529 = sbr.rel (%p527) target = $region28
        $region27: #{network_forward.1} parent=11 // pred_region
          _
        $region28: #{network_forward.1} parent=11 // pred_fallthru
          _
        // Predicated region
        $region29: #{network_forward.1} parent=11 // pred_check
          %p530 = pneg %p189
        $region30: #{network_forward.1} parent=11 // pred_check_branch
          %532 = sbr.rel (%p530) target = $region32
        $region31: #{network_forward.1} parent=11 // pred_region
          %s534 = ssub.s32 16384, 16384
          %535 = vsyncadd [#allocation6], %s534
          %s536 = sshll.u32 [#allocation5], 4
          %s537 = int_to_ptr.vmem [resolvable:$true] %s536
          %542 = dma.hbm_to_vmem [thread:$0]  %s6, 16384, %s537, [#allocation6], 256, 256, 16
        $region32: #{network_forward.1} parent=11 // pred_fallthru
          _
        // Predicated region
        $region33: #{network_forward.1} parent=11 // pred_check
          %p543 = pneg %p210
        $region34: #{network_forward.1} parent=11 // pred_check_branch
          %545 = sbr.rel (%p543) target = $region36
        $region35: #{network_forward.1} parent=11 // pred_region
          _
        $region36: #{network_forward.1} parent=11 // pred_fallthru
          _
        // Predicated region
        $region37: #{network_forward.1} parent=11 // pred_check
          %p546 = pneg %p231
        $region38: #{network_forward.1} parent=11 // pred_check_branch
          %548 = sbr.rel (%p546) target = $region40
        $region39: #{network_forward.1} parent=11 // pred_region
          _
        $region40: #{network_forward.1} parent=11 // pred_fallthru
          _
        // Predicated region
        $region41: #{network_forward.1} parent=11 // pred_check
          %p549 = pneg %p252
        $region42: #{network_forward.1} parent=11 // pred_check_branch
          %551 = sbr.rel (%p549) target = $region44
        $region43: #{network_forward.1} parent=11 // pred_region
          %s553 = ssub.s32 12288, 12288
          %554 = vsyncadd [#allocation6], %s553
          %s555 = sshll.u32 [#allocation7], 4
          %s556 = int_to_ptr.vmem [resolvable:$true] %s555
          %561 = dma.hbm_to_vmem [thread:$0]  %s9, 12288, %s556, [#allocation6], 192, 192, 12
        $region44: #{network_forward.1} parent=11 // pred_fallthru
          _
        // Predicated region
        $region45: #{network_forward.1} parent=11 // pred_check
          %p562 = pneg %p273
        $region46: #{network_forward.1} parent=11 // pred_check_branch
          %564 = sbr.rel (%p562) target = $region48
        $region47: #{network_forward.1} parent=11 // pred_region
          _
        $region48: #{network_forward.1} parent=11 // pred_fallthru
          _
        // Predicated region
        $region49: #{network_forward.1} parent=11 // pred_check
          %p565 = pneg %p294
        $region50: #{network_forward.1} parent=11 // pred_check_branch
          %567 = sbr.rel (%p565) target = $region52
        $region51: #{network_forward.1} parent=11 // pred_region
          %s569 = ssub.s32 12288, 12288
          %570 = vsyncadd [#allocation9], %s569
          %s571 = sshll.u32 [#allocation8], 4
          %s572 = int_to_ptr.vmem [resolvable:$true] %s571
          %577 = dma.hbm_to_vmem [thread:$0]  %s11, 12288, %s572, [#allocation9], 192, 192, 12
        $region52: #{network_forward.1} parent=11 // pred_fallthru
          _
        // Predicated region
        $region53: #{network_forward.1} parent=11 // pred_check
          %p578 = pneg %p315
        $region54: #{network_forward.1} parent=11 // pred_check_branch
          %580 = sbr.rel (%p578) target = $region56
        $region55: #{network_forward.1} parent=11 // pred_region
          _
        $region56: #{network_forward.1} parent=11 // pred_fallthru
          _
        // Predicated region
        $region57: #{network_forward.1} parent=11 // pred_check
          %p581 = pneg %p336
        $region58: #{network_forward.1} parent=11 // pred_check_branch
          %583 = sbr.rel (%p581) target = $region60
        $region59: #{network_forward.1} parent=11 // pred_region
          %s585 = ssub.s32 12288, 12288
          %586 = vsyncadd [#allocation9], %s585
          %s587 = sshll.u32 [#allocation10], 4
          %s588 = int_to_ptr.vmem [resolvable:$true] %s587
          %593 = dma.hbm_to_vmem [thread:$0]  %s13, 12288, %s588, [#allocation9], 128, 128, 8
        $region60: #{network_forward.1} parent=11 // pred_fallthru
          _
        // Predicated region
        $region61: #{network_forward.1} parent=11 // pred_check
          %p594 = pneg %p357
        $region62: #{network_forward.1} parent=11 // pred_check_branch
          %596 = sbr.rel (%p594) target = $region64
        $region63: #{network_forward.1} parent=11 // pred_region
          _
        $region64: #{network_forward.1} parent=11 // pred_fallthru
          _
        // Predicated region
        $region65: #{network_forward.1} parent=11 // pred_check
          %p597 = pneg %p378
        $region66: #{network_forward.1} parent=11 // pred_check_branch
          %599 = sbr.rel (%p597) target = $region68
        $region67: #{network_forward.1} parent=11 // pred_region
          %s601 = ssub.s32 6144, 6144
          %602 = vsyncadd [#allocation12], %s601
          %s603 = sshll.u32 [#allocation11], 4
          %s604 = int_to_ptr.vmem [resolvable:$true] %s603
          %609 = dma.hbm_to_vmem [thread:$0]  %s15, 6144, %s604, [#allocation12], 128, 128, 8
        $region68: #{network_forward.1} parent=11 // pred_fallthru
          _
        // Predicated region
        $region69: #{network_forward.1} parent=11 // pred_check
          %p610 = pneg %p399
        $region70: #{network_forward.1} parent=11 // pred_check_branch
          %612 = sbr.rel (%p610) target = $region72
        $region71: #{network_forward.1} parent=11 // pred_region
          _
        $region72: #{network_forward.1} parent=11 // pred_fallthru
          _
        // Predicated region
        $region73: #{network_forward.1} parent=11 // pred_check
          %p613 = pneg %p420
        $region74: #{network_forward.1} parent=11 // pred_check_branch
          %615 = sbr.rel (%p613) target = $region76
        $region75: #{network_forward.1} parent=11 // pred_region
          _
        $region76: #{network_forward.1} parent=11 // pred_fallthru
          _
        // Predicated region
        $region77: #{network_forward.1} parent=11 // pred_check
          %p616 = pneg %p441
        $region78: #{network_forward.1} parent=11 // pred_check_branch
          %618 = sbr.rel (%p616) target = $region80
        $region79: #{network_forward.1} parent=11 // pred_region
          _
        $region80: #{network_forward.1} parent=11 // pred_fallthru
          _
      $region12: #{network_forward.1} parent=5 // pred_fallthru
        _
      %p619 = scmp.lt.s32.totalorder %s32, 2
      // Predicated region
      $region81: #{network_forward.1} parent=5 // pred_check
        %p620 = pneg %p619
      $region82: #{network_forward.1} parent=5 // pred_check_branch
        %622 = sbr.rel (%p620) target = $region84
      $region83: #{network_forward.1} parent=5 // pred_region
        // Predicated region
        $region85: #{network_forward.1} parent=83 // pred_check
          %p623 = pneg %p52
        $region86: #{network_forward.1} parent=83 // pred_check_branch
          %625 = sbr.rel (%p623) target = $region88
        $region87: #{network_forward.1} parent=83 // pred_region
          %p626 = scmp.lt.s32.totalorder %s32, 1
          %s627 = scalar_select %p626, %s32, 1
          %s628 = smul.addr %s627, 8
          %s629 = smul.addr %s628, 4
          %s630 = scalar_lea.vmem %s0, %s629
        $region88: #{network_forward.1} parent=83 // pred_fallthru
          _
        // Predicated region
        $region89: #{network_forward.1} parent=83 // pred_check
          %p631 = pneg %p78
        $region90: #{network_forward.1} parent=83 // pred_check_branch
          %633 = sbr.rel (%p631) target = $region92
        $region91: #{network_forward.1} parent=83 // pred_region
          %p634 = scmp.lt.s32.totalorder %s32, 1
          %s635 = scalar_select %p634, %s32, 1
          %s636 = smul.addr %s635, 8
          %s637 = smul.addr %s636, 4
          %s638 = scalar_lea.vmem %s1, %s637
        $region92: #{network_forward.1} parent=83 // pred_fallthru
          _
      $region84: #{network_forward.1} parent=5 // pred_fallthru
        _
      %p639 = scmp.le.s32.totalorder 1, %s32
      %p640 = scmp.lt.s32.totalorder %s32, 3
      %p641 = pnand %p639, %p640
      %p642 = pneg %p641
      // Predicated region
      $region93: #{network_forward.1} parent=5 // pred_check
        _
      $region94: #{network_forward.1} parent=5 // pred_check_branch
        %644 = sbr.rel (%p641) target = $region96
      $region95: #{network_forward.1} parent=5 // pred_region
        %s645 = ssub.s32 %s32, 1
        // Predicated region
        $region97: #{network_forward.1} parent=95 // pred_check
          %p646 = pneg %p147
        $region98: #{network_forward.1} parent=95 // pred_check_branch
          %648 = sbr.rel (%p646) target = $region100
        $region99: #{network_forward.1} parent=95 // pred_region
          %649 = dma.done [#allocation4], 4096
        $region100: #{network_forward.1} parent=95 // pred_fallthru
          _
        // Predicated region
        $region101: #{network_forward.1} parent=95 // pred_check
          %p650 = pneg %p189
        $region102: #{network_forward.1} parent=95 // pred_check_branch
          %652 = sbr.rel (%p650) target = $region104
        $region103: #{network_forward.1} parent=95 // pred_region
          %653 = dma.done [#allocation6], 16384
        $region104: #{network_forward.1} parent=95 // pred_fallthru
          _
        // Predicated region
        $region105: #{network_forward.1} parent=95 // pred_check
          %p654 = pneg %p252
        $region106: #{network_forward.1} parent=95 // pred_check_branch
          %656 = sbr.rel (%p654) target = $region108
        $region107: #{network_forward.1} parent=95 // pred_region
          %657 = dma.done [#allocation6], 12288
        $region108: #{network_forward.1} parent=95 // pred_fallthru
          _
        // Predicated region
        $region109: #{network_forward.1} parent=95 // pred_check
          %p658 = pneg %p294
        $region110: #{network_forward.1} parent=95 // pred_check_branch
          %660 = sbr.rel (%p658) target = $region112
        $region111: #{network_forward.1} parent=95 // pred_region
          %661 = dma.done [#allocation9], 12288
        $region112: #{network_forward.1} parent=95 // pred_fallthru
          _
        // Predicated region
        $region113: #{network_forward.1} parent=95 // pred_check
          %p662 = pneg %p336
        $region114: #{network_forward.1} parent=95 // pred_check_branch
          %664 = sbr.rel (%p662) target = $region116
        $region115: #{network_forward.1} parent=95 // pred_region
          %665 = dma.done [#allocation9], 12288
        $region116: #{network_forward.1} parent=95 // pred_fallthru
          _
        // Predicated region
        $region117: #{network_forward.1} parent=95 // pred_check
          %p666 = pneg %p378
        $region118: #{network_forward.1} parent=95 // pred_check_branch
          %668 = sbr.rel (%p666) target = $region120
        $region119: #{network_forward.1} parent=95 // pred_region
          %669 = dma.done [#allocation12], 6144
        $region120: #{network_forward.1} parent=95 // pred_fallthru
          _
        %p670 = scmp.lt.s32.totalorder %s37, 1
        %s671 = scalar_select %p670, %s37, 1
        %s672 = smul.addr %s671, 8
        %s673 = smul.addr %s672, 4
        %s674 = scalar_lea.vmem %s0, %s673
        %p675 = pneg %p58
        %p676 = pneg %p55
        %p677 = scmp.lt.s32.totalorder %s37, 1
        %s678 = scalar_select %p677, %s37, 1
        %s679 = smul.addr %s678, 8
        %s680 = smul.addr %s679, 4
        %s681 = scalar_lea.vmem %s1, %s680
        %p682 = pneg %p84
        %p683 = pneg %p81
        %p684 = pneg %p105
        %p685 = pneg %p102
        %p686 = pneg %p126
        %p687 = pneg %p123
        %p688 = pneg %p147
        %p689 = pneg %p144
        %p690 = pneg %p168
        %p691 = pneg %p165
        %p692 = pneg %p189
        %p693 = pneg %p186
        %p694 = pneg %p210
        %p695 = pneg %p207
        %p696 = pneg %p231
        %p697 = pneg %p228
        %p698 = pneg %p252
        %p699 = pneg %p249
        %p700 = pneg %p273
        %p701 = pneg %p270
        %p702 = pneg %p294
        %p703 = pneg %p291
        %p704 = pneg %p315
        %p705 = pneg %p312
        %p706 = pneg %p336
        %p707 = pneg %p333
        %p708 = pneg %p357
        %p709 = pneg %p354
        %p710 = pneg %p378
        %p711 = pneg %p375
        %p712 = pneg %p399
        %p713 = pneg %p396
        %p714 = pneg %p420
        %p715 = pneg %p417
        %p716 = pneg %p441
        %p717 = pneg %p438
        %p718 = pneg %p467
        %p719 = pneg %p464
        %p720 = scmp.lt.s32.totalorder %s37, 1
        %s721 = scalar_select %p720, %s37, 1
        %s722 = smul.addr %s721, 3
        %s723 = scalar_lea.vmem %s19, %s722
        %p724 = pneg %p493
        %p725 = pneg %p490
        %p726 = scmp.lt.s32.totalorder %s37, 1
        %s727 = scalar_select %p726, %s37, 1
        %s728 = smul.addr %s727, 6
        %s729 = scalar_lea.vmem %s20, %s728
        %p730 = scmp.lt.s32.totalorder %s37, 1
        %s731 = scalar_select %p730, %s37, 1
        %s732 = smul.addr %s731, 8
        %s733 = smul.addr %s732, 4
        %s734 = scalar_lea.vmem %s0, %s733
        %p735 = scmp.lt.s32.totalorder %s37, 1
        %s736 = scalar_select %p735, %s37, 1
        %s737 = smul.addr %s736, 8
        %s738 = smul.addr %s737, 4
        %s739 = scalar_lea.vmem %s1, %s738
        %p740 = scmp.lt.s32.totalorder %s37, 1
        %s741 = scalar_select %p740, %s37, 1
        %s742 = smul.addr %s741, 3
        %s743 = scalar_lea.vmem %s19, %s742
        %p744 = scmp.lt.s32.totalorder %s37, 1
        %s745 = scalar_select %p744, %s37, 1
        %s746 = smul.addr %s745, 6
        %s747 = scalar_lea.vmem %s20, %s746
        %v749 = vld [vmem:[%s734] sm:$0xff]
        %v750 = vld [vmem:[%s734 + $0x8] sm:$0xff]
        %v751 = vld [vmem:[%s734 + $0x10] sm:$0xff]
        %v752 = vld [vmem:[%s734 + $0x18] sm:$0xff]
        %v753 = vld [vmem:[%s739] sm:$0xff]
        %v754 = vld [vmem:[%s739 + $0x8] sm:$0xff]
        %v755 = vld [vmem:[%s739 + $0x10] sm:$0xff]
        %v756 = vld [vmem:[%s739 + $0x18] sm:$0xff]
        %v757 = vld [vmem:[%s2] sm:$0xf]
        %v758 = vld [vmem:[%s2 + $0x4] sm:$0xf]
        %v759 = vld [vmem:[%s2 + $0x8] sm:$0xf]
        %v760 = vld [vmem:[%s2 + $0xc] sm:$0xf]
        %v761 = vld [vmem:[%s2 + $0x10] sm:$0xf]
        %v762 = vld [vmem:[%s2 + $0x14] sm:$0xf]
        %v763 = vld [vmem:[%s2 + $0x18] sm:$0xf]
        %v764 = vld [vmem:[%s2 + $0x1c] sm:$0xf]
        %v765 = vld [vmem:[%s2 + $0x20] sm:$0xf]
        %v766 = vld [vmem:[%s2 + $0x24] sm:$0xf]
        %v767 = vld [vmem:[%s2 + $0x28] sm:$0xf]
        %v768 = vld [vmem:[%s2 + $0x2c] sm:$0xf]
        %v769 = vld [vmem:[%s2 + $0x30] sm:$0xf]
        %v770 = vld [vmem:[%s2 + $0x34] sm:$0xf]
        %v771 = vld [vmem:[%s2 + $0x38] sm:$0xf]
        %v772 = vld [vmem:[%s2 + $0x3c] sm:$0xf]
        %v773 = vld [vmem:[%s2 + $0x40] sm:$0xf]
        %v774 = vld [vmem:[%s2 + $0x44] sm:$0xf]
        %v775 = vld [vmem:[%s2 + $0x48] sm:$0xf]
        %v776 = vld [vmem:[%s2 + $0x4c] sm:$0xf]
        %v777 = vld [vmem:[%s2 + $0x50] sm:$0xf]
        %v778 = vld [vmem:[%s2 + $0x54] sm:$0xf]
        %v779 = vld [vmem:[%s2 + $0x58] sm:$0xf]
        %v780 = vld [vmem:[%s2 + $0x5c] sm:$0xf]
        %v781 = vld [vmem:[%s2 + $0x60] sm:$0xf]
        %v782 = vld [vmem:[%s2 + $0x64] sm:$0xf]
        %v783 = vld [vmem:[%s2 + $0x68] sm:$0xf]
        %v784 = vld [vmem:[%s2 + $0x6c] sm:$0xf]
        %v785 = vld [vmem:[%s2 + $0x70] sm:$0xf]
        %v786 = vld [vmem:[%s2 + $0x74] sm:$0xf]
        %v787 = vld [vmem:[%s2 + $0x78] sm:$0xf]
        %v788 = vld [vmem:[%s2 + $0x7c] sm:$0xf]
        %v789 = vld [vmem:[%s2 + $0x80] sm:$0xf]
        %v790 = vld [vmem:[%s2 + $0x84] sm:$0xf]
        %v791 = vld [vmem:[%s2 + $0x88] sm:$0xf]
        %v792 = vld [vmem:[%s2 + $0x8c] sm:$0xf]
        %v793 = vld [vmem:[%s2 + $0x90] sm:$0xf]
        %v794 = vld [vmem:[%s2 + $0x94] sm:$0xf]
        %v795 = vld [vmem:[%s2 + $0x98] sm:$0xf]
        %v796 = vld [vmem:[%s2 + $0x9c] sm:$0xf]
        %v797 = vld [vmem:[%s2 + $0xa0] sm:$0xf]
        %v798 = vld [vmem:[%s2 + $0xa4] sm:$0xf]
        %v799 = vld [vmem:[%s2 + $0xa8] sm:$0xf]
        %v800 = vld [vmem:[%s2 + $0xac] sm:$0xf]
        %v801 = vld [vmem:[%s2 + $0xb0] sm:$0xf]
        %v802 = vld [vmem:[%s2 + $0xb4] sm:$0xf]
        %v803 = vld [vmem:[%s2 + $0xb8] sm:$0xf]
        %v804 = vld [vmem:[%s2 + $0xbc] sm:$0xf]
        %v805 = vld [vmem:[%s2 + $0xc0] sm:$0xf]
        %v806 = vld [vmem:[%s2 + $0xc4] sm:$0xf]
        %v807 = vld [vmem:[%s2 + $0xc8] sm:$0xf]
        %v808 = vld [vmem:[%s2 + $0xcc] sm:$0xf]
        %v809 = vld [vmem:[%s2 + $0xd0] sm:$0xf]
        %v810 = vld [vmem:[%s2 + $0xd4] sm:$0xf]
        %v811 = vld [vmem:[%s2 + $0xd8] sm:$0xf]
        %v812 = vld [vmem:[%s2 + $0xdc] sm:$0xf]
        %v813 = vld [vmem:[%s2 + $0xe0] sm:$0xf]
        %v814 = vld [vmem:[%s2 + $0xe4] sm:$0xf]
        %v815 = vld [vmem:[%s2 + $0xe8] sm:$0xf]
        %v816 = vld [vmem:[%s2 + $0xec] sm:$0xf]
        %v817 = vld [vmem:[%s2 + $0xf0] sm:$0xf]
        %v818 = vld [vmem:[%s2 + $0xf4] sm:$0xf]
        %v819 = vld [vmem:[%s2 + $0xf8] sm:$0xf]
        %v820 = vld [vmem:[%s2 + $0xfc] sm:$0xf]
        %v821 = vld [vmem:[%s3] sm:$0x1]
        %v823 = vlaneseq
        %v824 = vshrl.u32 %v823, 7
        %v825 = vsub.s32 0, %v824
        %v826 = vrot.slane %v821, %v825
        %v832 = vunpack.c.l.b16 %v749
        %v833 = vunpack.c.h.b16 %v749
        %v834 = vunpack.c.l.b16 %v750
        %v835 = vunpack.c.h.b16 %v750
        %v836 = vunpack.c.l.b16 %v751
        %v837 = vunpack.c.h.b16 %v751
        %v838 = vunpack.c.l.b16 %v752
        %v839 = vunpack.c.h.b16 %v752
        %v840 = vpack.c.b16 %v836, %v832
        %v841 = vpack.c.b16 %v837, %v833
        %v842 = vpack.c.b16 %v838, %v834
        %v843 = vpack.c.b16 %v839, %v835
        %v912 = vunpack.c.l.b16 %v757
        %v913 = vunpack.c.l.b16 %v758
        %v914 = vunpack.c.l.b16 %v759
        %v915 = vunpack.c.l.b16 %v760
        %v916 = vunpack.c.l.b16 %v761
        %v917 = vunpack.c.l.b16 %v762
        %v918 = vunpack.c.l.b16 %v763
        %v919 = vunpack.c.l.b16 %v764
        %v920 = vunpack.c.l.b16 %v765
        %v921 = vunpack.c.l.b16 %v766
        %v922 = vunpack.c.l.b16 %v767
        %v923 = vunpack.c.l.b16 %v768
        %v924 = vunpack.c.l.b16 %v769
        %v925 = vunpack.c.l.b16 %v770
        %v926 = vunpack.c.l.b16 %v771
        %v927 = vunpack.c.l.b16 %v772
        %v928 = vunpack.c.l.b16 %v773
        %v929 = vunpack.c.l.b16 %v774
        %v930 = vunpack.c.l.b16 %v775
        %v931 = vunpack.c.l.b16 %v776
        %v932 = vunpack.c.l.b16 %v777
        %v933 = vunpack.c.l.b16 %v778
        %v934 = vunpack.c.l.b16 %v779
        %v935 = vunpack.c.l.b16 %v780
        %v936 = vunpack.c.l.b16 %v781
        %v937 = vunpack.c.l.b16 %v782
        %v938 = vunpack.c.l.b16 %v783
        %v939 = vunpack.c.l.b16 %v784
        %v940 = vunpack.c.l.b16 %v785
        %v941 = vunpack.c.l.b16 %v786
        %v942 = vunpack.c.l.b16 %v787
        %v943 = vunpack.c.l.b16 %v788
        %v944 = vunpack.c.l.b16 %v789
        %v945 = vunpack.c.l.b16 %v790
        %v946 = vunpack.c.l.b16 %v791
        %v947 = vunpack.c.l.b16 %v792
        %v948 = vunpack.c.l.b16 %v793
        %v949 = vunpack.c.l.b16 %v794
        %v950 = vunpack.c.l.b16 %v795
        %v951 = vunpack.c.l.b16 %v796
        %v952 = vunpack.c.l.b16 %v797
        %v953 = vunpack.c.l.b16 %v798
        %v954 = vunpack.c.l.b16 %v799
        %v955 = vunpack.c.l.b16 %v800
        %v956 = vunpack.c.l.b16 %v801
        %v957 = vunpack.c.l.b16 %v802
        %v958 = vunpack.c.l.b16 %v803
        %v959 = vunpack.c.l.b16 %v804
        %v960 = vunpack.c.l.b16 %v805
        %v961 = vunpack.c.l.b16 %v806
        %v962 = vunpack.c.l.b16 %v807
        %v963 = vunpack.c.l.b16 %v808
        %v964 = vunpack.c.l.b16 %v809
        %v965 = vunpack.c.l.b16 %v810
        %v966 = vunpack.c.l.b16 %v811
        %v967 = vunpack.c.l.b16 %v812
        %v968 = vunpack.c.l.b16 %v813
        %v969 = vunpack.c.l.b16 %v814
        %v970 = vunpack.c.l.b16 %v815
        %v971 = vunpack.c.l.b16 %v816
        %v972 = vunpack.c.l.b16 %v817
        %v973 = vunpack.c.l.b16 %v818
        %v974 = vunpack.c.l.b16 %v819
        %v975 = vunpack.c.l.b16 %v820
        %v976 = vpack.c.b16 %v913, %v912
        %v977 = vpack.c.b16 %v915, %v914
        %v978 = vpack.c.b16 %v917, %v916
        %v979 = vpack.c.b16 %v919, %v918
        %v980 = vpack.c.b16 %v921, %v920
        %v981 = vpack.c.b16 %v923, %v922
        %v982 = vpack.c.b16 %v925, %v924
        %v983 = vpack.c.b16 %v927, %v926
        %v984 = vpack.c.b16 %v929, %v928
        %v985 = vpack.c.b16 %v931, %v930
        %v986 = vpack.c.b16 %v933, %v932
        %v987 = vpack.c.b16 %v935, %v934
        %v988 = vpack.c.b16 %v937, %v936
        %v989 = vpack.c.b16 %v939, %v938
        %v990 = vpack.c.b16 %v941, %v940
        %v991 = vpack.c.b16 %v943, %v942
        %v992 = vpack.c.b16 %v945, %v944
        %v993 = vpack.c.b16 %v947, %v946
        %v994 = vpack.c.b16 %v949, %v948
        %v995 = vpack.c.b16 %v951, %v950
        %v996 = vpack.c.b16 %v953, %v952
        %v997 = vpack.c.b16 %v955, %v954
        %v998 = vpack.c.b16 %v957, %v956
        %v999 = vpack.c.b16 %v959, %v958
        %v1000 = vpack.c.b16 %v961, %v960
        %v1001 = vpack.c.b16 %v963, %v962
        %v1002 = vpack.c.b16 %v965, %v964
        %v1003 = vpack.c.b16 %v967, %v966
        %v1004 = vpack.c.b16 %v969, %v968
        %v1005 = vpack.c.b16 %v971, %v970
        %v1006 = vpack.c.b16 %v973, %v972
        %v1007 = vpack.c.b16 %v975, %v974
        %1040 = vmatprep.subr.bf16.mxu0 0
        %1041 = vmatpush1.bf16.msra.mxu0 %v983
        %1042 = vmatprep.subr.bf16.mxu0 0
        %1043 = vmatpush1.bf16.msra.mxu0 %v982
        %1044 = vmatprep.subr.bf16.mxu0 0
        %1045 = vmatpush1.bf16.msra.mxu0 %v981
        %1046 = vmatprep.subr.bf16.mxu0 0
        %1047 = vmatpush1.bf16.msra.mxu0 %v980
        %1048 = vmatprep.subr.bf16.mxu0 0
        %1049 = vmatpush1.bf16.msra.mxu0 %v979
        %1050 = vmatprep.subr.bf16.mxu0 0
        %1051 = vmatpush1.bf16.msra.mxu0 %v978
        %1052 = vmatprep.subr.bf16.mxu0 0
        %1053 = vmatpush1.bf16.msra.mxu0 %v977
        %1054 = vmatprep.subr.bf16.mxu0 0
        %1055 = vmatpush1.bf16.msra.mxu0 %v976
        %1056 = vmatprep.subr.bf16.mxu0 0
        %1057 = vmatpush2.bf16.msra.mxu0 %v991
        %1058 = vmatprep.subr.bf16.mxu0 0
        %1059 = vmatpush2.bf16.msra.mxu0 %v990
        %1060 = vmatprep.subr.bf16.mxu0 0
        %1061 = vmatpush2.bf16.msra.mxu0 %v989
        %1062 = vmatprep.subr.bf16.mxu0 0
        %1063 = vmatpush2.bf16.msra.mxu0 %v988
        %1064 = vmatprep.subr.bf16.mxu0 0
        %1065 = vmatpush2.bf16.msra.mxu0 %v987
        %1066 = vmatprep.subr.bf16.mxu0 0
        %1067 = vmatpush2.bf16.msra.mxu0 %v986
        %1068 = vmatprep.subr.bf16.mxu0 0
        %1069 = vmatpush2.bf16.msra.mxu0 %v985
        %1070 = vmatprep.subr.bf16.mxu0 0
        %1071 = vmatpush2.bf16.msra.mxu0 %v984
        %1072 = vmatprep.mubr.bf16.mxu0 %v841
        %1073 = vmatmul.mubr.bf16.gmra.mxu0 %v840
        %v1074 = vpop.f32.mrf.mxu0
        %v1075 = vadd.f32 %v826, %v1074
        %v1076 = vpop.f32.mrf.mxu0
        %v1077 = vpop.f32.mrf.mxu0
        %v1078 = vadd.f32 %v826, %v1077
        %v1079 = vpop.f32.mrf.mxu0
        %1080 = vdwg.mxu0
        %1081 = vmatprep.subr.bf16.mxu0 0
        %1082 = vmatpush1.bf16.msra.mxu0 %v999
        %1083 = vmatprep.subr.bf16.mxu0 0
        %1084 = vmatpush1.bf16.msra.mxu0 %v998
        %1085 = vmatprep.subr.bf16.mxu0 0
        %1086 = vmatpush1.bf16.msra.mxu0 %v997
        %1087 = vmatprep.subr.bf16.mxu0 0
        %1088 = vmatpush1.bf16.msra.mxu0 %v996
        %1089 = vmatprep.subr.bf16.mxu0 0
        %1090 = vmatpush1.bf16.msra.mxu0 %v995
        %1091 = vmatprep.subr.bf16.mxu0 0
        %1092 = vmatpush1.bf16.msra.mxu0 %v994
        %1093 = vmatprep.subr.bf16.mxu0 0
        %1094 = vmatpush1.bf16.msra.mxu0 %v993
        %1095 = vmatprep.subr.bf16.mxu0 0
        %1096 = vmatpush1.bf16.msra.mxu0 %v992
        %1097 = vmatprep.subr.bf16.mxu0 0
        %1098 = vmatpush2.bf16.msra.mxu0 %v1007
        %1099 = vmatprep.subr.bf16.mxu0 0
        %1100 = vmatpush2.bf16.msra.mxu0 %v1006
        %1101 = vmatprep.subr.bf16.mxu0 0
        %1102 = vmatpush2.bf16.msra.mxu0 %v1005
        %1103 = vmatprep.subr.bf16.mxu0 0
        %1104 = vmatpush2.bf16.msra.mxu0 %v1004
        %1105 = vmatprep.subr.bf16.mxu0 0
        %1106 = vmatpush2.bf16.msra.mxu0 %v1003
        %1107 = vmatprep.subr.bf16.mxu0 0
        %1108 = vmatpush2.bf16.msra.mxu0 %v1002
        %1109 = vmatprep.subr.bf16.mxu0 0
        %1110 = vmatpush2.bf16.msra.mxu0 %v1001
        %1111 = vmatprep.subr.bf16.mxu0 0
        %1112 = vmatpush2.bf16.msra.mxu0 %v1000
        %1113 = vmatprep.mubr.bf16.mxu0 %v843
        %1114 = vmatmul.mubr.bf16.gmra.mxu0 %v842
        %v1115 = vpop.f32.mrf.mxu0
        %v1116 = vadd.f32 %v1075, %v1115
        %v1117 = vpop.f32.mrf.mxu0
        %v1118 = vpop.f32.mrf.mxu0
        %v1119 = vadd.f32 %v1078, %v1118
        %v1120 = vpop.f32.mrf.mxu0
        %1121 = vdwg.mxu0
        %v1122 = vld [vmem:[#allocation3] sm:$0xf]
        %v1123 = vld [vmem:[#allocation3 + $0x4] sm:$0xf]
        %v1124 = vld [vmem:[#allocation3 + $0x8] sm:$0xf]
        %v1125 = vld [vmem:[#allocation3 + $0xc] sm:$0xf]
        %v1126 = vld [vmem:[#allocation3 + $0x10] sm:$0xf]
        %v1127 = vld [vmem:[#allocation3 + $0x14] sm:$0xf]
        %v1128 = vld [vmem:[#allocation3 + $0x18] sm:$0xf]
        %v1129 = vld [vmem:[#allocation3 + $0x1c] sm:$0xf]
        %v1130 = vld [vmem:[#allocation3 + $0x20] sm:$0xf]
        %v1131 = vld [vmem:[#allocation3 + $0x24] sm:$0xf]
        %v1132 = vld [vmem:[#allocation3 + $0x28] sm:$0xf]
        %v1133 = vld [vmem:[#allocation3 + $0x2c] sm:$0xf]
        %v1134 = vld [vmem:[#allocation3 + $0x30] sm:$0xf]
        %v1135 = vld [vmem:[#allocation3 + $0x34] sm:$0xf]
        %v1136 = vld [vmem:[#allocation3 + $0x38] sm:$0xf]
        %v1137 = vld [vmem:[#allocation3 + $0x3c] sm:$0xf]
        %v1138 = vld [vmem:[#allocation3 + $0x40] sm:$0xf]
        %v1139 = vld [vmem:[#allocation3 + $0x44] sm:$0xf]
        %v1140 = vld [vmem:[#allocation3 + $0x48] sm:$0xf]
        %v1141 = vld [vmem:[#allocation3 + $0x4c] sm:$0xf]
        %v1142 = vld [vmem:[#allocation3 + $0x50] sm:$0xf]
        %v1143 = vld [vmem:[#allocation3 + $0x54] sm:$0xf]
        %v1144 = vld [vmem:[#allocation3 + $0x58] sm:$0xf]
        %v1145 = vld [vmem:[#allocation3 + $0x5c] sm:$0xf]
        %v1146 = vld [vmem:[#allocation3 + $0x60] sm:$0xf]
        %v1147 = vld [vmem:[#allocation3 + $0x64] sm:$0xf]
        %v1148 = vld [vmem:[#allocation3 + $0x68] sm:$0xf]
        %v1149 = vld [vmem:[#allocation3 + $0x6c] sm:$0xf]
        %v1150 = vld [vmem:[#allocation3 + $0x70] sm:$0xf]
        %v1151 = vld [vmem:[#allocation3 + $0x74] sm:$0xf]
        %v1152 = vld [vmem:[#allocation3 + $0x78] sm:$0xf]
        %v1153 = vld [vmem:[#allocation3 + $0x7c] sm:$0xf]
        %v1154 = vld [vmem:[#allocation3 + $0x80] sm:$0xf]
        %v1155 = vld [vmem:[#allocation3 + $0x84] sm:$0xf]
        %v1156 = vld [vmem:[#allocation3 + $0x88] sm:$0xf]
        %v1157 = vld [vmem:[#allocation3 + $0x8c] sm:$0xf]
        %v1158 = vld [vmem:[#allocation3 + $0x90] sm:$0xf]
        %v1159 = vld [vmem:[#allocation3 + $0x94] sm:$0xf]
        %v1160 = vld [vmem:[#allocation3 + $0x98] sm:$0xf]
        %v1161 = vld [vmem:[#allocation3 + $0x9c] sm:$0xf]
        %v1162 = vld [vmem:[#allocation3 + $0xa0] sm:$0xf]
        %v1163 = vld [vmem:[#allocation3 + $0xa4] sm:$0xf]
        %v1164 = vld [vmem:[#allocation3 + $0xa8] sm:$0xf]
        %v1165 = vld [vmem:[#allocation3 + $0xac] sm:$0xf]
        %v1166 = vld [vmem:[#allocation3 + $0xb0] sm:$0xf]
        %v1167 = vld [vmem:[#allocation3 + $0xb4] sm:$0xf]
        %v1168 = vld [vmem:[#allocation3 + $0xb8] sm:$0xf]
        %v1169 = vld [vmem:[#allocation3 + $0xbc] sm:$0xf]
        %v1170 = vld [vmem:[#allocation3 + $0xc0] sm:$0xf]
        %v1171 = vld [vmem:[#allocation3 + $0xc4] sm:$0xf]
        %v1172 = vld [vmem:[#allocation3 + $0xc8] sm:$0xf]
        %v1173 = vld [vmem:[#allocation3 + $0xcc] sm:$0xf]
        %v1174 = vld [vmem:[#allocation3 + $0xd0] sm:$0xf]
        %v1175 = vld [vmem:[#allocation3 + $0xd4] sm:$0xf]
        %v1176 = vld [vmem:[#allocation3 + $0xd8] sm:$0xf]
        %v1177 = vld [vmem:[#allocation3 + $0xdc] sm:$0xf]
        %v1178 = vld [vmem:[#allocation3 + $0xe0] sm:$0xf]
        %v1179 = vld [vmem:[#allocation3 + $0xe4] sm:$0xf]
        %v1180 = vld [vmem:[#allocation3 + $0xe8] sm:$0xf]
        %v1181 = vld [vmem:[#allocation3 + $0xec] sm:$0xf]
        %v1182 = vld [vmem:[#allocation3 + $0xf0] sm:$0xf]
        %v1183 = vld [vmem:[#allocation3 + $0xf4] sm:$0xf]
        %v1184 = vld [vmem:[#allocation3 + $0xf8] sm:$0xf]
        %v1185 = vld [vmem:[#allocation3 + $0xfc] sm:$0xf]
        %v1186 = vld [vmem:[%s5] sm:$0x1]
        %v1188 = vlaneseq
        %v1189 = vshrl.u32 %v1188, 7
        %v1190 = vsub.s32 0, %v1189
        %v1191 = vrot.slane %v1186, %v1190
        %v1257 = vunpack.c.l.b16 %v1122
        %v1258 = vunpack.c.l.b16 %v1123
        %v1259 = vunpack.c.l.b16 %v1124
        %v1260 = vunpack.c.l.b16 %v1125
        %v1261 = vunpack.c.l.b16 %v1126
        %v1262 = vunpack.c.l.b16 %v1127
        %v1263 = vunpack.c.l.b16 %v1128
        %v1264 = vunpack.c.l.b16 %v1129
        %v1265 = vunpack.c.l.b16 %v1130
        %v1266 = vunpack.c.l.b16 %v1131
        %v1267 = vunpack.c.l.b16 %v1132
        %v1268 = vunpack.c.l.b16 %v1133
        %v1269 = vunpack.c.l.b16 %v1134
        %v1270 = vunpack.c.l.b16 %v1135
        %v1271 = vunpack.c.l.b16 %v1136
        %v1272 = vunpack.c.l.b16 %v1137
        %v1273 = vunpack.c.l.b16 %v1138
        %v1274 = vunpack.c.l.b16 %v1139
        %v1275 = vunpack.c.l.b16 %v1140
        %v1276 = vunpack.c.l.b16 %v1141
        %v1277 = vunpack.c.l.b16 %v1142
        %v1278 = vunpack.c.l.b16 %v1143
        %v1279 = vunpack.c.l.b16 %v1144
        %v1280 = vunpack.c.l.b16 %v1145
        %v1281 = vunpack.c.l.b16 %v1146
        %v1282 = vunpack.c.l.b16 %v1147
        %v1283 = vunpack.c.l.b16 %v1148
        %v1284 = vunpack.c.l.b16 %v1149
        %v1285 = vunpack.c.l.b16 %v1150
        %v1286 = vunpack.c.l.b16 %v1151
        %v1287 = vunpack.c.l.b16 %v1152
        %v1288 = vunpack.c.l.b16 %v1153
        %v1289 = vunpack.c.l.b16 %v1154
        %v1290 = vunpack.c.l.b16 %v1155
        %v1291 = vunpack.c.l.b16 %v1156
        %v1292 = vunpack.c.l.b16 %v1157
        %v1293 = vunpack.c.l.b16 %v1158
        %v1294 = vunpack.c.l.b16 %v1159
        %v1295 = vunpack.c.l.b16 %v1160
        %v1296 = vunpack.c.l.b16 %v1161
        %v1297 = vunpack.c.l.b16 %v1162
        %v1298 = vunpack.c.l.b16 %v1163
        %v1299 = vunpack.c.l.b16 %v1164
        %v1300 = vunpack.c.l.b16 %v1165
        %v1301 = vunpack.c.l.b16 %v1166
        %v1302 = vunpack.c.l.b16 %v1167
        %v1303 = vunpack.c.l.b16 %v1168
        %v1304 = vunpack.c.l.b16 %v1169
        %v1305 = vunpack.c.l.b16 %v1170
        %v1306 = vunpack.c.l.b16 %v1171
        %v1307 = vunpack.c.l.b16 %v1172
        %v1308 = vunpack.c.l.b16 %v1173
        %v1309 = vunpack.c.l.b16 %v1174
        %v1310 = vunpack.c.l.b16 %v1175
        %v1311 = vunpack.c.l.b16 %v1176
        %v1312 = vunpack.c.l.b16 %v1177
        %v1313 = vunpack.c.l.b16 %v1178
        %v1314 = vunpack.c.l.b16 %v1179
        %v1315 = vunpack.c.l.b16 %v1180
        %v1316 = vunpack.c.l.b16 %v1181
        %v1317 = vunpack.c.l.b16 %v1182
        %v1318 = vunpack.c.l.b16 %v1183
        %v1319 = vunpack.c.l.b16 %v1184
        %v1320 = vunpack.c.l.b16 %v1185
        %v1321 = vpack.c.b16 %v1258, %v1257
        %v1322 = vpack.c.b16 %v1260, %v1259
        %v1323 = vpack.c.b16 %v1262, %v1261
        %v1324 = vpack.c.b16 %v1264, %v1263
        %v1325 = vpack.c.b16 %v1266, %v1265
        %v1326 = vpack.c.b16 %v1268, %v1267
        %v1327 = vpack.c.b16 %v1270, %v1269
        %v1328 = vpack.c.b16 %v1272, %v1271
        %v1329 = vpack.c.b16 %v1274, %v1273
        %v1330 = vpack.c.b16 %v1276, %v1275
        %v1331 = vpack.c.b16 %v1278, %v1277
        %v1332 = vpack.c.b16 %v1280, %v1279
        %v1333 = vpack.c.b16 %v1282, %v1281
        %v1334 = vpack.c.b16 %v1284, %v1283
        %v1335 = vpack.c.b16 %v1286, %v1285
        %v1336 = vpack.c.b16 %v1288, %v1287
        %v1337 = vpack.c.b16 %v1290, %v1289
        %v1338 = vpack.c.b16 %v1292, %v1291
        %v1339 = vpack.c.b16 %v1294, %v1293
        %v1340 = vpack.c.b16 %v1296, %v1295
        %v1341 = vpack.c.b16 %v1298, %v1297
        %v1342 = vpack.c.b16 %v1300, %v1299
        %v1343 = vpack.c.b16 %v1302, %v1301
        %v1344 = vpack.c.b16 %v1304, %v1303
        %v1345 = vpack.c.b16 %v1306, %v1305
        %v1346 = vpack.c.b16 %v1308, %v1307
        %v1347 = vpack.c.b16 %v1310, %v1309
        %v1348 = vpack.c.b16 %v1312, %v1311
        %v1349 = vpack.c.b16 %v1314, %v1313
        %v1350 = vpack.c.b16 %v1316, %v1315
        %v1351 = vpack.c.b16 %v1318, %v1317
        %v1352 = vpack.c.b16 %v1320, %v1319
        %1385 = vmatprep.subr.bf16.mxu0 0
        %1386 = vmatpush1.bf16.msra.mxu0 %v1328
        %1387 = vmatprep.subr.bf16.mxu0 0
        %1388 = vmatpush1.bf16.msra.mxu0 %v1327
        %1389 = vmatprep.subr.bf16.mxu0 0
        %1390 = vmatpush1.bf16.msra.mxu0 %v1326
        %1391 = vmatprep.subr.bf16.mxu0 0
        %1392 = vmatpush1.bf16.msra.mxu0 %v1325
        %1393 = vmatprep.subr.bf16.mxu0 0
        %1394 = vmatpush1.bf16.msra.mxu0 %v1324
        %1395 = vmatprep.subr.bf16.mxu0 0
        %1396 = vmatpush1.bf16.msra.mxu0 %v1323
        %1397 = vmatprep.subr.bf16.mxu0 0
        %1398 = vmatpush1.bf16.msra.mxu0 %v1322
        %1399 = vmatprep.subr.bf16.mxu0 0
        %1400 = vmatpush1.bf16.msra.mxu0 %v1321
        %1401 = vmatprep.subr.bf16.mxu0 0
        %1402 = vmatpush2.bf16.msra.mxu0 %v1336
        %1403 = vmatprep.subr.bf16.mxu0 0
        %1404 = vmatpush2.bf16.msra.mxu0 %v1335
        %1405 = vmatprep.subr.bf16.mxu0 0
        %1406 = vmatpush2.bf16.msra.mxu0 %v1334
        %1407 = vmatprep.subr.bf16.mxu0 0
        %1408 = vmatpush2.bf16.msra.mxu0 %v1333
        %1409 = vmatprep.subr.bf16.mxu0 0
        %1410 = vmatpush2.bf16.msra.mxu0 %v1332
        %1411 = vmatprep.subr.bf16.mxu0 0
        %1412 = vmatpush2.bf16.msra.mxu0 %v1331
        %1413 = vmatprep.subr.bf16.mxu0 0
        %1414 = vmatpush2.bf16.msra.mxu0 %v1330
        %1415 = vmatprep.subr.bf16.mxu0 0
        %1416 = vmatpush2.bf16.msra.mxu0 %v1329
        %1417 = vmatprep.mubr.bf16.mxu0 %v841
        %1418 = vmatmul.mubr.bf16.gmra.mxu0 %v840
        %v1419 = vpop.f32.mrf.mxu0
        %v1420 = vadd.f32 %v1191, %v1419
        %v1421 = vpop.f32.mrf.mxu0
        %v1422 = vpop.f32.mrf.mxu0
        %v1423 = vadd.f32 %v1191, %v1422
        %v1424 = vpop.f32.mrf.mxu0
        %1425 = vdwg.mxu0
        %1426 = vmatprep.subr.bf16.mxu0 0
        %1427 = vmatpush1.bf16.msra.mxu0 %v1344
        %1428 = vmatprep.subr.bf16.mxu0 0
        %1429 = vmatpush1.bf16.msra.mxu0 %v1343
        %1430 = vmatprep.subr.bf16.mxu0 0
        %1431 = vmatpush1.bf16.msra.mxu0 %v1342
        %1432 = vmatprep.subr.bf16.mxu0 0
        %1433 = vmatpush1.bf16.msra.mxu0 %v1341
        %1434 = vmatprep.subr.bf16.mxu0 0
        %1435 = vmatpush1.bf16.msra.mxu0 %v1340
        %1436 = vmatprep.subr.bf16.mxu0 0
        %1437 = vmatpush1.bf16.msra.mxu0 %v1339
        %1438 = vmatprep.subr.bf16.mxu0 0
        %1439 = vmatpush1.bf16.msra.mxu0 %v1338
        %1440 = vmatprep.subr.bf16.mxu0 0
        %1441 = vmatpush1.bf16.msra.mxu0 %v1337
        %1442 = vmatprep.subr.bf16.mxu0 0
        %1443 = vmatpush2.bf16.msra.mxu0 %v1352
        %1444 = vmatprep.subr.bf16.mxu0 0
        %1445 = vmatpush2.bf16.msra.mxu0 %v1351
        %1446 = vmatprep.subr.bf16.mxu0 0
        %1447 = vmatpush2.bf16.msra.mxu0 %v1350
        %1448 = vmatprep.subr.bf16.mxu0 0
        %1449 = vmatpush2.bf16.msra.mxu0 %v1349
        %1450 = vmatprep.subr.bf16.mxu0 0
        %1451 = vmatpush2.bf16.msra.mxu0 %v1348
        %1452 = vmatprep.subr.bf16.mxu0 0
        %1453 = vmatpush2.bf16.msra.mxu0 %v1347
        %1454 = vmatprep.subr.bf16.mxu0 0
        %1455 = vmatpush2.bf16.msra.mxu0 %v1346
        %1456 = vmatprep.subr.bf16.mxu0 0
        %1457 = vmatpush2.bf16.msra.mxu0 %v1345
        %1458 = vmatprep.mubr.bf16.mxu0 %v843
        %1459 = vmatmul.mubr.bf16.gmra.mxu0 %v842
        %v1460 = vpop.f32.mrf.mxu0
        %v1461 = vadd.f32 %v1420, %v1460
        %v1462 = vpop.f32.mrf.mxu0
        %v1463 = vpop.f32.mrf.mxu0
        %v1464 = vadd.f32 %v1423, %v1463
        %v1465 = vpop.f32.mrf.mxu0
        %1466 = vdwg.mxu0
        %v1467 = vld [vmem:[#allocation5] sm:$0xff]
        %v1468 = vld [vmem:[#allocation5 + $0x8] sm:$0xff]
        %v1469 = vld [vmem:[#allocation5 + $0x10] sm:$0xff]
        %v1470 = vld [vmem:[#allocation5 + $0x18] sm:$0xff]
        %v1471 = vld [vmem:[#allocation5 + $0x20] sm:$0xff]
        %v1472 = vld [vmem:[#allocation5 + $0x28] sm:$0xff]
        %v1473 = vld [vmem:[#allocation5 + $0x30] sm:$0xff]
        %v1474 = vld [vmem:[#allocation5 + $0x38] sm:$0xff]
        %v1475 = vld [vmem:[#allocation5 + $0x40] sm:$0xff]
        %v1476 = vld [vmem:[#allocation5 + $0x48] sm:$0xff]
        %v1477 = vld [vmem:[#allocation5 + $0x50] sm:$0xff]
        %v1478 = vld [vmem:[#allocation5 + $0x58] sm:$0xff]
        %v1479 = vld [vmem:[#allocation5 + $0x60] sm:$0xff]
        %v1480 = vld [vmem:[#allocation5 + $0x68] sm:$0xff]
        %v1481 = vld [vmem:[#allocation5 + $0x70] sm:$0xff]
        %v1482 = vld [vmem:[#allocation5 + $0x78] sm:$0xff]
        %v1483 = vld [vmem:[#allocation5 + $0x80] sm:$0xff]
        %v1484 = vld [vmem:[#allocation5 + $0x88] sm:$0xff]
        %v1485 = vld [vmem:[#allocation5 + $0x90] sm:$0xff]
        %v1486 = vld [vmem:[#allocation5 + $0x98] sm:$0xff]
        %v1487 = vld [vmem:[#allocation5 + $0xa0] sm:$0xff]
        %v1488 = vld [vmem:[#allocation5 + $0xa8] sm:$0xff]
        %v1489 = vld [vmem:[#allocation5 + $0xb0] sm:$0xff]
        %v1490 = vld [vmem:[#allocation5 + $0xb8] sm:$0xff]
        %v1491 = vld [vmem:[#allocation5 + $0xc0] sm:$0xff]
        %v1492 = vld [vmem:[#allocation5 + $0xc8] sm:$0xff]
        %v1493 = vld [vmem:[#allocation5 + $0xd0] sm:$0xff]
        %v1494 = vld [vmem:[#allocation5 + $0xd8] sm:$0xff]
        %v1495 = vld [vmem:[#allocation5 + $0xe0] sm:$0xff]
        %v1496 = vld [vmem:[#allocation5 + $0xe8] sm:$0xff]
        %v1497 = vld [vmem:[#allocation5 + $0xf0] sm:$0xff]
        %v1498 = vld [vmem:[#allocation5 + $0xf8] sm:$0xff]
        %v1499 = vld [vmem:[#allocation5 + $0x100] sm:$0xff]
        %v1500 = vld [vmem:[#allocation5 + $0x108] sm:$0xff]
        %v1501 = vld [vmem:[#allocation5 + $0x110] sm:$0xff]
        %v1502 = vld [vmem:[#allocation5 + $0x118] sm:$0xff]
        %v1503 = vld [vmem:[#allocation5 + $0x120] sm:$0xff]
        %v1504 = vld [vmem:[#allocation5 + $0x128] sm:$0xff]
        %v1505 = vld [vmem:[#allocation5 + $0x130] sm:$0xff]
        %v1506 = vld [vmem:[#allocation5 + $0x138] sm:$0xff]
        %v1507 = vld [vmem:[#allocation5 + $0x140] sm:$0xff]
        %v1508 = vld [vmem:[#allocation5 + $0x148] sm:$0xff]
        %v1509 = vld [vmem:[#allocation5 + $0x150] sm:$0xff]
        %v1510 = vld [vmem:[#allocation5 + $0x158] sm:$0xff]
        %v1511 = vld [vmem:[#allocation5 + $0x160] sm:$0xff]
        %v1512 = vld [vmem:[#allocation5 + $0x168] sm:$0xff]
        %v1513 = vld [vmem:[#allocation5 + $0x170] sm:$0xff]
        %v1514 = vld [vmem:[#allocation5 + $0x178] sm:$0xff]
        %v1515 = vld [vmem:[#allocation5 + $0x180] sm:$0xff]
        %v1516 = vld [vmem:[#allocation5 + $0x188] sm:$0xff]
        %v1517 = vld [vmem:[#allocation5 + $0x190] sm:$0xff]
        %v1518 = vld [vmem:[#allocation5 + $0x198] sm:$0xff]
        %v1519 = vld [vmem:[#allocation5 + $0x1a0] sm:$0xff]
        %v1520 = vld [vmem:[#allocation5 + $0x1a8] sm:$0xff]
        %v1521 = vld [vmem:[#allocation5 + $0x1b0] sm:$0xff]
        %v1522 = vld [vmem:[#allocation5 + $0x1b8] sm:$0xff]
        %v1523 = vld [vmem:[#allocation5 + $0x1c0] sm:$0xff]
        %v1524 = vld [vmem:[#allocation5 + $0x1c8] sm:$0xff]
        %v1525 = vld [vmem:[#allocation5 + $0x1d0] sm:$0xff]
        %v1526 = vld [vmem:[#allocation5 + $0x1d8] sm:$0xff]
        %v1527 = vld [vmem:[#allocation5 + $0x1e0] sm:$0xff]
        %v1528 = vld [vmem:[#allocation5 + $0x1e8] sm:$0xff]
        %v1529 = vld [vmem:[#allocation5 + $0x1f0] sm:$0xff]
        %v1530 = vld [vmem:[#allocation5 + $0x1f8] sm:$0xff]
        %v1531 = vld [vmem:[#allocation5 + $0x200] sm:$0xff]
        %v1532 = vld [vmem:[#allocation5 + $0x208] sm:$0xff]
        %v1533 = vld [vmem:[#allocation5 + $0x210] sm:$0xff]
        %v1534 = vld [vmem:[#allocation5 + $0x218] sm:$0xff]
        %v1535 = vld [vmem:[#allocation5 + $0x220] sm:$0xff]
        %v1536 = vld [vmem:[#allocation5 + $0x228] sm:$0xff]
        %v1537 = vld [vmem:[#allocation5 + $0x230] sm:$0xff]
        %v1538 = vld [vmem:[#allocation5 + $0x238] sm:$0xff]
        %v1539 = vld [vmem:[#allocation5 + $0x240] sm:$0xff]
        %v1540 = vld [vmem:[#allocation5 + $0x248] sm:$0xff]
        %v1541 = vld [vmem:[#allocation5 + $0x250] sm:$0xff]
        %v1542 = vld [vmem:[#allocation5 + $0x258] sm:$0xff]
        %v1543 = vld [vmem:[#allocation5 + $0x260] sm:$0xff]
        %v1544 = vld [vmem:[#allocation5 + $0x268] sm:$0xff]
        %v1545 = vld [vmem:[#allocation5 + $0x270] sm:$0xff]
        %v1546 = vld [vmem:[#allocation5 + $0x278] sm:$0xff]
        %v1547 = vld [vmem:[#allocation5 + $0x280] sm:$0xff]
        %v1548 = vld [vmem:[#allocation5 + $0x288] sm:$0xff]
        %v1549 = vld [vmem:[#allocation5 + $0x290] sm:$0xff]
        %v1550 = vld [vmem:[#allocation5 + $0x298] sm:$0xff]
        %v1551 = vld [vmem:[#allocation5 + $0x2a0] sm:$0xff]
        %v1552 = vld [vmem:[#allocation5 + $0x2a8] sm:$0xff]
        %v1553 = vld [vmem:[#allocation5 + $0x2b0] sm:$0xff]
        %v1554 = vld [vmem:[#allocation5 + $0x2b8] sm:$0xff]
        %v1555 = vld [vmem:[#allocation5 + $0x2c0] sm:$0xff]
        %v1556 = vld [vmem:[#allocation5 + $0x2c8] sm:$0xff]
        %v1557 = vld [vmem:[#allocation5 + $0x2d0] sm:$0xff]
        %v1558 = vld [vmem:[#allocation5 + $0x2d8] sm:$0xff]
        %v1559 = vld [vmem:[#allocation5 + $0x2e0] sm:$0xff]
        %v1560 = vld [vmem:[#allocation5 + $0x2e8] sm:$0xff]
        %v1561 = vld [vmem:[#allocation5 + $0x2f0] sm:$0xff]
        %v1562 = vld [vmem:[#allocation5 + $0x2f8] sm:$0xff]
        %v1563 = vld [vmem:[#allocation5 + $0x300] sm:$0xff]
        %v1564 = vld [vmem:[#allocation5 + $0x308] sm:$0xff]
        %v1565 = vld [vmem:[#allocation5 + $0x310] sm:$0xff]
        %v1566 = vld [vmem:[#allocation5 + $0x318] sm:$0xff]
        %v1567 = vld [vmem:[#allocation5 + $0x320] sm:$0xff]
        %v1568 = vld [vmem:[#allocation5 + $0x328] sm:$0xff]
        %v1569 = vld [vmem:[#allocation5 + $0x330] sm:$0xff]
        %v1570 = vld [vmem:[#allocation5 + $0x338] sm:$0xff]
        %v1571 = vld [vmem:[#allocation5 + $0x340] sm:$0xff]
        %v1572 = vld [vmem:[#allocation5 + $0x348] sm:$0xff]
        %v1573 = vld [vmem:[#allocation5 + $0x350] sm:$0xff]
        %v1574 = vld [vmem:[#allocation5 + $0x358] sm:$0xff]
        %v1575 = vld [vmem:[#allocation5 + $0x360] sm:$0xff]
        %v1576 = vld [vmem:[#allocation5 + $0x368] sm:$0xff]
        %v1577 = vld [vmem:[#allocation5 + $0x370] sm:$0xff]
        %v1578 = vld [vmem:[#allocation5 + $0x378] sm:$0xff]
        %v1579 = vld [vmem:[#allocation5 + $0x380] sm:$0xff]
        %v1580 = vld [vmem:[#allocation5 + $0x388] sm:$0xff]
        %v1581 = vld [vmem:[#allocation5 + $0x390] sm:$0xff]
        %v1582 = vld [vmem:[#allocation5 + $0x398] sm:$0xff]
        %v1583 = vld [vmem:[#allocation5 + $0x3a0] sm:$0xff]
        %v1584 = vld [vmem:[#allocation5 + $0x3a8] sm:$0xff]
        %v1585 = vld [vmem:[#allocation5 + $0x3b0] sm:$0xff]
        %v1586 = vld [vmem:[#allocation5 + $0x3b8] sm:$0xff]
        %v1587 = vld [vmem:[#allocation5 + $0x3c0] sm:$0xff]
        %v1588 = vld [vmem:[#allocation5 + $0x3c8] sm:$0xff]
        %v1589 = vld [vmem:[#allocation5 + $0x3d0] sm:$0xff]
        %v1590 = vld [vmem:[#allocation5 + $0x3d8] sm:$0xff]
        %v1591 = vld [vmem:[#allocation5 + $0x3e0] sm:$0xff]
        %v1592 = vld [vmem:[#allocation5 + $0x3e8] sm:$0xff]
        %v1593 = vld [vmem:[#allocation5 + $0x3f0] sm:$0xff]
        %v1594 = vld [vmem:[#allocation5 + $0x3f8] sm:$0xff]
        %v1595 = vld [vmem:[%s7] sm:$0xf]
        %v1597 = vlaneseq
        %v1598 = vshrl.u32 %v1597, 7
        %v1599 = vsub.s32 0, %v1598
        %v1600 = vrot.slane %v1595, %v1599
        %v1601 = vlaneseq
        %v1602 = vshrl.u32 %v1601, 7
        %v1603 = vsub.s32 1, %v1602
        %v1604 = vrot.slane %v1595, %v1603
        %v1605 = vlaneseq
        %v1606 = vshrl.u32 %v1605, 7
        %v1607 = vsub.s32 2, %v1606
        %v1608 = vrot.slane %v1595, %v1607
        %v1609 = vlaneseq
        %v1610 = vshrl.u32 %v1609, 7
        %v1611 = vsub.s32 3, %v1610
        %v1612 = vrot.slane %v1595, %v1611
        %v1745 = vunpack.c.l.b16 %v1467
        %v1746 = vunpack.c.h.b16 %v1467
        %v1747 = vunpack.c.l.b16 %v1468
        %v1748 = vunpack.c.h.b16 %v1468
        %v1749 = vunpack.c.l.b16 %v1469
        %v1750 = vunpack.c.h.b16 %v1469
        %v1751 = vunpack.c.l.b16 %v1470
        %v1752 = vunpack.c.h.b16 %v1470
        %v1753 = vunpack.c.l.b16 %v1471
        %v1754 = vunpack.c.h.b16 %v1471
        %v1755 = vunpack.c.l.b16 %v1472
        %v1756 = vunpack.c.h.b16 %v1472
        %v1757 = vunpack.c.l.b16 %v1473
        %v1758 = vunpack.c.h.b16 %v1473
        %v1759 = vunpack.c.l.b16 %v1474
        %v1760 = vunpack.c.h.b16 %v1474
        %v1761 = vunpack.c.l.b16 %v1475
        %v1762 = vunpack.c.h.b16 %v1475
        %v1763 = vunpack.c.l.b16 %v1476
        %v1764 = vunpack.c.h.b16 %v1476
        %v1765 = vunpack.c.l.b16 %v1477
        %v1766 = vunpack.c.h.b16 %v1477
        %v1767 = vunpack.c.l.b16 %v1478
        %v1768 = vunpack.c.h.b16 %v1478
        %v1769 = vunpack.c.l.b16 %v1479
        %v1770 = vunpack.c.h.b16 %v1479
        %v1771 = vunpack.c.l.b16 %v1480
        %v1772 = vunpack.c.h.b16 %v1480
        %v1773 = vunpack.c.l.b16 %v1481
        %v1774 = vunpack.c.h.b16 %v1481
        %v1775 = vunpack.c.l.b16 %v1482
        %v1776 = vunpack.c.h.b16 %v1482
        %v1777 = vunpack.c.l.b16 %v1483
        %v1778 = vunpack.c.h.b16 %v1483
        %v1779 = vunpack.c.l.b16 %v1484
        %v1780 = vunpack.c.h.b16 %v1484
        %v1781 = vunpack.c.l.b16 %v1485
        %v1782 = vunpack.c.h.b16 %v1485
        %v1783 = vunpack.c.l.b16 %v1486
        %v1784 = vunpack.c.h.b16 %v1486
        %v1785 = vunpack.c.l.b16 %v1487
        %v1786 = vunpack.c.h.b16 %v1487
        %v1787 = vunpack.c.l.b16 %v1488
        %v1788 = vunpack.c.h.b16 %v1488
        %v1789 = vunpack.c.l.b16 %v1489
        %v1790 = vunpack.c.h.b16 %v1489
        %v1791 = vunpack.c.l.b16 %v1490
        %v1792 = vunpack.c.h.b16 %v1490
        %v1793 = vunpack.c.l.b16 %v1491
        %v1794 = vunpack.c.h.b16 %v1491
        %v1795 = vunpack.c.l.b16 %v1492
        %v1796 = vunpack.c.h.b16 %v1492
        %v1797 = vunpack.c.l.b16 %v1493
        %v1798 = vunpack.c.h.b16 %v1493
        %v1799 = vunpack.c.l.b16 %v1494
        %v1800 = vunpack.c.h.b16 %v1494
        %v1801 = vunpack.c.l.b16 %v1495
        %v1802 = vunpack.c.h.b16 %v1495
        %v1803 = vunpack.c.l.b16 %v1496
        %v1804 = vunpack.c.h.b16 %v1496
        %v1805 = vunpack.c.l.b16 %v1497
        %v1806 = vunpack.c.h.b16 %v1497
        %v1807 = vunpack.c.l.b16 %v1498
        %v1808 = vunpack.c.h.b16 %v1498
        %v1809 = vunpack.c.l.b16 %v1499
        %v1810 = vunpack.c.h.b16 %v1499
        %v1811 = vunpack.c.l.b16 %v1500
        %v1812 = vunpack.c.h.b16 %v1500
        %v1813 = vunpack.c.l.b16 %v1501
        %v1814 = vunpack.c.h.b16 %v1501
        %v1815 = vunpack.c.l.b16 %v1502
        %v1816 = vunpack.c.h.b16 %v1502
        %v1817 = vunpack.c.l.b16 %v1503
        %v1818 = vunpack.c.h.b16 %v1503
        %v1819 = vunpack.c.l.b16 %v1504
        %v1820 = vunpack.c.h.b16 %v1504
        %v1821 = vunpack.c.l.b16 %v1505
        %v1822 = vunpack.c.h.b16 %v1505
        %v1823 = vunpack.c.l.b16 %v1506
        %v1824 = vunpack.c.h.b16 %v1506
        %v1825 = vunpack.c.l.b16 %v1507
        %v1826 = vunpack.c.h.b16 %v1507
        %v1827 = vunpack.c.l.b16 %v1508
        %v1828 = vunpack.c.h.b16 %v1508
        %v1829 = vunpack.c.l.b16 %v1509
        %v1830 = vunpack.c.h.b16 %v1509
        %v1831 = vunpack.c.l.b16 %v1510
        %v1832 = vunpack.c.h.b16 %v1510
        %v1833 = vunpack.c.l.b16 %v1511
        %v1834 = vunpack.c.h.b16 %v1511
        %v1835 = vunpack.c.l.b16 %v1512
        %v1836 = vunpack.c.h.b16 %v1512
        %v1837 = vunpack.c.l.b16 %v1513
        %v1838 = vunpack.c.h.b16 %v1513
        %v1839 = vunpack.c.l.b16 %v1514
        %v1840 = vunpack.c.h.b16 %v1514
        %v1841 = vunpack.c.l.b16 %v1515
        %v1842 = vunpack.c.h.b16 %v1515
        %v1843 = vunpack.c.l.b16 %v1516
        %v1844 = vunpack.c.h.b16 %v1516
        %v1845 = vunpack.c.l.b16 %v1517
        %v1846 = vunpack.c.h.b16 %v1517
        %v1847 = vunpack.c.l.b16 %v1518
        %v1848 = vunpack.c.h.b16 %v1518
        %v1849 = vunpack.c.l.b16 %v1519
        %v1850 = vunpack.c.h.b16 %v1519
        %v1851 = vunpack.c.l.b16 %v1520
        %v1852 = vunpack.c.h.b16 %v1520
        %v1853 = vunpack.c.l.b16 %v1521
        %v1854 = vunpack.c.h.b16 %v1521
        %v1855 = vunpack.c.l.b16 %v1522
        %v1856 = vunpack.c.h.b16 %v1522
        %v1857 = vunpack.c.l.b16 %v1523
        %v1858 = vunpack.c.h.b16 %v1523
        %v1859 = vunpack.c.l.b16 %v1524
        %v1860 = vunpack.c.h.b16 %v1524
        %v1861 = vunpack.c.l.b16 %v1525
        %v1862 = vunpack.c.h.b16 %v1525
        %v1863 = vunpack.c.l.b16 %v1526
        %v1864 = vunpack.c.h.b16 %v1526
        %v1865 = vunpack.c.l.b16 %v1527
        %v1866 = vunpack.c.h.b16 %v1527
        %v1867 = vunpack.c.l.b16 %v1528
        %v1868 = vunpack.c.h.b16 %v1528
        %v1869 = vunpack.c.l.b16 %v1529
        %v1870 = vunpack.c.h.b16 %v1529
        %v1871 = vunpack.c.l.b16 %v1530
        %v1872 = vunpack.c.h.b16 %v1530
        %v1873 = vunpack.c.l.b16 %v1531
        %v1874 = vunpack.c.h.b16 %v1531
        %v1875 = vunpack.c.l.b16 %v1532
        %v1876 = vunpack.c.h.b16 %v1532
        %v1877 = vunpack.c.l.b16 %v1533
        %v1878 = vunpack.c.h.b16 %v1533
        %v1879 = vunpack.c.l.b16 %v1534
        %v1880 = vunpack.c.h.b16 %v1534
        %v1881 = vunpack.c.l.b16 %v1535
        %v1882 = vunpack.c.h.b16 %v1535
        %v1883 = vunpack.c.l.b16 %v1536
        %v1884 = vunpack.c.h.b16 %v1536
        %v1885 = vunpack.c.l.b16 %v1537
        %v1886 = vunpack.c.h.b16 %v1537
        %v1887 = vunpack.c.l.b16 %v1538
        %v1888 = vunpack.c.h.b16 %v1538
        %v1889 = vunpack.c.l.b16 %v1539
        %v1890 = vunpack.c.h.b16 %v1539
        %v1891 = vunpack.c.l.b16 %v1540
        %v1892 = vunpack.c.h.b16 %v1540
        %v1893 = vunpack.c.l.b16 %v1541
        %v1894 = vunpack.c.h.b16 %v1541
        %v1895 = vunpack.c.l.b16 %v1542
        %v1896 = vunpack.c.h.b16 %v1542
        %v1897 = vunpack.c.l.b16 %v1543
        %v1898 = vunpack.c.h.b16 %v1543
        %v1899 = vunpack.c.l.b16 %v1544
        %v1900 = vunpack.c.h.b16 %v1544
        %v1901 = vunpack.c.l.b16 %v1545
        %v1902 = vunpack.c.h.b16 %v1545
        %v1903 = vunpack.c.l.b16 %v1546
        %v1904 = vunpack.c.h.b16 %v1546
        %v1905 = vunpack.c.l.b16 %v1547
        %v1906 = vunpack.c.h.b16 %v1547
        %v1907 = vunpack.c.l.b16 %v1548
        %v1908 = vunpack.c.h.b16 %v1548
        %v1909 = vunpack.c.l.b16 %v1549
        %v1910 = vunpack.c.h.b16 %v1549
        %v1911 = vunpack.c.l.b16 %v1550
        %v1912 = vunpack.c.h.b16 %v1550
        %v1913 = vunpack.c.l.b16 %v1551
        %v1914 = vunpack.c.h.b16 %v1551
        %v1915 = vunpack.c.l.b16 %v1552
        %v1916 = vunpack.c.h.b16 %v1552
        %v1917 = vunpack.c.l.b16 %v1553
        %v1918 = vunpack.c.h.b16 %v1553
        %v1919 = vunpack.c.l.b16 %v1554
        %v1920 = vunpack.c.h.b16 %v1554
        %v1921 = vunpack.c.l.b16 %v1555
        %v1922 = vunpack.c.h.b16 %v1555
        %v1923 = vunpack.c.l.b16 %v1556
        %v1924 = vunpack.c.h.b16 %v1556
        %v1925 = vunpack.c.l.b16 %v1557
        %v1926 = vunpack.c.h.b16 %v1557
        %v1927 = vunpack.c.l.b16 %v1558
        %v1928 = vunpack.c.h.b16 %v1558
        %v1929 = vunpack.c.l.b16 %v1559
        %v1930 = vunpack.c.h.b16 %v1559
        %v1931 = vunpack.c.l.b16 %v1560
        %v1932 = vunpack.c.h.b16 %v1560
        %v1933 = vunpack.c.l.b16 %v1561
        %v1934 = vunpack.c.h.b16 %v1561
        %v1935 = vunpack.c.l.b16 %v1562
        %v1936 = vunpack.c.h.b16 %v1562
        %v1937 = vunpack.c.l.b16 %v1563
        %v1938 = vunpack.c.h.b16 %v1563
        %v1939 = vunpack.c.l.b16 %v1564
        %v1940 = vunpack.c.h.b16 %v1564
        %v1941 = vunpack.c.l.b16 %v1565
        %v1942 = vunpack.c.h.b16 %v1565
        %v1943 = vunpack.c.l.b16 %v1566
        %v1944 = vunpack.c.h.b16 %v1566
        %v1945 = vunpack.c.l.b16 %v1567
        %v1946 = vunpack.c.h.b16 %v1567
        %v1947 = vunpack.c.l.b16 %v1568
        %v1948 = vunpack.c.h.b16 %v1568
        %v1949 = vunpack.c.l.b16 %v1569
        %v1950 = vunpack.c.h.b16 %v1569
        %v1951 = vunpack.c.l.b16 %v1570
        %v1952 = vunpack.c.h.b16 %v1570
        %v1953 = vunpack.c.l.b16 %v1571
        %v1954 = vunpack.c.h.b16 %v1571
        %v1955 = vunpack.c.l.b16 %v1572
        %v1956 = vunpack.c.h.b16 %v1572
        %v1957 = vunpack.c.l.b16 %v1573
        %v1958 = vunpack.c.h.b16 %v1573
        %v1959 = vunpack.c.l.b16 %v1574
        %v1960 = vunpack.c.h.b16 %v1574
        %v1961 = vunpack.c.l.b16 %v1575
        %v1962 = vunpack.c.h.b16 %v1575
        %v1963 = vunpack.c.l.b16 %v1576
        %v1964 = vunpack.c.h.b16 %v1576
        %v1965 = vunpack.c.l.b16 %v1577
        %v1966 = vunpack.c.h.b16 %v1577
        %v1967 = vunpack.c.l.b16 %v1578
        %v1968 = vunpack.c.h.b16 %v1578
        %v1969 = vunpack.c.l.b16 %v1579
        %v1970 = vunpack.c.h.b16 %v1579
        %v1971 = vunpack.c.l.b16 %v1580
        %v1972 = vunpack.c.h.b16 %v1580
        %v1973 = vunpack.c.l.b16 %v1581
        %v1974 = vunpack.c.h.b16 %v1581
        %v1975 = vunpack.c.l.b16 %v1582
        %v1976 = vunpack.c.h.b16 %v1582
        %v1977 = vunpack.c.l.b16 %v1583
        %v1978 = vunpack.c.h.b16 %v1583
        %v1979 = vunpack.c.l.b16 %v1584
        %v1980 = vunpack.c.h.b16 %v1584
        %v1981 = vunpack.c.l.b16 %v1585
        %v1982 = vunpack.c.h.b16 %v1585
        %v1983 = vunpack.c.l.b16 %v1586
        %v1984 = vunpack.c.h.b16 %v1586
        %v1985 = vunpack.c.l.b16 %v1587
        %v1986 = vunpack.c.h.b16 %v1587
        %v1987 = vunpack.c.l.b16 %v1588
        %v1988 = vunpack.c.h.b16 %v1588
        %v1989 = vunpack.c.l.b16 %v1589
        %v1990 = vunpack.c.h.b16 %v1589
        %v1991 = vunpack.c.l.b16 %v1590
        %v1992 = vunpack.c.h.b16 %v1590
        %v1993 = vunpack.c.l.b16 %v1591
        %v1994 = vunpack.c.h.b16 %v1591
        %v1995 = vunpack.c.l.b16 %v1592
        %v1996 = vunpack.c.h.b16 %v1592
        %v1997 = vunpack.c.l.b16 %v1593
        %v1998 = vunpack.c.h.b16 %v1593
        %v1999 = vunpack.c.l.b16 %v1594
        %v2000 = vunpack.c.h.b16 %v1594
        %v2001 = vpack.c.b16 %v1749, %v1745
        %v2002 = vpack.c.b16 %v1750, %v1746
        %v2003 = vpack.c.b16 %v1751, %v1747
        %v2004 = vpack.c.b16 %v1752, %v1748
        %v2005 = vpack.c.b16 %v1757, %v1753
        %v2006 = vpack.c.b16 %v1758, %v1754
        %v2007 = vpack.c.b16 %v1759, %v1755
        %v2008 = vpack.c.b16 %v1760, %v1756
        %v2009 = vpack.c.b16 %v1765, %v1761
        %v2010 = vpack.c.b16 %v1766, %v1762
        %v2011 = vpack.c.b16 %v1767, %v1763
        %v2012 = vpack.c.b16 %v1768, %v1764
        %v2013 = vpack.c.b16 %v1773, %v1769
        %v2014 = vpack.c.b16 %v1774, %v1770
        %v2015 = vpack.c.b16 %v1775, %v1771
        %v2016 = vpack.c.b16 %v1776, %v1772
        %v2017 = vpack.c.b16 %v1781, %v1777
        %v2018 = vpack.c.b16 %v1782, %v1778
        %v2019 = vpack.c.b16 %v1783, %v1779
        %v2020 = vpack.c.b16 %v1784, %v1780
        %v2021 = vpack.c.b16 %v1789, %v1785
        %v2022 = vpack.c.b16 %v1790, %v1786
        %v2023 = vpack.c.b16 %v1791, %v1787
        %v2024 = vpack.c.b16 %v1792, %v1788
        %v2025 = vpack.c.b16 %v1797, %v1793
        %v2026 = vpack.c.b16 %v1798, %v1794
        %v2027 = vpack.c.b16 %v1799, %v1795
        %v2028 = vpack.c.b16 %v1800, %v1796
        %v2029 = vpack.c.b16 %v1805, %v1801
        %v2030 = vpack.c.b16 %v1806, %v1802
        %v2031 = vpack.c.b16 %v1807, %v1803
        %v2032 = vpack.c.b16 %v1808, %v1804
        %v2033 = vpack.c.b16 %v1813, %v1809
        %v2034 = vpack.c.b16 %v1814, %v1810
        %v2035 = vpack.c.b16 %v1815, %v1811
        %v2036 = vpack.c.b16 %v1816, %v1812
        %v2037 = vpack.c.b16 %v1821, %v1817
        %v2038 = vpack.c.b16 %v1822, %v1818
        %v2039 = vpack.c.b16 %v1823, %v1819
        %v2040 = vpack.c.b16 %v1824, %v1820
        %v2041 = vpack.c.b16 %v1829, %v1825
        %v2042 = vpack.c.b16 %v1830, %v1826
        %v2043 = vpack.c.b16 %v1831, %v1827
        %v2044 = vpack.c.b16 %v1832, %v1828
        %v2045 = vpack.c.b16 %v1837, %v1833
        %v2046 = vpack.c.b16 %v1838, %v1834
        %v2047 = vpack.c.b16 %v1839, %v1835
        %v2048 = vpack.c.b16 %v1840, %v1836
        %v2049 = vpack.c.b16 %v1845, %v1841
        %v2050 = vpack.c.b16 %v1846, %v1842
        %v2051 = vpack.c.b16 %v1847, %v1843
        %v2052 = vpack.c.b16 %v1848, %v1844
        %v2053 = vpack.c.b16 %v1853, %v1849
        %v2054 = vpack.c.b16 %v1854, %v1850
        %v2055 = vpack.c.b16 %v1855, %v1851
        %v2056 = vpack.c.b16 %v1856, %v1852
        %v2057 = vpack.c.b16 %v1861, %v1857
        %v2058 = vpack.c.b16 %v1862, %v1858
        %v2059 = vpack.c.b16 %v1863, %v1859
        %v2060 = vpack.c.b16 %v1864, %v1860
        %v2061 = vpack.c.b16 %v1869, %v1865
        %v2062 = vpack.c.b16 %v1870, %v1866
        %v2063 = vpack.c.b16 %v1871, %v1867
        %v2064 = vpack.c.b16 %v1872, %v1868
        %v2065 = vpack.c.b16 %v1877, %v1873
        %v2066 = vpack.c.b16 %v1878, %v1874
        %v2067 = vpack.c.b16 %v1879, %v1875
        %v2068 = vpack.c.b16 %v1880, %v1876
        %v2069 = vpack.c.b16 %v1885, %v1881
        %v2070 = vpack.c.b16 %v1886, %v1882
        %v2071 = vpack.c.b16 %v1887, %v1883
        %v2072 = vpack.c.b16 %v1888, %v1884
        %v2073 = vpack.c.b16 %v1893, %v1889
        %v2074 = vpack.c.b16 %v1894, %v1890
        %v2075 = vpack.c.b16 %v1895, %v1891
        %v2076 = vpack.c.b16 %v1896, %v1892
        %v2077 = vpack.c.b16 %v1901, %v1897
        %v2078 = vpack.c.b16 %v1902, %v1898
        %v2079 = vpack.c.b16 %v1903, %v1899
        %v2080 = vpack.c.b16 %v1904, %v1900
        %v2081 = vpack.c.b16 %v1909, %v1905
        %v2082 = vpack.c.b16 %v1910, %v1906
        %v2083 = vpack.c.b16 %v1911, %v1907
        %v2084 = vpack.c.b16 %v1912, %v1908
        %v2085 = vpack.c.b16 %v1917, %v1913
        %v2086 = vpack.c.b16 %v1918, %v1914
        %v2087 = vpack.c.b16 %v1919, %v1915
        %v2088 = vpack.c.b16 %v1920, %v1916
        %v2089 = vpack.c.b16 %v1925, %v1921
        %v2090 = vpack.c.b16 %v1926, %v1922
        %v2091 = vpack.c.b16 %v1927, %v1923
        %v2092 = vpack.c.b16 %v1928, %v1924
        %v2093 = vpack.c.b16 %v1933, %v1929
        %v2094 = vpack.c.b16 %v1934, %v1930
        %v2095 = vpack.c.b16 %v1935, %v1931
        %v2096 = vpack.c.b16 %v1936, %v1932
        %v2097 = vpack.c.b16 %v1941, %v1937
        %v2098 = vpack.c.b16 %v1942, %v1938
        %v2099 = vpack.c.b16 %v1943, %v1939
        %v2100 = vpack.c.b16 %v1944, %v1940
        %v2101 = vpack.c.b16 %v1949, %v1945
        %v2102 = vpack.c.b16 %v1950, %v1946
        %v2103 = vpack.c.b16 %v1951, %v1947
        %v2104 = vpack.c.b16 %v1952, %v1948
        %v2105 = vpack.c.b16 %v1957, %v1953
        %v2106 = vpack.c.b16 %v1958, %v1954
        %v2107 = vpack.c.b16 %v1959, %v1955
        %v2108 = vpack.c.b16 %v1960, %v1956
        %v2109 = vpack.c.b16 %v1965, %v1961
        %v2110 = vpack.c.b16 %v1966, %v1962
        %v2111 = vpack.c.b16 %v1967, %v1963
        %v2112 = vpack.c.b16 %v1968, %v1964
        %v2113 = vpack.c.b16 %v1973, %v1969
        %v2114 = vpack.c.b16 %v1974, %v1970
        %v2115 = vpack.c.b16 %v1975, %v1971
        %v2116 = vpack.c.b16 %v1976, %v1972
        %v2117 = vpack.c.b16 %v1981, %v1977
        %v2118 = vpack.c.b16 %v1982, %v1978
        %v2119 = vpack.c.b16 %v1983, %v1979
        %v2120 = vpack.c.b16 %v1984, %v1980
        %v2121 = vpack.c.b16 %v1989, %v1985
        %v2122 = vpack.c.b16 %v1990, %v1986
        %v2123 = vpack.c.b16 %v1991, %v1987
        %v2124 = vpack.c.b16 %v1992, %v1988
        %v2125 = vpack.c.b16 %v1997, %v1993
        %v2126 = vpack.c.b16 %v1998, %v1994
        %v2127 = vpack.c.b16 %v1999, %v1995
        %v2128 = vpack.c.b16 %v2000, %v1996
        %2257 = vmatprep.subr.bf16.mxu0 %v2030
        %2258 = vmatpush1.bf16.msra.mxu0 %v2029
        %2259 = vmatprep.subr.bf16.mxu0 %v2026
        %2260 = vmatpush1.bf16.msra.mxu0 %v2025
        %2261 = vmatprep.subr.bf16.mxu0 %v2022
        %2262 = vmatpush1.bf16.msra.mxu0 %v2021
        %2263 = vmatprep.subr.bf16.mxu0 %v2018
        %2264 = vmatpush1.bf16.msra.mxu0 %v2017
        %2265 = vmatprep.subr.bf16.mxu0 %v2014
        %2266 = vmatpush1.bf16.msra.mxu0 %v2013
        %2267 = vmatprep.subr.bf16.mxu0 %v2010
        %2268 = vmatpush1.bf16.msra.mxu0 %v2009
        %2269 = vmatprep.subr.bf16.mxu0 %v2006
        %2270 = vmatpush1.bf16.msra.mxu0 %v2005
        %2271 = vmatprep.subr.bf16.mxu0 %v2002
        %2272 = vmatpush1.bf16.msra.mxu0 %v2001
        %2273 = vmatprep.subr.bf16.mxu0 %v2062
        %2274 = vmatpush2.bf16.msra.mxu0 %v2061
        %2275 = vmatprep.subr.bf16.mxu0 %v2058
        %2276 = vmatpush2.bf16.msra.mxu0 %v2057
        %2277 = vmatprep.subr.bf16.mxu0 %v2054
        %2278 = vmatpush2.bf16.msra.mxu0 %v2053
        %2279 = vmatprep.subr.bf16.mxu0 %v2050
        %2280 = vmatpush2.bf16.msra.mxu0 %v2049
        %2281 = vmatprep.subr.bf16.mxu0 %v2046
        %2282 = vmatpush2.bf16.msra.mxu0 %v2045
        %2283 = vmatprep.subr.bf16.mxu0 %v2042
        %2284 = vmatpush2.bf16.msra.mxu0 %v2041
        %2285 = vmatprep.subr.bf16.mxu0 %v2038
        %2286 = vmatpush2.bf16.msra.mxu0 %v2037
        %2287 = vmatprep.subr.bf16.mxu0 %v2034
        %2288 = vmatpush2.bf16.msra.mxu0 %v2033
        %2289 = vmatprep.mubr.bf16.mxu0 %v841
        %2290 = vmatmul.mubr.bf16.gmra.mxu0 %v840
        %v2291 = vpop.f32.mrf.mxu0
        %v2292 = vadd.f32 %v1600, %v2291
        %v2293 = vpop.f32.mrf.mxu0
        %v2294 = vadd.f32 %v1604, %v2293
        %v2295 = vpop.f32.mrf.mxu0
        %v2296 = vadd.f32 %v1600, %v2295
        %v2297 = vpop.f32.mrf.mxu0
        %v2298 = vadd.f32 %v1604, %v2297
        %2299 = vdwg.mxu0
        %2300 = vmatprep.subr.bf16.mxu0 %v2094
        %2301 = vmatpush1.bf16.msra.mxu0 %v2093
        %2302 = vmatprep.subr.bf16.mxu0 %v2090
        %2303 = vmatpush1.bf16.msra.mxu0 %v2089
        %2304 = vmatprep.subr.bf16.mxu0 %v2086
        %2305 = vmatpush1.bf16.msra.mxu0 %v2085
        %2306 = vmatprep.subr.bf16.mxu0 %v2082
        %2307 = vmatpush1.bf16.msra.mxu0 %v2081
        %2308 = vmatprep.subr.bf16.mxu0 %v2078
        %2309 = vmatpush1.bf16.msra.mxu0 %v2077
        %2310 = vmatprep.subr.bf16.mxu0 %v2074
        %2311 = vmatpush1.bf16.msra.mxu0 %v2073
        %2312 = vmatprep.subr.bf16.mxu0 %v2070
        %2313 = vmatpush1.bf16.msra.mxu0 %v2069
        %2314 = vmatprep.subr.bf16.mxu0 %v2066
        %2315 = vmatpush1.bf16.msra.mxu0 %v2065
        %2316 = vmatprep.subr.bf16.mxu0 %v2126
        %2317 = vmatpush2.bf16.msra.mxu0 %v2125
        %2318 = vmatprep.subr.bf16.mxu0 %v2122
        %2319 = vmatpush2.bf16.msra.mxu0 %v2121
        %2320 = vmatprep.subr.bf16.mxu0 %v2118
        %2321 = vmatpush2.bf16.msra.mxu0 %v2117
        %2322 = vmatprep.subr.bf16.mxu0 %v2114
        %2323 = vmatpush2.bf16.msra.mxu0 %v2113
        %2324 = vmatprep.subr.bf16.mxu0 %v2110
        %2325 = vmatpush2.bf16.msra.mxu0 %v2109
        %2326 = vmatprep.subr.bf16.mxu0 %v2106
        %2327 = vmatpush2.bf16.msra.mxu0 %v2105
        %2328 = vmatprep.subr.bf16.mxu0 %v2102
        %2329 = vmatpush2.bf16.msra.mxu0 %v2101
        %2330 = vmatprep.subr.bf16.mxu0 %v2098
        %2331 = vmatpush2.bf16.msra.mxu0 %v2097
        %2332 = vmatprep.mubr.bf16.mxu0 %v843
        %2333 = vmatmul.mubr.bf16.gmra.mxu0 %v842
        %v2334 = vpop.f32.mrf.mxu0
        %v2335 = vadd.f32 %v2292, %v2334
        %v2336 = vpop.f32.mrf.mxu0
        %v2337 = vadd.f32 %v2294, %v2336
        %v2338 = vpop.f32.mrf.mxu0
        %v2339 = vadd.f32 %v2296, %v2338
        %v2340 = vpop.f32.mrf.mxu0
        %v2341 = vadd.f32 %v2298, %v2340
        %2342 = vdwg.mxu0
        %2343 = vmatprep.subr.bf16.mxu0 %v2032
        %2344 = vmatpush1.bf16.msra.mxu0 %v2031
        %2345 = vmatprep.subr.bf16.mxu0 %v2028
        %2346 = vmatpush1.bf16.msra.mxu0 %v2027
        %2347 = vmatprep.subr.bf16.mxu0 %v2024
        %2348 = vmatpush1.bf16.msra.mxu0 %v2023
        %2349 = vmatprep.subr.bf16.mxu0 %v2020
        %2350 = vmatpush1.bf16.msra.mxu0 %v2019
        %2351 = vmatprep.subr.bf16.mxu0 %v2016
        %2352 = vmatpush1.bf16.msra.mxu0 %v2015
        %2353 = vmatprep.subr.bf16.mxu0 %v2012
        %2354 = vmatpush1.bf16.msra.mxu0 %v2011
        %2355 = vmatprep.subr.bf16.mxu0 %v2008
        %2356 = vmatpush1.bf16.msra.mxu0 %v2007
        %2357 = vmatprep.subr.bf16.mxu0 %v2004
        %2358 = vmatpush1.bf16.msra.mxu0 %v2003
        %2359 = vmatprep.subr.bf16.mxu0 %v2064
        %2360 = vmatpush2.bf16.msra.mxu0 %v2063
        %2361 = vmatprep.subr.bf16.mxu0 %v2060
        %2362 = vmatpush2.bf16.msra.mxu0 %v2059
        %2363 = vmatprep.subr.bf16.mxu0 %v2056
        %2364 = vmatpush2.bf16.msra.mxu0 %v2055
        %2365 = vmatprep.subr.bf16.mxu0 %v2052
        %2366 = vmatpush2.bf16.msra.mxu0 %v2051
        %2367 = vmatprep.subr.bf16.mxu0 %v2048
        %2368 = vmatpush2.bf16.msra.mxu0 %v2047
        %2369 = vmatprep.subr.bf16.mxu0 %v2044
        %2370 = vmatpush2.bf16.msra.mxu0 %v2043
        %2371 = vmatprep.subr.bf16.mxu0 %v2040
        %2372 = vmatpush2.bf16.msra.mxu0 %v2039
        %2373 = vmatprep.subr.bf16.mxu0 %v2036
        %2374 = vmatpush2.bf16.msra.mxu0 %v2035
        %2375 = vmatprep.mubr.bf16.mxu0 %v841
        %2376 = vmatmul.mubr.bf16.gmra.mxu0 %v840
        %v2377 = vpop.f32.mrf.mxu0
        %v2378 = vadd.f32 %v1608, %v2377
        %v2379 = vpop.f32.mrf.mxu0
        %v2380 = vadd.f32 %v1612, %v2379
        %v2381 = vpop.f32.mrf.mxu0
        %v2382 = vadd.f32 %v1608, %v2381
        %v2383 = vpop.f32.mrf.mxu0
        %v2384 = vadd.f32 %v1612, %v2383
        %2385 = vdwg.mxu0
        %2386 = vmatprep.subr.bf16.mxu0 %v2096
        %2387 = vmatpush1.bf16.msra.mxu0 %v2095
        %2388 = vmatprep.subr.bf16.mxu0 %v2092
        %2389 = vmatpush1.bf16.msra.mxu0 %v2091
        %2390 = vmatprep.subr.bf16.mxu0 %v2088
        %2391 = vmatpush1.bf16.msra.mxu0 %v2087
        %2392 = vmatprep.subr.bf16.mxu0 %v2084
        %2393 = vmatpush1.bf16.msra.mxu0 %v2083
        %2394 = vmatprep.subr.bf16.mxu0 %v2080
        %2395 = vmatpush1.bf16.msra.mxu0 %v2079
        %2396 = vmatprep.subr.bf16.mxu0 %v2076
        %2397 = vmatpush1.bf16.msra.mxu0 %v2075
        %2398 = vmatprep.subr.bf16.mxu0 %v2072
        %2399 = vmatpush1.bf16.msra.mxu0 %v2071
        %2400 = vmatprep.subr.bf16.mxu0 %v2068
        %2401 = vmatpush1.bf16.msra.mxu0 %v2067
        %2402 = vmatprep.subr.bf16.mxu0 %v2128
        %2403 = vmatpush2.bf16.msra.mxu0 %v2127
        %2404 = vmatprep.subr.bf16.mxu0 %v2124
        %2405 = vmatpush2.bf16.msra.mxu0 %v2123
        %2406 = vmatprep.subr.bf16.mxu0 %v2120
        %2407 = vmatpush2.bf16.msra.mxu0 %v2119
        %2408 = vmatprep.subr.bf16.mxu0 %v2116
        %2409 = vmatpush2.bf16.msra.mxu0 %v2115
        %2410 = vmatprep.subr.bf16.mxu0 %v2112
        %2411 = vmatpush2.bf16.msra.mxu0 %v2111
        %2412 = vmatprep.subr.bf16.mxu0 %v2108
        %2413 = vmatpush2.bf16.msra.mxu0 %v2107
        %2414 = vmatprep.subr.bf16.mxu0 %v2104
        %2415 = vmatpush2.bf16.msra.mxu0 %v2103
        %2416 = vmatprep.subr.bf16.mxu0 %v2100
        %2417 = vmatpush2.bf16.msra.mxu0 %v2099
        %2418 = vmatprep.mubr.bf16.mxu0 %v843
        %2419 = vmatmul.mubr.bf16.gmra.mxu0 %v842
        %v2420 = vpop.f32.mrf.mxu0
        %v2421 = vadd.f32 %v2378, %v2420
        %v2422 = vpop.f32.mrf.mxu0
        %v2423 = vadd.f32 %v2380, %v2422
        %v2424 = vpop.f32.mrf.mxu0
        %v2425 = vadd.f32 %v2382, %v2424
        %v2426 = vpop.f32.mrf.mxu0
        %v2427 = vadd.f32 %v2384, %v2426
        %2428 = vdwg.mxu0
        %vm2429 = vcmask 523264
        %v2431 = vsel %vm2429, %v1116, 0
        %v2434 = vsel %vm2429, %v1119, 0
        %v2437 = vsel %vm2429, %v1461, 0
        %v2440 = vsel %vm2429, %v1464, 0
        %2442 = vmatprep.subr.mxu0 0.0
        %2443 = vmatpush1.xpose.msra.mxu0 0.0
        %2444 = vmatprep.subr.mxu0 0.0
        %2445 = vmatpush1.xpose.msra.mxu0 0.0
        %2446 = vmatprep.subr.mxu0 0.0
        %2447 = vmatpush1.xpose.msra.mxu0 0.0
        %2448 = vmatprep.subr.mxu0 0.0
        %2449 = vmatpush1.xpose.msra.mxu0 0.0
        %2450 = vmatprep.subr.mxu0 0.0
        %2451 = vmatpush1.xpose.msra.mxu0 0.0
        %2452 = vmatprep.subr.mxu0 0.0
        %2453 = vmatpush1.xpose.msra.mxu0 0.0
        %2454 = vmatprep.subr.mxu0 0.0
        %2455 = vmatpush1.xpose.msra.mxu0 0.0
        %2456 = vmatprep.subr.mxu0 0.0
        %2457 = vmatpush1.xpose.msra.mxu0 0.0
        %2458 = vmatprep.subr.mxu0 0.0
        %2459 = vmatpush1.xpose.msra.mxu0 0.0
        %2460 = vmatprep.subr.mxu0 0.0
        %2461 = vmatpush1.xpose.msra.mxu0 0.0
        %2462 = vmatprep.subr.mxu0 0.0
        %2463 = vmatpush1.xpose.msra.mxu0 0.0
        %2464 = vmatprep.subr.mxu0 0.0
        %2465 = vmatpush1.xpose.msra.mxu0 0.0
        %2466 = vmatprep.subr.mxu0 0.0
        %2467 = vmatpush1.xpose.msra.mxu0 0.0
        %2468 = vmatprep.subr.mxu0 0.0
        %2469 = vmatpush1.xpose.msra.mxu0 0.0
        %2470 = vmatprep.subr.mxu0 0.0
        %2471 = vmatpush1.xpose.msra.mxu0 %v2440
        %2472 = vmatprep.subr.mxu0 0.0
        %2473 = vmatpush1.xpose.msra.mxu0 %v2437
        %2474 = vmatprep.subr.mxu0 0.0
        %2475 = vmatpush2.xpose.msra.mxu0 0.0
        %2476 = vmatprep.subr.mxu0 0.0
        %2477 = vmatpush2.xpose.msra.mxu0 0.0
        %2478 = vmatprep.subr.mxu0 0.0
        %2479 = vmatpush2.xpose.msra.mxu0 0.0
        %2480 = vmatprep.subr.mxu0 0.0
        %2481 = vmatpush2.xpose.msra.mxu0 0.0
        %2482 = vmatprep.subr.mxu0 0.0
        %2483 = vmatpush2.xpose.msra.mxu0 0.0
        %2484 = vmatprep.subr.mxu0 0.0
        %2485 = vmatpush2.xpose.msra.mxu0 0.0
        %2486 = vmatprep.subr.mxu0 0.0
        %2487 = vmatpush2.xpose.msra.mxu0 0.0
        %2488 = vmatprep.subr.mxu0 0.0
        %2489 = vmatpush2.xpose.msra.mxu0 0.0
        %2490 = vmatprep.subr.mxu0 0.0
        %2491 = vmatpush2.xpose.msra.mxu0 0.0
        %2492 = vmatprep.subr.mxu0 0.0
        %2493 = vmatpush2.xpose.msra.mxu0 0.0
        %2494 = vmatprep.subr.mxu0 0.0
        %2495 = vmatpush2.xpose.msra.mxu0 0.0
        %2496 = vmatprep.subr.mxu0 0.0
        %2497 = vmatpush2.xpose.msra.mxu0 0.0
        %2498 = vmatprep.subr.mxu0 0.0
        %2499 = vmatpush2.xpose.msra.mxu0 0.0
        %2500 = vmatprep.subr.mxu0 0.0
        %2501 = vmatpush2.xpose.msra.mxu0 0.0
        %2502 = vmatprep.subr.mxu0 0.0
        %2503 = vmatpush2.xpose.msra.mxu0 0.0
        %2504 = vmatprep.subr.mxu0 0.0
        %2505 = vmatpush2.xpose.msra.mxu0 0.0
        %2506 = vmatprep.mubr.f32.mxu0 0.0
        %2507 = vmatmul.mubr.f32.gmra.mxu0 %v2431
        %v2508 = vpop.f32.mrf.mxu0
        %v2509 = vadd.f32 0.0, %v2508
        %v2510 = vpop.f32.mrf.mxu0
        %2511 = vmatprep.mubr.f32.mxu0 0.0
        %2512 = vmatmul.mubr.f32.gmra.mxu0 %v2434
        %v2513 = vpop.f32.mrf.mxu0
        %v2514 = vadd.f32 0.0, %v2513
        %v2515 = vpop.f32.mrf.mxu0
        %2516 = vdwg.mxu0
        %vm2517 = vcmask 130048
        %v2518 = vsel %vm2517, %v2509, -inf
        %2519 = vmax.xlane.f32.xlu0 %v2518
        %v2520 = vpop.xlane.xlu0 %2519
        %v2521 = vsel %vm2517, %v2514, -inf
        %2522 = vmax.xlane.f32.xlu0 %v2521
        %v2523 = vpop.xlane.xlu0 %2522
        %v2524 = vsub.f32 %v2509, %v2520
        %v2525 = vsub.f32 %v2514, %v2523
        %v2526 = vmul.f32 %v2524, 1.442695
        %v2527 = vpow.pop %v2526
        %v2528 = vmul.f32 %v2525, 1.442695
        %v2529 = vpow.pop %v2528
        %v2530 = vsel %vm2517, %v2527, 0.0
        %2531 = vadd.xlane.f32.xlu0 %v2530
        %v2532 = vpop.xlane.xlu0 %2531
        %v2533 = vsel %vm2517, %v2529, 0.0
        %2534 = vadd.xlane.f32.xlu0 %v2533
        %v2535 = vpop.xlane.xlu0 %2534
        %v2536 = vrcp.pop %v2532
        %v2537 = vrcp.pop %v2535
        %v2538 = vmul.f32 %v2527, %v2536
        %v2539 = vmul.f32 %v2529, %v2537
        %v2540 = vsel %vm2517, %v2538, 0.0
        %v2541 = vsel %vm2517, %v2539, 0.0
        %v2542 = vadd.f32 %v2540, %v2541
        %v2543 = vrot.slane %v2542, 4
        %v2544 = vadd.f32 %v2542, %v2543
        %v2545 = vrot.slane %v2544, 2
        %v2546 = vadd.f32 %v2544, %v2545
        %v2547 = vrot.slane %v2546, 1
        %v2548 = vadd.f32 %v2546, %v2547
        %v2549 = vrcp.pop 16.0
        %v2550 = vmul.f32 %v2548, %v2549
        %v2552 = vsel %vm2517, %v2550, 0
        %2554 = vmatprep.subr.mxu0 0.0
        %2555 = vmatpush1.msra.mxu0 0.0
        %2556 = vmatprep.subr.mxu0 0.0
        %2557 = vmatpush1.msra.mxu0 0.0
        %2558 = vmatprep.subr.mxu0 0.0
        %2559 = vmatpush1.msra.mxu0 0.0
        %2560 = vmatprep.subr.mxu0 0.0
        %2561 = vmatpush1.msra.mxu0 0.0
        %2562 = vmatprep.subr.mxu0 0.0
        %2563 = vmatpush1.msra.mxu0 0.0
        %2564 = vmatprep.subr.mxu0 0.0
        %2565 = vmatpush1.msra.mxu0 0.0
        %2566 = vmatprep.subr.mxu0 0.0
        %2567 = vmatpush1.msra.mxu0 0.0
        %2568 = vmatprep.subr.mxu0 0.0
        %2569 = vmatpush1.msra.mxu0 0.0
        %2570 = vmatprep.subr.mxu0 0.0
        %2571 = vmatpush1.msra.mxu0 0.0
        %2572 = vmatprep.subr.mxu0 0.0
        %2573 = vmatpush1.msra.mxu0 0.0
        %2574 = vmatprep.subr.mxu0 0.0
        %2575 = vmatpush1.msra.mxu0 0.0
        %2576 = vmatprep.subr.mxu0 0.0
        %2577 = vmatpush1.msra.mxu0 0.0
        %2578 = vmatprep.subr.mxu0 0.0
        %2579 = vmatpush1.msra.mxu0 0.0
        %2580 = vmatprep.subr.mxu0 0.0
        %2581 = vmatpush1.msra.mxu0 0.0
        %2582 = vmatprep.subr.mxu0 %v2341
        %2583 = vmatpush1.msra.mxu0 %v2339
        %2584 = vmatprep.subr.mxu0 %v2337
        %2585 = vmatpush1.msra.mxu0 %v2335
        %2586 = vmatprep.subr.mxu0 0.0
        %2587 = vmatpush2.msra.mxu0 0.0
        %2588 = vmatprep.subr.mxu0 0.0
        %2589 = vmatpush2.msra.mxu0 0.0
        %2590 = vmatprep.subr.mxu0 0.0
        %2591 = vmatpush2.msra.mxu0 0.0
        %2592 = vmatprep.subr.mxu0 0.0
        %2593 = vmatpush2.msra.mxu0 0.0
        %2594 = vmatprep.subr.mxu0 0.0
        %2595 = vmatpush2.msra.mxu0 0.0
        %2596 = vmatprep.subr.mxu0 0.0
        %2597 = vmatpush2.msra.mxu0 0.0
        %2598 = vmatprep.subr.mxu0 0.0
        %2599 = vmatpush2.msra.mxu0 0.0
        %2600 = vmatprep.subr.mxu0 0.0
        %2601 = vmatpush2.msra.mxu0 0.0
        %2602 = vmatprep.subr.mxu0 0.0
        %2603 = vmatpush2.msra.mxu0 0.0
        %2604 = vmatprep.subr.mxu0 0.0
        %2605 = vmatpush2.msra.mxu0 0.0
        %2606 = vmatprep.subr.mxu0 0.0
        %2607 = vmatpush2.msra.mxu0 0.0
        %2608 = vmatprep.subr.mxu0 0.0
        %2609 = vmatpush2.msra.mxu0 0.0
        %2610 = vmatprep.subr.mxu0 0.0
        %2611 = vmatpush2.msra.mxu0 0.0
        %2612 = vmatprep.subr.mxu0 0.0
        %2613 = vmatpush2.msra.mxu0 0.0
        %2614 = vmatprep.subr.mxu0 0.0
        %2615 = vmatpush2.msra.mxu0 0.0
        %2616 = vmatprep.subr.mxu0 0.0
        %2617 = vmatpush2.msra.mxu0 0.0
        %2618 = vmatprep.mubr.f32.mxu0 0.0
        %2619 = vmatmul.mubr.f32.gmra.mxu0 %v2552
        %v2620 = vpop.f32.mrf.mxu0
        %v2621 = vadd.f32 0.0, %v2620
        %v2622 = vpop.f32.mrf.mxu0
        %v2623 = vadd.f32 0.0, %v2622
        %2624 = vdwg.mxu0
        %2625 = vmatprep.subr.mxu0 0.0
        %2626 = vmatpush1.msra.mxu0 0.0
        %2627 = vmatprep.subr.mxu0 0.0
        %2628 = vmatpush1.msra.mxu0 0.0
        %2629 = vmatprep.subr.mxu0 0.0
        %2630 = vmatpush1.msra.mxu0 0.0
        %2631 = vmatprep.subr.mxu0 0.0
        %2632 = vmatpush1.msra.mxu0 0.0
        %2633 = vmatprep.subr.mxu0 0.0
        %2634 = vmatpush1.msra.mxu0 0.0
        %2635 = vmatprep.subr.mxu0 0.0
        %2636 = vmatpush1.msra.mxu0 0.0
        %2637 = vmatprep.subr.mxu0 0.0
        %2638 = vmatpush1.msra.mxu0 0.0
        %2639 = vmatprep.subr.mxu0 0.0
        %2640 = vmatpush1.msra.mxu0 0.0
        %2641 = vmatprep.subr.mxu0 0.0
        %2642 = vmatpush1.msra.mxu0 0.0
        %2643 = vmatprep.subr.mxu0 0.0
        %2644 = vmatpush1.msra.mxu0 0.0
        %2645 = vmatprep.subr.mxu0 0.0
        %2646 = vmatpush1.msra.mxu0 0.0
        %2647 = vmatprep.subr.mxu0 0.0
        %2648 = vmatpush1.msra.mxu0 0.0
        %2649 = vmatprep.subr.mxu0 0.0
        %2650 = vmatpush1.msra.mxu0 0.0
        %2651 = vmatprep.subr.mxu0 0.0
        %2652 = vmatpush1.msra.mxu0 0.0
        %2653 = vmatprep.subr.mxu0 %v2427
        %2654 = vmatpush1.msra.mxu0 %v2425
        %2655 = vmatprep.subr.mxu0 %v2423
        %2656 = vmatpush1.msra.mxu0 %v2421
        %2657 = vmatprep.subr.mxu0 0.0
        %2658 = vmatpush2.msra.mxu0 0.0
        %2659 = vmatprep.subr.mxu0 0.0
        %2660 = vmatpush2.msra.mxu0 0.0
        %2661 = vmatprep.subr.mxu0 0.0
        %2662 = vmatpush2.msra.mxu0 0.0
        %2663 = vmatprep.subr.mxu0 0.0
        %2664 = vmatpush2.msra.mxu0 0.0
        %2665 = vmatprep.subr.mxu0 0.0
        %2666 = vmatpush2.msra.mxu0 0.0
        %2667 = vmatprep.subr.mxu0 0.0
        %2668 = vmatpush2.msra.mxu0 0.0
        %2669 = vmatprep.subr.mxu0 0.0
        %2670 = vmatpush2.msra.mxu0 0.0
        %2671 = vmatprep.subr.mxu0 0.0
        %2672 = vmatpush2.msra.mxu0 0.0
        %2673 = vmatprep.subr.mxu0 0.0
        %2674 = vmatpush2.msra.mxu0 0.0
        %2675 = vmatprep.subr.mxu0 0.0
        %2676 = vmatpush2.msra.mxu0 0.0
        %2677 = vmatprep.subr.mxu0 0.0
        %2678 = vmatpush2.msra.mxu0 0.0
        %2679 = vmatprep.subr.mxu0 0.0
        %2680 = vmatpush2.msra.mxu0 0.0
        %2681 = vmatprep.subr.mxu0 0.0
        %2682 = vmatpush2.msra.mxu0 0.0
        %2683 = vmatprep.subr.mxu0 0.0
        %2684 = vmatpush2.msra.mxu0 0.0
        %2685 = vmatprep.subr.mxu0 0.0
        %2686 = vmatpush2.msra.mxu0 0.0
        %2687 = vmatprep.subr.mxu0 0.0
        %2688 = vmatpush2.msra.mxu0 0.0
        %2689 = vmatprep.mubr.f32.mxu0 0.0
        %2690 = vmatmul.mubr.f32.gmra.mxu0 %v2552
        %v2691 = vpop.f32.mrf.mxu0
        %v2692 = vadd.f32 0.0, %v2691
        %v2693 = vpop.f32.mrf.mxu0
        %v2694 = vadd.f32 0.0, %v2693
        %2695 = vdwg.mxu0
        %v2696 = vunpack.c.l.bf16 %v749
        %v2697 = vunpack.c.h.bf16 %v749
        %v2698 = vunpack.c.l.bf16 %v750
        %v2699 = vunpack.c.h.bf16 %v750
        %v2700 = vunpack.c.l.bf16 %v751
        %v2701 = vunpack.c.h.bf16 %v751
        %v2702 = vunpack.c.l.bf16 %v752
        %v2703 = vunpack.c.h.bf16 %v752
        %v2704 = vadd.f32 %v2696, %v2700
        %v2705 = vrot.slane %v2704, 4
        %v2706 = vadd.f32 %v2704, %v2705
        %v2707 = vrot.slane %v2706, 2
        %v2708 = vadd.f32 %v2706, %v2707
        %v2709 = vrot.slane %v2708, 1
        %v2710 = vadd.f32 %v2708, %v2709
        %v2711 = vadd.f32 %v2697, %v2701
        %v2712 = vrot.slane %v2711, 4
        %v2713 = vadd.f32 %v2711, %v2712
        %v2714 = vrot.slane %v2713, 2
        %v2715 = vadd.f32 %v2713, %v2714
        %v2716 = vrot.slane %v2715, 1
        %v2717 = vadd.f32 %v2715, %v2716
        %v2718 = vadd.f32 %v2698, %v2702
        %v2719 = vrot.slane %v2718, 4
        %v2720 = vadd.f32 %v2718, %v2719
        %v2721 = vrot.slane %v2720, 2
        %v2722 = vadd.f32 %v2720, %v2721
        %v2723 = vrot.slane %v2722, 1
        %v2724 = vadd.f32 %v2722, %v2723
        %v2725 = vadd.f32 %v2699, %v2703
        %v2726 = vrot.slane %v2725, 4
        %v2727 = vadd.f32 %v2725, %v2726
        %v2728 = vrot.slane %v2727, 2
        %v2729 = vadd.f32 %v2727, %v2728
        %v2730 = vrot.slane %v2729, 1
        %v2731 = vadd.f32 %v2729, %v2730
        %v2732 = vmul.f32 %v2710, %v2549
        %v2733 = vmul.f32 %v2717, %v2549
        %v2734 = vmul.f32 %v2724, %v2549
        %v2735 = vmul.f32 %v2731, %v2549
        %v2736 = vunpack.c.l.bf16 %v753
        %v2737 = vunpack.c.h.bf16 %v753
        %v2738 = vunpack.c.l.bf16 %v754
        %v2739 = vunpack.c.h.bf16 %v754
        %v2740 = vunpack.c.l.bf16 %v755
        %v2741 = vunpack.c.h.bf16 %v755
        %v2742 = vunpack.c.l.bf16 %v756
        %v2743 = vunpack.c.h.bf16 %v756
        %v2744 = vadd.f32 %v2736, %v2740
        %v2745 = vrot.slane %v2744, 4
        %v2746 = vadd.f32 %v2744, %v2745
        %v2747 = vrot.slane %v2746, 2
        %v2748 = vadd.f32 %v2746, %v2747
        %v2749 = vrot.slane %v2748, 1
        %v2750 = vadd.f32 %v2748, %v2749
        %v2751 = vadd.f32 %v2737, %v2741
        %v2752 = vrot.slane %v2751, 4
        %v2753 = vadd.f32 %v2751, %v2752
        %v2754 = vrot.slane %v2753, 2
        %v2755 = vadd.f32 %v2753, %v2754
        %v2756 = vrot.slane %v2755, 1
        %v2757 = vadd.f32 %v2755, %v2756
        %v2758 = vadd.f32 %v2738, %v2742
        %v2759 = vrot.slane %v2758, 4
        %v2760 = vadd.f32 %v2758, %v2759
        %v2761 = vrot.slane %v2760, 2
        %v2762 = vadd.f32 %v2760, %v2761
        %v2763 = vrot.slane %v2762, 1
        %v2764 = vadd.f32 %v2762, %v2763
        %v2765 = vadd.f32 %v2739, %v2743
        %v2766 = vrot.slane %v2765, 4
        %v2767 = vadd.f32 %v2765, %v2766
        %v2768 = vrot.slane %v2767, 2
        %v2769 = vadd.f32 %v2767, %v2768
        %v2770 = vrot.slane %v2769, 1
        %v2771 = vadd.f32 %v2769, %v2770
        %v2772 = vmul.f32 %v2750, %v2549
        %v2773 = vmul.f32 %v2757, %v2549
        %v2774 = vmul.f32 %v2764, %v2549
        %v2775 = vmul.f32 %v2771, %v2549
        %s2776 = sld [smem:[#allocation2]]
        %v2777 = vstv %s2776
        %v2778 = vmul.f32 %v2777, %v2621
        %v2779 = vmul.f32 %v2777, %v2623
        %v2780 = vmul.f32 %v2777, %v2692
        %v2781 = vmul.f32 %v2777, %v2694
        %v2782 = vadd.f32 %v2778, %v2732
        %v2783 = vadd.f32 %v2779, %v2733
        %v2784 = vadd.f32 %v2780, %v2734
        %v2785 = vadd.f32 %v2781, %v2735
        %v2786 = vadd.f32 %v2778, %v2772
        %v2787 = vadd.f32 %v2779, %v2773
        %v2788 = vadd.f32 %v2780, %v2774
        %v2789 = vadd.f32 %v2781, %v2775
        %v2790 = vpack.c.bf16 %v2782, %v2782
        %v2791 = vpack.c.bf16 %v2783, %v2783
        %v2792 = vpack.c.bf16 %v2784, %v2784
        %v2793 = vpack.c.bf16 %v2785, %v2785
        %v2794 = vld [vmem:[#allocation7] sm:$0xff]
        %v2795 = vld [vmem:[#allocation7 + $0x8] sm:$0xf]
        %v2796 = vld [vmem:[#allocation7 + $0xc] sm:$0xff]
        %v2797 = vld [vmem:[#allocation7 + $0x14] sm:$0xf]
        %v2798 = vld [vmem:[#allocation7 + $0x18] sm:$0xff]
        %v2799 = vld [vmem:[#allocation7 + $0x20] sm:$0xf]
        %v2800 = vld [vmem:[#allocation7 + $0x24] sm:$0xff]
        %v2801 = vld [vmem:[#allocation7 + $0x2c] sm:$0xf]
        %v2802 = vld [vmem:[#allocation7 + $0x30] sm:$0xff]
        %v2803 = vld [vmem:[#allocation7 + $0x38] sm:$0xf]
        %v2804 = vld [vmem:[#allocation7 + $0x3c] sm:$0xff]
        %v2805 = vld [vmem:[#allocation7 + $0x44] sm:$0xf]
        %v2806 = vld [vmem:[#allocation7 + $0x48] sm:$0xff]
        %v2807 = vld [vmem:[#allocation7 + $0x50] sm:$0xf]
        %v2808 = vld [vmem:[#allocation7 + $0x54] sm:$0xff]
        %v2809 = vld [vmem:[#allocation7 + $0x5c] sm:$0xf]
        %v2810 = vld [vmem:[#allocation7 + $0x60] sm:$0xff]
        %v2811 = vld [vmem:[#allocation7 + $0x68] sm:$0xf]
        %v2812 = vld [vmem:[#allocation7 + $0x6c] sm:$0xff]
        %v2813 = vld [vmem:[#allocation7 + $0x74] sm:$0xf]
        %v2814 = vld [vmem:[#allocation7 + $0x78] sm:$0xff]
        %v2815 = vld [vmem:[#allocation7 + $0x80] sm:$0xf]
        %v2816 = vld [vmem:[#allocation7 + $0x84] sm:$0xff]
        %v2817 = vld [vmem:[#allocation7 + $0x8c] sm:$0xf]
        %v2818 = vld [vmem:[#allocation7 + $0x90] sm:$0xff]
        %v2819 = vld [vmem:[#allocation7 + $0x98] sm:$0xf]
        %v2820 = vld [vmem:[#allocation7 + $0x9c] sm:$0xff]
        %v2821 = vld [vmem:[#allocation7 + $0xa4] sm:$0xf]
        %v2822 = vld [vmem:[#allocation7 + $0xa8] sm:$0xff]
        %v2823 = vld [vmem:[#allocation7 + $0xb0] sm:$0xf]
        %v2824 = vld [vmem:[#allocation7 + $0xb4] sm:$0xff]
        %v2825 = vld [vmem:[#allocation7 + $0xbc] sm:$0xf]
        %v2826 = vld [vmem:[#allocation7 + $0xc0] sm:$0xff]
        %v2827 = vld [vmem:[#allocation7 + $0xc8] sm:$0xf]
        %v2828 = vld [vmem:[#allocation7 + $0xcc] sm:$0xff]
        %v2829 = vld [vmem:[#allocation7 + $0xd4] sm:$0xf]
        %v2830 = vld [vmem:[#allocation7 + $0xd8] sm:$0xff]
        %v2831 = vld [vmem:[#allocation7 + $0xe0] sm:$0xf]
        %v2832 = vld [vmem:[#allocation7 + $0xe4] sm:$0xff]
        %v2833 = vld [vmem:[#allocation7 + $0xec] sm:$0xf]
        %v2834 = vld [vmem:[#allocation7 + $0xf0] sm:$0xff]
        %v2835 = vld [vmem:[#allocation7 + $0xf8] sm:$0xf]
        %v2836 = vld [vmem:[#allocation7 + $0xfc] sm:$0xff]
        %v2837 = vld [vmem:[#allocation7 + $0x104] sm:$0xf]
        %v2838 = vld [vmem:[#allocation7 + $0x108] sm:$0xff]
        %v2839 = vld [vmem:[#allocation7 + $0x110] sm:$0xf]
        %v2840 = vld [vmem:[#allocation7 + $0x114] sm:$0xff]
        %v2841 = vld [vmem:[#allocation7 + $0x11c] sm:$0xf]
        %v2842 = vld [vmem:[#allocation7 + $0x120] sm:$0xff]
        %v2843 = vld [vmem:[#allocation7 + $0x128] sm:$0xf]
        %v2844 = vld [vmem:[#allocation7 + $0x12c] sm:$0xff]
        %v2845 = vld [vmem:[#allocation7 + $0x134] sm:$0xf]
        %v2846 = vld [vmem:[#allocation7 + $0x138] sm:$0xff]
        %v2847 = vld [vmem:[#allocation7 + $0x140] sm:$0xf]
        %v2848 = vld [vmem:[#allocation7 + $0x144] sm:$0xff]
        %v2849 = vld [vmem:[#allocation7 + $0x14c] sm:$0xf]
        %v2850 = vld [vmem:[#allocation7 + $0x150] sm:$0xff]
        %v2851 = vld [vmem:[#allocation7 + $0x158] sm:$0xf]
        %v2852 = vld [vmem:[#allocation7 + $0x15c] sm:$0xff]
        %v2853 = vld [vmem:[#allocation7 + $0x164] sm:$0xf]
        %v2854 = vld [vmem:[#allocation7 + $0x168] sm:$0xff]
        %v2855 = vld [vmem:[#allocation7 + $0x170] sm:$0xf]
        %v2856 = vld [vmem:[#allocation7 + $0x174] sm:$0xff]
        %v2857 = vld [vmem:[#allocation7 + $0x17c] sm:$0xf]
        %v2858 = vld [vmem:[#allocation7 + $0x180] sm:$0xff]
        %v2859 = vld [vmem:[#allocation7 + $0x188] sm:$0xf]
        %v2860 = vld [vmem:[#allocation7 + $0x18c] sm:$0xff]
        %v2861 = vld [vmem:[#allocation7 + $0x194] sm:$0xf]
        %v2862 = vld [vmem:[#allocation7 + $0x198] sm:$0xff]
        %v2863 = vld [vmem:[#allocation7 + $0x1a0] sm:$0xf]
        %v2864 = vld [vmem:[#allocation7 + $0x1a4] sm:$0xff]
        %v2865 = vld [vmem:[#allocation7 + $0x1ac] sm:$0xf]
        %v2866 = vld [vmem:[#allocation7 + $0x1b0] sm:$0xff]
        %v2867 = vld [vmem:[#allocation7 + $0x1b8] sm:$0xf]
        %v2868 = vld [vmem:[#allocation7 + $0x1bc] sm:$0xff]
        %v2869 = vld [vmem:[#allocation7 + $0x1c4] sm:$0xf]
        %v2870 = vld [vmem:[#allocation7 + $0x1c8] sm:$0xff]
        %v2871 = vld [vmem:[#allocation7 + $0x1d0] sm:$0xf]
        %v2872 = vld [vmem:[#allocation7 + $0x1d4] sm:$0xff]
        %v2873 = vld [vmem:[#allocation7 + $0x1dc] sm:$0xf]
        %v2874 = vld [vmem:[#allocation7 + $0x1e0] sm:$0xff]
        %v2875 = vld [vmem:[#allocation7 + $0x1e8] sm:$0xf]
        %v2876 = vld [vmem:[#allocation7 + $0x1ec] sm:$0xff]
        %v2877 = vld [vmem:[#allocation7 + $0x1f4] sm:$0xf]
        %v2878 = vld [vmem:[#allocation7 + $0x1f8] sm:$0xff]
        %v2879 = vld [vmem:[#allocation7 + $0x200] sm:$0xf]
        %v2880 = vld [vmem:[#allocation7 + $0x204] sm:$0xff]
        %v2881 = vld [vmem:[#allocation7 + $0x20c] sm:$0xf]
        %v2882 = vld [vmem:[#allocation7 + $0x210] sm:$0xff]
        %v2883 = vld [vmem:[#allocation7 + $0x218] sm:$0xf]
        %v2884 = vld [vmem:[#allocation7 + $0x21c] sm:$0xff]
        %v2885 = vld [vmem:[#allocation7 + $0x224] sm:$0xf]
        %v2886 = vld [vmem:[#allocation7 + $0x228] sm:$0xff]
        %v2887 = vld [vmem:[#allocation7 + $0x230] sm:$0xf]
        %v2888 = vld [vmem:[#allocation7 + $0x234] sm:$0xff]
        %v2889 = vld [vmem:[#allocation7 + $0x23c] sm:$0xf]
        %v2890 = vld [vmem:[#allocation7 + $0x240] sm:$0xff]
        %v2891 = vld [vmem:[#allocation7 + $0x248] sm:$0xf]
        %v2892 = vld [vmem:[#allocation7 + $0x24c] sm:$0xff]
        %v2893 = vld [vmem:[#allocation7 + $0x254] sm:$0xf]
        %v2894 = vld [vmem:[#allocation7 + $0x258] sm:$0xff]
        %v2895 = vld [vmem:[#allocation7 + $0x260] sm:$0xf]
        %v2896 = vld [vmem:[#allocation7 + $0x264] sm:$0xff]
        %v2897 = vld [vmem:[#allocation7 + $0x26c] sm:$0xf]
        %v2898 = vld [vmem:[#allocation7 + $0x270] sm:$0xff]
        %v2899 = vld [vmem:[#allocation7 + $0x278] sm:$0xf]
        %v2900 = vld [vmem:[#allocation7 + $0x27c] sm:$0xff]
        %v2901 = vld [vmem:[#allocation7 + $0x284] sm:$0xf]
        %v2902 = vld [vmem:[#allocation7 + $0x288] sm:$0xff]
        %v2903 = vld [vmem:[#allocation7 + $0x290] sm:$0xf]
        %v2904 = vld [vmem:[#allocation7 + $0x294] sm:$0xff]
        %v2905 = vld [vmem:[#allocation7 + $0x29c] sm:$0xf]
        %v2906 = vld [vmem:[#allocation7 + $0x2a0] sm:$0xff]
        %v2907 = vld [vmem:[#allocation7 + $0x2a8] sm:$0xf]
        %v2908 = vld [vmem:[#allocation7 + $0x2ac] sm:$0xff]
        %v2909 = vld [vmem:[#allocation7 + $0x2b4] sm:$0xf]
        %v2910 = vld [vmem:[#allocation7 + $0x2b8] sm:$0xff]
        %v2911 = vld [vmem:[#allocation7 + $0x2c0] sm:$0xf]
        %v2912 = vld [vmem:[#allocation7 + $0x2c4] sm:$0xff]
        %v2913 = vld [vmem:[#allocation7 + $0x2cc] sm:$0xf]
        %v2914 = vld [vmem:[#allocation7 + $0x2d0] sm:$0xff]
        %v2915 = vld [vmem:[#allocation7 + $0x2d8] sm:$0xf]
        %v2916 = vld [vmem:[#allocation7 + $0x2dc] sm:$0xff]
        %v2917 = vld [vmem:[#allocation7 + $0x2e4] sm:$0xf]
        %v2918 = vld [vmem:[#allocation7 + $0x2e8] sm:$0xff]
        %v2919 = vld [vmem:[#allocation7 + $0x2f0] sm:$0xf]
        %v2920 = vld [vmem:[#allocation7 + $0x2f4] sm:$0xff]
        %v2921 = vld [vmem:[#allocation7 + $0x2fc] sm:$0xf]
        %v2922 = vld [vmem:[%s10] sm:$0x7]
        %v3051 = vunpack.c.l.b16 %v2794
        %v3052 = vunpack.c.h.b16 %v2794
        %v3053 = vunpack.c.l.b16 %v2795
        %v3054 = vunpack.c.l.b16 %v2796
        %v3055 = vunpack.c.h.b16 %v2796
        %v3056 = vunpack.c.l.b16 %v2797
        %v3057 = vunpack.c.l.b16 %v2798
        %v3058 = vunpack.c.h.b16 %v2798
        %v3059 = vunpack.c.l.b16 %v2799
        %v3060 = vunpack.c.l.b16 %v2800
        %v3061 = vunpack.c.h.b16 %v2800
        %v3062 = vunpack.c.l.b16 %v2801
        %v3063 = vunpack.c.l.b16 %v2802
        %v3064 = vunpack.c.h.b16 %v2802
        %v3065 = vunpack.c.l.b16 %v2803
        %v3066 = vunpack.c.l.b16 %v2804
        %v3067 = vunpack.c.h.b16 %v2804
        %v3068 = vunpack.c.l.b16 %v2805
        %v3069 = vunpack.c.l.b16 %v2806
        %v3070 = vunpack.c.h.b16 %v2806
        %v3071 = vunpack.c.l.b16 %v2807
        %v3072 = vunpack.c.l.b16 %v2808
        %v3073 = vunpack.c.h.b16 %v2808
        %v3074 = vunpack.c.l.b16 %v2809
        %v3075 = vunpack.c.l.b16 %v2810
        %v3076 = vunpack.c.h.b16 %v2810
        %v3077 = vunpack.c.l.b16 %v2811
        %v3078 = vunpack.c.l.b16 %v2812
        %v3079 = vunpack.c.h.b16 %v2812
        %v3080 = vunpack.c.l.b16 %v2813
        %v3081 = vunpack.c.l.b16 %v2814
        %v3082 = vunpack.c.h.b16 %v2814
        %v3083 = vunpack.c.l.b16 %v2815
        %v3084 = vunpack.c.l.b16 %v2816
        %v3085 = vunpack.c.h.b16 %v2816
        %v3086 = vunpack.c.l.b16 %v2817
        %v3087 = vunpack.c.l.b16 %v2818
        %v3088 = vunpack.c.h.b16 %v2818
        %v3089 = vunpack.c.l.b16 %v2819
        %v3090 = vunpack.c.l.b16 %v2820
        %v3091 = vunpack.c.h.b16 %v2820
        %v3092 = vunpack.c.l.b16 %v2821
        %v3093 = vunpack.c.l.b16 %v2822
        %v3094 = vunpack.c.h.b16 %v2822
        %v3095 = vunpack.c.l.b16 %v2823
        %v3096 = vunpack.c.l.b16 %v2824
        %v3097 = vunpack.c.h.b16 %v2824
        %v3098 = vunpack.c.l.b16 %v2825
        %v3099 = vunpack.c.l.b16 %v2826
        %v3100 = vunpack.c.h.b16 %v2826
        %v3101 = vunpack.c.l.b16 %v2827
        %v3102 = vunpack.c.l.b16 %v2828
        %v3103 = vunpack.c.h.b16 %v2828
        %v3104 = vunpack.c.l.b16 %v2829
        %v3105 = vunpack.c.l.b16 %v2830
        %v3106 = vunpack.c.h.b16 %v2830
        %v3107 = vunpack.c.l.b16 %v2831
        %v3108 = vunpack.c.l.b16 %v2832
        %v3109 = vunpack.c.h.b16 %v2832
        %v3110 = vunpack.c.l.b16 %v2833
        %v3111 = vunpack.c.l.b16 %v2834
        %v3112 = vunpack.c.h.b16 %v2834
        %v3113 = vunpack.c.l.b16 %v2835
        %v3114 = vunpack.c.l.b16 %v2836
        %v3115 = vunpack.c.h.b16 %v2836
        %v3116 = vunpack.c.l.b16 %v2837
        %v3117 = vunpack.c.l.b16 %v2838
        %v3118 = vunpack.c.h.b16 %v2838
        %v3119 = vunpack.c.l.b16 %v2839
        %v3120 = vunpack.c.l.b16 %v2840
        %v3121 = vunpack.c.h.b16 %v2840
        %v3122 = vunpack.c.l.b16 %v2841
        %v3123 = vunpack.c.l.b16 %v2842
        %v3124 = vunpack.c.h.b16 %v2842
        %v3125 = vunpack.c.l.b16 %v2843
        %v3126 = vunpack.c.l.b16 %v2844
        %v3127 = vunpack.c.h.b16 %v2844
        %v3128 = vunpack.c.l.b16 %v2845
        %v3129 = vunpack.c.l.b16 %v2846
        %v3130 = vunpack.c.h.b16 %v2846
        %v3131 = vunpack.c.l.b16 %v2847
        %v3132 = vunpack.c.l.b16 %v2848
        %v3133 = vunpack.c.h.b16 %v2848
        %v3134 = vunpack.c.l.b16 %v2849
        %v3135 = vunpack.c.l.b16 %v2850
        %v3136 = vunpack.c.h.b16 %v2850
        %v3137 = vunpack.c.l.b16 %v2851
        %v3138 = vunpack.c.l.b16 %v2852
        %v3139 = vunpack.c.h.b16 %v2852
        %v3140 = vunpack.c.l.b16 %v2853
        %v3141 = vunpack.c.l.b16 %v2854
        %v3142 = vunpack.c.h.b16 %v2854
        %v3143 = vunpack.c.l.b16 %v2855
        %v3144 = vunpack.c.l.b16 %v2856
        %v3145 = vunpack.c.h.b16 %v2856
        %v3146 = vunpack.c.l.b16 %v2857
        %v3147 = vunpack.c.l.b16 %v2858
        %v3148 = vunpack.c.h.b16 %v2858
        %v3149 = vunpack.c.l.b16 %v2859
        %v3150 = vunpack.c.l.b16 %v2860
        %v3151 = vunpack.c.h.b16 %v2860
        %v3152 = vunpack.c.l.b16 %v2861
        %v3153 = vunpack.c.l.b16 %v2862
        %v3154 = vunpack.c.h.b16 %v2862
        %v3155 = vunpack.c.l.b16 %v2863
        %v3156 = vunpack.c.l.b16 %v2864
        %v3157 = vunpack.c.h.b16 %v2864
        %v3158 = vunpack.c.l.b16 %v2865
        %v3159 = vunpack.c.l.b16 %v2866
        %v3160 = vunpack.c.h.b16 %v2866
        %v3161 = vunpack.c.l.b16 %v2867
        %v3162 = vunpack.c.l.b16 %v2868
        %v3163 = vunpack.c.h.b16 %v2868
        %v3164 = vunpack.c.l.b16 %v2869
        %v3165 = vunpack.c.l.b16 %v2870
        %v3166 = vunpack.c.h.b16 %v2870
        %v3167 = vunpack.c.l.b16 %v2871
        %v3168 = vunpack.c.l.b16 %v2872
        %v3169 = vunpack.c.h.b16 %v2872
        %v3170 = vunpack.c.l.b16 %v2873
        %v3171 = vunpack.c.l.b16 %v2874
        %v3172 = vunpack.c.h.b16 %v2874
        %v3173 = vunpack.c.l.b16 %v2875
        %v3174 = vunpack.c.l.b16 %v2876
        %v3175 = vunpack.c.h.b16 %v2876
        %v3176 = vunpack.c.l.b16 %v2877
        %v3177 = vunpack.c.l.b16 %v2878
        %v3178 = vunpack.c.h.b16 %v2878
        %v3179 = vunpack.c.l.b16 %v2879
        %v3180 = vunpack.c.l.b16 %v2880
        %v3181 = vunpack.c.h.b16 %v2880
        %v3182 = vunpack.c.l.b16 %v2881
        %v3183 = vunpack.c.l.b16 %v2882
        %v3184 = vunpack.c.h.b16 %v2882
        %v3185 = vunpack.c.l.b16 %v2883
        %v3186 = vunpack.c.l.b16 %v2884
        %v3187 = vunpack.c.h.b16 %v2884
        %v3188 = vunpack.c.l.b16 %v2885
        %v3189 = vunpack.c.l.b16 %v2886
        %v3190 = vunpack.c.h.b16 %v2886
        %v3191 = vunpack.c.l.b16 %v2887
        %v3192 = vunpack.c.l.b16 %v2888
        %v3193 = vunpack.c.h.b16 %v2888
        %v3194 = vunpack.c.l.b16 %v2889
        %v3195 = vunpack.c.l.b16 %v2890
        %v3196 = vunpack.c.h.b16 %v2890
        %v3197 = vunpack.c.l.b16 %v2891
        %v3198 = vunpack.c.l.b16 %v2892
        %v3199 = vunpack.c.h.b16 %v2892
        %v3200 = vunpack.c.l.b16 %v2893
        %v3201 = vunpack.c.l.b16 %v2894
        %v3202 = vunpack.c.h.b16 %v2894
        %v3203 = vunpack.c.l.b16 %v2895
        %v3204 = vunpack.c.l.b16 %v2896
        %v3205 = vunpack.c.h.b16 %v2896
        %v3206 = vunpack.c.l.b16 %v2897
        %v3207 = vunpack.c.l.b16 %v2898
        %v3208 = vunpack.c.h.b16 %v2898
        %v3209 = vunpack.c.l.b16 %v2899
        %v3210 = vunpack.c.l.b16 %v2900
        %v3211 = vunpack.c.h.b16 %v2900
        %v3212 = vunpack.c.l.b16 %v2901
        %v3213 = vunpack.c.l.b16 %v2902
        %v3214 = vunpack.c.h.b16 %v2902
        %v3215 = vunpack.c.l.b16 %v2903
        %v3216 = vunpack.c.l.b16 %v2904
        %v3217 = vunpack.c.h.b16 %v2904
        %v3218 = vunpack.c.l.b16 %v2905
        %v3219 = vunpack.c.l.b16 %v2906
        %v3220 = vunpack.c.h.b16 %v2906
        %v3221 = vunpack.c.l.b16 %v2907
        %v3222 = vunpack.c.l.b16 %v2908
        %v3223 = vunpack.c.h.b16 %v2908
        %v3224 = vunpack.c.l.b16 %v2909
        %v3225 = vunpack.c.l.b16 %v2910
        %v3226 = vunpack.c.h.b16 %v2910
        %v3227 = vunpack.c.l.b16 %v2911
        %v3228 = vunpack.c.l.b16 %v2912
        %v3229 = vunpack.c.h.b16 %v2912
        %v3230 = vunpack.c.l.b16 %v2913
        %v3231 = vunpack.c.l.b16 %v2914
        %v3232 = vunpack.c.h.b16 %v2914
        %v3233 = vunpack.c.l.b16 %v2915
        %v3234 = vunpack.c.l.b16 %v2916
        %v3235 = vunpack.c.h.b16 %v2916
        %v3236 = vunpack.c.l.b16 %v2917
        %v3237 = vunpack.c.l.b16 %v2918
        %v3238 = vunpack.c.h.b16 %v2918
        %v3239 = vunpack.c.l.b16 %v2919
        %v3240 = vunpack.c.l.b16 %v2920
        %v3241 = vunpack.c.h.b16 %v2920
        %v3242 = vunpack.c.l.b16 %v2921
        %v3243 = vpack.c.b16 %v3054, %v3051
        %v3244 = vpack.c.b16 %v3055, %v3052
        %v3245 = vpack.c.b16 %v3056, %v3053
        %v3246 = vpack.c.b16 %v3060, %v3057
        %v3247 = vpack.c.b16 %v3061, %v3058
        %v3248 = vpack.c.b16 %v3062, %v3059
        %v3249 = vpack.c.b16 %v3066, %v3063
        %v3250 = vpack.c.b16 %v3067, %v3064
        %v3251 = vpack.c.b16 %v3068, %v3065
        %v3252 = vpack.c.b16 %v3072, %v3069
        %v3253 = vpack.c.b16 %v3073, %v3070
        %v3254 = vpack.c.b16 %v3074, %v3071
        %v3255 = vpack.c.b16 %v3078, %v3075
        %v3256 = vpack.c.b16 %v3079, %v3076
        %v3257 = vpack.c.b16 %v3080, %v3077
        %v3258 = vpack.c.b16 %v3084, %v3081
        %v3259 = vpack.c.b16 %v3085, %v3082
        %v3260 = vpack.c.b16 %v3086, %v3083
        %v3261 = vpack.c.b16 %v3090, %v3087
        %v3262 = vpack.c.b16 %v3091, %v3088
        %v3263 = vpack.c.b16 %v3092, %v3089
        %v3264 = vpack.c.b16 %v3096, %v3093
        %v3265 = vpack.c.b16 %v3097, %v3094
        %v3266 = vpack.c.b16 %v3098, %v3095
        %v3267 = vpack.c.b16 %v3102, %v3099
        %v3268 = vpack.c.b16 %v3103, %v3100
        %v3269 = vpack.c.b16 %v3104, %v3101
        %v3270 = vpack.c.b16 %v3108, %v3105
        %v3271 = vpack.c.b16 %v3109, %v3106
        %v3272 = vpack.c.b16 %v3110, %v3107
        %v3273 = vpack.c.b16 %v3114, %v3111
        %v3274 = vpack.c.b16 %v3115, %v3112
        %v3275 = vpack.c.b16 %v3116, %v3113
        %v3276 = vpack.c.b16 %v3120, %v3117
        %v3277 = vpack.c.b16 %v3121, %v3118
        %v3278 = vpack.c.b16 %v3122, %v3119
        %v3279 = vpack.c.b16 %v3126, %v3123
        %v3280 = vpack.c.b16 %v3127, %v3124
        %v3281 = vpack.c.b16 %v3128, %v3125
        %v3282 = vpack.c.b16 %v3132, %v3129
        %v3283 = vpack.c.b16 %v3133, %v3130
        %v3284 = vpack.c.b16 %v3134, %v3131
        %v3285 = vpack.c.b16 %v3138, %v3135
        %v3286 = vpack.c.b16 %v3139, %v3136
        %v3287 = vpack.c.b16 %v3140, %v3137
        %v3288 = vpack.c.b16 %v3144, %v3141
        %v3289 = vpack.c.b16 %v3145, %v3142
        %v3290 = vpack.c.b16 %v3146, %v3143
        %v3291 = vpack.c.b16 %v3150, %v3147
        %v3292 = vpack.c.b16 %v3151, %v3148
        %v3293 = vpack.c.b16 %v3152, %v3149
        %v3294 = vpack.c.b16 %v3156, %v3153
        %v3295 = vpack.c.b16 %v3157, %v3154
        %v3296 = vpack.c.b16 %v3158, %v3155
        %v3297 = vpack.c.b16 %v3162, %v3159
        %v3298 = vpack.c.b16 %v3163, %v3160
        %v3299 = vpack.c.b16 %v3164, %v3161
        %v3300 = vpack.c.b16 %v3168, %v3165
        %v3301 = vpack.c.b16 %v3169, %v3166
        %v3302 = vpack.c.b16 %v3170, %v3167
        %v3303 = vpack.c.b16 %v3174, %v3171
        %v3304 = vpack.c.b16 %v3175, %v3172
        %v3305 = vpack.c.b16 %v3176, %v3173
        %v3306 = vpack.c.b16 %v3180, %v3177
        %v3307 = vpack.c.b16 %v3181, %v3178
        %v3308 = vpack.c.b16 %v3182, %v3179
        %v3309 = vpack.c.b16 %v3186, %v3183
        %v3310 = vpack.c.b16 %v3187, %v3184
        %v3311 = vpack.c.b16 %v3188, %v3185
        %v3312 = vpack.c.b16 %v3192, %v3189
        %v3313 = vpack.c.b16 %v3193, %v3190
        %v3314 = vpack.c.b16 %v3194, %v3191
        %v3315 = vpack.c.b16 %v3198, %v3195
        %v3316 = vpack.c.b16 %v3199, %v3196
        %v3317 = vpack.c.b16 %v3200, %v3197
        %v3318 = vpack.c.b16 %v3204, %v3201
        %v3319 = vpack.c.b16 %v3205, %v3202
        %v3320 = vpack.c.b16 %v3206, %v3203
        %v3321 = vpack.c.b16 %v3210, %v3207
        %v3322 = vpack.c.b16 %v3211, %v3208
        %v3323 = vpack.c.b16 %v3212, %v3209
        %v3324 = vpack.c.b16 %v3216, %v3213
        %v3325 = vpack.c.b16 %v3217, %v3214
        %v3326 = vpack.c.b16 %v3218, %v3215
        %v3327 = vpack.c.b16 %v3222, %v3219
        %v3328 = vpack.c.b16 %v3223, %v3220
        %v3329 = vpack.c.b16 %v3224, %v3221
        %v3330 = vpack.c.b16 %v3228, %v3225
        %v3331 = vpack.c.b16 %v3229, %v3226
        %v3332 = vpack.c.b16 %v3230, %v3227
        %v3333 = vpack.c.b16 %v3234, %v3231
        %v3334 = vpack.c.b16 %v3235, %v3232
        %v3335 = vpack.c.b16 %v3236, %v3233
        %v3336 = vpack.c.b16 %v3240, %v3237
        %v3337 = vpack.c.b16 %v3241, %v3238
        %v3338 = vpack.c.b16 %v3242, %v3239
        %v3436 = vlaneseq
        %v3437 = vshrl.u32 %v3436, 7
        %v3438 = vsub.s32 0, %v3437
        %v3439 = vrot.slane %v2922, %v3438
        %v3440 = vlaneseq
        %v3441 = vshrl.u32 %v3440, 7
        %v3442 = vsub.s32 1, %v3441
        %v3443 = vrot.slane %v2922, %v3442
        %v3444 = vlaneseq
        %v3445 = vshrl.u32 %v3444, 7
        %v3446 = vsub.s32 2, %v3445
        %v3447 = vrot.slane %v2922, %v3446
        %3451 = vmatprep.subr.bf16.mxu0 %v3265
        %3452 = vmatpush1.bf16.msra.mxu0 %v3264
        %3453 = vmatprep.subr.bf16.mxu0 %v3262
        %3454 = vmatpush1.bf16.msra.mxu0 %v3261
        %3455 = vmatprep.subr.bf16.mxu0 %v3259
        %3456 = vmatpush1.bf16.msra.mxu0 %v3258
        %3457 = vmatprep.subr.bf16.mxu0 %v3256
        %3458 = vmatpush1.bf16.msra.mxu0 %v3255
        %3459 = vmatprep.subr.bf16.mxu0 %v3253
        %3460 = vmatpush1.bf16.msra.mxu0 %v3252
        %3461 = vmatprep.subr.bf16.mxu0 %v3250
        %3462 = vmatpush1.bf16.msra.mxu0 %v3249
        %3463 = vmatprep.subr.bf16.mxu0 %v3247
        %3464 = vmatpush1.bf16.msra.mxu0 %v3246
        %3465 = vmatprep.subr.bf16.mxu0 %v3244
        %3466 = vmatpush1.bf16.msra.mxu0 %v3243
        %3467 = vmatprep.subr.bf16.mxu0 %v3289
        %3468 = vmatpush2.bf16.msra.mxu0 %v3288
        %3469 = vmatprep.subr.bf16.mxu0 %v3286
        %3470 = vmatpush2.bf16.msra.mxu0 %v3285
        %3471 = vmatprep.subr.bf16.mxu0 %v3283
        %3472 = vmatpush2.bf16.msra.mxu0 %v3282
        %3473 = vmatprep.subr.bf16.mxu0 %v3280
        %3474 = vmatpush2.bf16.msra.mxu0 %v3279
        %3475 = vmatprep.subr.bf16.mxu0 %v3277
        %3476 = vmatpush2.bf16.msra.mxu0 %v3276
        %3477 = vmatprep.subr.bf16.mxu0 %v3274
        %3478 = vmatpush2.bf16.msra.mxu0 %v3273
        %3479 = vmatprep.subr.bf16.mxu0 %v3271
        %3480 = vmatpush2.bf16.msra.mxu0 %v3270
        %3481 = vmatprep.subr.bf16.mxu0 %v3268
        %3482 = vmatpush2.bf16.msra.mxu0 %v3267
        %3483 = vmatprep.mubr.bf16.mxu0 %v2791
        %3484 = vmatmul.mubr.bf16.gmra.mxu0 %v2790
        %v3485 = vpop.f32.mrf.mxu0
        %v3486 = vadd.f32 %v3439, %v3485
        %v3487 = vpop.f32.mrf.mxu0
        %v3488 = vadd.f32 %v3443, %v3487
        %v3489 = vpop.f32.mrf.mxu0
        %v3490 = vpop.f32.mrf.mxu0
        %3491 = vdwg.mxu0
        %3492 = vmatprep.subr.bf16.mxu0 %v3313
        %3493 = vmatpush1.bf16.msra.mxu0 %v3312
        %3494 = vmatprep.subr.bf16.mxu0 %v3310
        %3495 = vmatpush1.bf16.msra.mxu0 %v3309
        %3496 = vmatprep.subr.bf16.mxu0 %v3307
        %3497 = vmatpush1.bf16.msra.mxu0 %v3306
        %3498 = vmatprep.subr.bf16.mxu0 %v3304
        %3499 = vmatpush1.bf16.msra.mxu0 %v3303
        %3500 = vmatprep.subr.bf16.mxu0 %v3301
        %3501 = vmatpush1.bf16.msra.mxu0 %v3300
        %3502 = vmatprep.subr.bf16.mxu0 %v3298
        %3503 = vmatpush1.bf16.msra.mxu0 %v3297
        %3504 = vmatprep.subr.bf16.mxu0 %v3295
        %3505 = vmatpush1.bf16.msra.mxu0 %v3294
        %3506 = vmatprep.subr.bf16.mxu0 %v3292
        %3507 = vmatpush1.bf16.msra.mxu0 %v3291
        %3508 = vmatprep.subr.bf16.mxu0 %v3337
        %3509 = vmatpush2.bf16.msra.mxu0 %v3336
        %3510 = vmatprep.subr.bf16.mxu0 %v3334
        %3511 = vmatpush2.bf16.msra.mxu0 %v3333
        %3512 = vmatprep.subr.bf16.mxu0 %v3331
        %3513 = vmatpush2.bf16.msra.mxu0 %v3330
        %3514 = vmatprep.subr.bf16.mxu0 %v3328
        %3515 = vmatpush2.bf16.msra.mxu0 %v3327
        %3516 = vmatprep.subr.bf16.mxu0 %v3325
        %3517 = vmatpush2.bf16.msra.mxu0 %v3324
        %3518 = vmatprep.subr.bf16.mxu0 %v3322
        %3519 = vmatpush2.bf16.msra.mxu0 %v3321
        %3520 = vmatprep.subr.bf16.mxu0 %v3319
        %3521 = vmatpush2.bf16.msra.mxu0 %v3318
        %3522 = vmatprep.subr.bf16.mxu0 %v3316
        %3523 = vmatpush2.bf16.msra.mxu0 %v3315
        %3524 = vmatprep.mubr.bf16.mxu0 %v2793
        %3525 = vmatmul.mubr.bf16.gmra.mxu0 %v2792
        %v3526 = vpop.f32.mrf.mxu0
        %v3527 = vadd.f32 %v3486, %v3526
        %v3528 = vpop.f32.mrf.mxu0
        %v3529 = vadd.f32 %v3488, %v3528
        %v3530 = vpop.f32.mrf.mxu0
        %v3531 = vpop.f32.mrf.mxu0
        %3532 = vdwg.mxu0
        %3533 = vmatprep.subr.bf16.mxu0 0
        %3534 = vmatpush1.bf16.msra.mxu0 %v3266
        %3535 = vmatprep.subr.bf16.mxu0 0
        %3536 = vmatpush1.bf16.msra.mxu0 %v3263
        %3537 = vmatprep.subr.bf16.mxu0 0
        %3538 = vmatpush1.bf16.msra.mxu0 %v3260
        %3539 = vmatprep.subr.bf16.mxu0 0
        %3540 = vmatpush1.bf16.msra.mxu0 %v3257
        %3541 = vmatprep.subr.bf16.mxu0 0
        %3542 = vmatpush1.bf16.msra.mxu0 %v3254
        %3543 = vmatprep.subr.bf16.mxu0 0
        %3544 = vmatpush1.bf16.msra.mxu0 %v3251
        %3545 = vmatprep.subr.bf16.mxu0 0
        %3546 = vmatpush1.bf16.msra.mxu0 %v3248
        %3547 = vmatprep.subr.bf16.mxu0 0
        %3548 = vmatpush1.bf16.msra.mxu0 %v3245
        %3549 = vmatprep.subr.bf16.mxu0 0
        %3550 = vmatpush2.bf16.msra.mxu0 %v3290
        %3551 = vmatprep.subr.bf16.mxu0 0
        %3552 = vmatpush2.bf16.msra.mxu0 %v3287
        %3553 = vmatprep.subr.bf16.mxu0 0
        %3554 = vmatpush2.bf16.msra.mxu0 %v3284
        %3555 = vmatprep.subr.bf16.mxu0 0
        %3556 = vmatpush2.bf16.msra.mxu0 %v3281
        %3557 = vmatprep.subr.bf16.mxu0 0
        %3558 = vmatpush2.bf16.msra.mxu0 %v3278
        %3559 = vmatprep.subr.bf16.mxu0 0
        %3560 = vmatpush2.bf16.msra.mxu0 %v3275
        %3561 = vmatprep.subr.bf16.mxu0 0
        %3562 = vmatpush2.bf16.msra.mxu0 %v3272
        %3563 = vmatprep.subr.bf16.mxu0 0
        %3564 = vmatpush2.bf16.msra.mxu0 %v3269
        %3565 = vmatprep.mubr.bf16.mxu0 %v2791
        %3566 = vmatmul.mubr.bf16.gmra.mxu0 %v2790
        %v3567 = vpop.f32.mrf.mxu0
        %v3568 = vadd.f32 %v3447, %v3567
        %v3569 = vpop.f32.mrf.mxu0
        %v3570 = vpop.f32.mrf.mxu0
        %v3571 = vpop.f32.mrf.mxu0
        %3572 = vdwg.mxu0
        %3573 = vmatprep.subr.bf16.mxu0 0
        %3574 = vmatpush1.bf16.msra.mxu0 %v3314
        %3575 = vmatprep.subr.bf16.mxu0 0
        %3576 = vmatpush1.bf16.msra.mxu0 %v3311
        %3577 = vmatprep.subr.bf16.mxu0 0
        %3578 = vmatpush1.bf16.msra.mxu0 %v3308
        %3579 = vmatprep.subr.bf16.mxu0 0
        %3580 = vmatpush1.bf16.msra.mxu0 %v3305
        %3581 = vmatprep.subr.bf16.mxu0 0
        %3582 = vmatpush1.bf16.msra.mxu0 %v3302
        %3583 = vmatprep.subr.bf16.mxu0 0
        %3584 = vmatpush1.bf16.msra.mxu0 %v3299
        %3585 = vmatprep.subr.bf16.mxu0 0
        %3586 = vmatpush1.bf16.msra.mxu0 %v3296
        %3587 = vmatprep.subr.bf16.mxu0 0
        %3588 = vmatpush1.bf16.msra.mxu0 %v3293
        %3589 = vmatprep.subr.bf16.mxu0 0
        %3590 = vmatpush2.bf16.msra.mxu0 %v3338
        %3591 = vmatprep.subr.bf16.mxu0 0
        %3592 = vmatpush2.bf16.msra.mxu0 %v3335
        %3593 = vmatprep.subr.bf16.mxu0 0
        %3594 = vmatpush2.bf16.msra.mxu0 %v3332
        %3595 = vmatprep.subr.bf16.mxu0 0
        %3596 = vmatpush2.bf16.msra.mxu0 %v3329
        %3597 = vmatprep.subr.bf16.mxu0 0
        %3598 = vmatpush2.bf16.msra.mxu0 %v3326
        %3599 = vmatprep.subr.bf16.mxu0 0
        %3600 = vmatpush2.bf16.msra.mxu0 %v3323
        %3601 = vmatprep.subr.bf16.mxu0 0
        %3602 = vmatpush2.bf16.msra.mxu0 %v3320
        %3603 = vmatprep.subr.bf16.mxu0 0
        %3604 = vmatpush2.bf16.msra.mxu0 %v3317
        %3605 = vmatprep.mubr.bf16.mxu0 %v2793
        %3606 = vmatmul.mubr.bf16.gmra.mxu0 %v2792
        %v3607 = vpop.f32.mrf.mxu0
        %v3608 = vadd.f32 %v3568, %v3607
        %v3609 = vpop.f32.mrf.mxu0
        %v3610 = vpop.f32.mrf.mxu0
        %v3611 = vpop.f32.mrf.mxu0
        %3612 = vdwg.mxu0
        %v3613 = vmax.f32 %v3527, 0.0
        %v3614 = vmax.f32 %v3529, 0.0
        %v3615 = vmax.f32 %v3608, 0.0
        %v3616 = vpack.c.bf16 %v2786, %v2786
        %v3617 = vpack.c.bf16 %v2787, %v2787
        %v3618 = vpack.c.bf16 %v2788, %v2788
        %v3619 = vpack.c.bf16 %v2789, %v2789
        %v3620 = vld [vmem:[#allocation8] sm:$0xff]
        %v3621 = vld [vmem:[#allocation8 + $0x8] sm:$0xf]
        %v3622 = vld [vmem:[#allocation8 + $0xc] sm:$0xff]
        %v3623 = vld [vmem:[#allocation8 + $0x14] sm:$0xf]
        %v3624 = vld [vmem:[#allocation8 + $0x18] sm:$0xff]
        %v3625 = vld [vmem:[#allocation8 + $0x20] sm:$0xf]
        %v3626 = vld [vmem:[#allocation8 + $0x24] sm:$0xff]
        %v3627 = vld [vmem:[#allocation8 + $0x2c] sm:$0xf]
        %v3628 = vld [vmem:[#allocation8 + $0x30] sm:$0xff]
        %v3629 = vld [vmem:[#allocation8 + $0x38] sm:$0xf]
        %v3630 = vld [vmem:[#allocation8 + $0x3c] sm:$0xff]
        %v3631 = vld [vmem:[#allocation8 + $0x44] sm:$0xf]
        %v3632 = vld [vmem:[#allocation8 + $0x48] sm:$0xff]
        %v3633 = vld [vmem:[#allocation8 + $0x50] sm:$0xf]
        %v3634 = vld [vmem:[#allocation8 + $0x54] sm:$0xff]
        %v3635 = vld [vmem:[#allocation8 + $0x5c] sm:$0xf]
        %v3636 = vld [vmem:[#allocation8 + $0x60] sm:$0xff]
        %v3637 = vld [vmem:[#allocation8 + $0x68] sm:$0xf]
        %v3638 = vld [vmem:[#allocation8 + $0x6c] sm:$0xff]
        %v3639 = vld [vmem:[#allocation8 + $0x74] sm:$0xf]
        %v3640 = vld [vmem:[#allocation8 + $0x78] sm:$0xff]
        %v3641 = vld [vmem:[#allocation8 + $0x80] sm:$0xf]
        %v3642 = vld [vmem:[#allocation8 + $0x84] sm:$0xff]
        %v3643 = vld [vmem:[#allocation8 + $0x8c] sm:$0xf]
        %v3644 = vld [vmem:[#allocation8 + $0x90] sm:$0xff]
        %v3645 = vld [vmem:[#allocation8 + $0x98] sm:$0xf]
        %v3646 = vld [vmem:[#allocation8 + $0x9c] sm:$0xff]
        %v3647 = vld [vmem:[#allocation8 + $0xa4] sm:$0xf]
        %v3648 = vld [vmem:[#allocation8 + $0xa8] sm:$0xff]
        %v3649 = vld [vmem:[#allocation8 + $0xb0] sm:$0xf]
        %v3650 = vld [vmem:[#allocation8 + $0xb4] sm:$0xff]
        %v3651 = vld [vmem:[#allocation8 + $0xbc] sm:$0xf]
        %v3652 = vld [vmem:[#allocation8 + $0xc0] sm:$0xff]
        %v3653 = vld [vmem:[#allocation8 + $0xc8] sm:$0xf]
        %v3654 = vld [vmem:[#allocation8 + $0xcc] sm:$0xff]
        %v3655 = vld [vmem:[#allocation8 + $0xd4] sm:$0xf]
        %v3656 = vld [vmem:[#allocation8 + $0xd8] sm:$0xff]
        %v3657 = vld [vmem:[#allocation8 + $0xe0] sm:$0xf]
        %v3658 = vld [vmem:[#allocation8 + $0xe4] sm:$0xff]
        %v3659 = vld [vmem:[#allocation8 + $0xec] sm:$0xf]
        %v3660 = vld [vmem:[#allocation8 + $0xf0] sm:$0xff]
        %v3661 = vld [vmem:[#allocation8 + $0xf8] sm:$0xf]
        %v3662 = vld [vmem:[#allocation8 + $0xfc] sm:$0xff]
        %v3663 = vld [vmem:[#allocation8 + $0x104] sm:$0xf]
        %v3664 = vld [vmem:[#allocation8 + $0x108] sm:$0xff]
        %v3665 = vld [vmem:[#allocation8 + $0x110] sm:$0xf]
        %v3666 = vld [vmem:[#allocation8 + $0x114] sm:$0xff]
        %v3667 = vld [vmem:[#allocation8 + $0x11c] sm:$0xf]
        %v3668 = vld [vmem:[#allocation8 + $0x120] sm:$0xff]
        %v3669 = vld [vmem:[#allocation8 + $0x128] sm:$0xf]
        %v3670 = vld [vmem:[#allocation8 + $0x12c] sm:$0xff]
        %v3671 = vld [vmem:[#allocation8 + $0x134] sm:$0xf]
        %v3672 = vld [vmem:[#allocation8 + $0x138] sm:$0xff]
        %v3673 = vld [vmem:[#allocation8 + $0x140] sm:$0xf]
        %v3674 = vld [vmem:[#allocation8 + $0x144] sm:$0xff]
        %v3675 = vld [vmem:[#allocation8 + $0x14c] sm:$0xf]
        %v3676 = vld [vmem:[#allocation8 + $0x150] sm:$0xff]
        %v3677 = vld [vmem:[#allocation8 + $0x158] sm:$0xf]
        %v3678 = vld [vmem:[#allocation8 + $0x15c] sm:$0xff]
        %v3679 = vld [vmem:[#allocation8 + $0x164] sm:$0xf]
        %v3680 = vld [vmem:[#allocation8 + $0x168] sm:$0xff]
        %v3681 = vld [vmem:[#allocation8 + $0x170] sm:$0xf]
        %v3682 = vld [vmem:[#allocation8 + $0x174] sm:$0xff]
        %v3683 = vld [vmem:[#allocation8 + $0x17c] sm:$0xf]
        %v3684 = vld [vmem:[#allocation8 + $0x180] sm:$0xff]
        %v3685 = vld [vmem:[#allocation8 + $0x188] sm:$0xf]
        %v3686 = vld [vmem:[#allocation8 + $0x18c] sm:$0xff]
        %v3687 = vld [vmem:[#allocation8 + $0x194] sm:$0xf]
        %v3688 = vld [vmem:[#allocation8 + $0x198] sm:$0xff]
        %v3689 = vld [vmem:[#allocation8 + $0x1a0] sm:$0xf]
        %v3690 = vld [vmem:[#allocation8 + $0x1a4] sm:$0xff]
        %v3691 = vld [vmem:[#allocation8 + $0x1ac] sm:$0xf]
        %v3692 = vld [vmem:[#allocation8 + $0x1b0] sm:$0xff]
        %v3693 = vld [vmem:[#allocation8 + $0x1b8] sm:$0xf]
        %v3694 = vld [vmem:[#allocation8 + $0x1bc] sm:$0xff]
        %v3695 = vld [vmem:[#allocation8 + $0x1c4] sm:$0xf]
        %v3696 = vld [vmem:[#allocation8 + $0x1c8] sm:$0xff]
        %v3697 = vld [vmem:[#allocation8 + $0x1d0] sm:$0xf]
        %v3698 = vld [vmem:[#allocation8 + $0x1d4] sm:$0xff]
        %v3699 = vld [vmem:[#allocation8 + $0x1dc] sm:$0xf]
        %v3700 = vld [vmem:[#allocation8 + $0x1e0] sm:$0xff]
        %v3701 = vld [vmem:[#allocation8 + $0x1e8] sm:$0xf]
        %v3702 = vld [vmem:[#allocation8 + $0x1ec] sm:$0xff]
        %v3703 = vld [vmem:[#allocation8 + $0x1f4] sm:$0xf]
        %v3704 = vld [vmem:[#allocation8 + $0x1f8] sm:$0xff]
        %v3705 = vld [vmem:[#allocation8 + $0x200] sm:$0xf]
        %v3706 = vld [vmem:[#allocation8 + $0x204] sm:$0xff]
        %v3707 = vld [vmem:[#allocation8 + $0x20c] sm:$0xf]
        %v3708 = vld [vmem:[#allocation8 + $0x210] sm:$0xff]
        %v3709 = vld [vmem:[#allocation8 + $0x218] sm:$0xf]
        %v3710 = vld [vmem:[#allocation8 + $0x21c] sm:$0xff]
        %v3711 = vld [vmem:[#allocation8 + $0x224] sm:$0xf]
        %v3712 = vld [vmem:[#allocation8 + $0x228] sm:$0xff]
        %v3713 = vld [vmem:[#allocation8 + $0x230] sm:$0xf]
        %v3714 = vld [vmem:[#allocation8 + $0x234] sm:$0xff]
        %v3715 = vld [vmem:[#allocation8 + $0x23c] sm:$0xf]
        %v3716 = vld [vmem:[#allocation8 + $0x240] sm:$0xff]
        %v3717 = vld [vmem:[#allocation8 + $0x248] sm:$0xf]
        %v3718 = vld [vmem:[#allocation8 + $0x24c] sm:$0xff]
        %v3719 = vld [vmem:[#allocation8 + $0x254] sm:$0xf]
        %v3720 = vld [vmem:[#allocation8 + $0x258] sm:$0xff]
        %v3721 = vld [vmem:[#allocation8 + $0x260] sm:$0xf]
        %v3722 = vld [vmem:[#allocation8 + $0x264] sm:$0xff]
        %v3723 = vld [vmem:[#allocation8 + $0x26c] sm:$0xf]
        %v3724 = vld [vmem:[#allocation8 + $0x270] sm:$0xff]
        %v3725 = vld [vmem:[#allocation8 + $0x278] sm:$0xf]
        %v3726 = vld [vmem:[#allocation8 + $0x27c] sm:$0xff]
        %v3727 = vld [vmem:[#allocation8 + $0x284] sm:$0xf]
        %v3728 = vld [vmem:[#allocation8 + $0x288] sm:$0xff]
        %v3729 = vld [vmem:[#allocation8 + $0x290] sm:$0xf]
        %v3730 = vld [vmem:[#allocation8 + $0x294] sm:$0xff]
        %v3731 = vld [vmem:[#allocation8 + $0x29c] sm:$0xf]
        %v3732 = vld [vmem:[#allocation8 + $0x2a0] sm:$0xff]
        %v3733 = vld [vmem:[#allocation8 + $0x2a8] sm:$0xf]
        %v3734 = vld [vmem:[#allocation8 + $0x2ac] sm:$0xff]
        %v3735 = vld [vmem:[#allocation8 + $0x2b4] sm:$0xf]
        %v3736 = vld [vmem:[#allocation8 + $0x2b8] sm:$0xff]
        %v3737 = vld [vmem:[#allocation8 + $0x2c0] sm:$0xf]
        %v3738 = vld [vmem:[#allocation8 + $0x2c4] sm:$0xff]
        %v3739 = vld [vmem:[#allocation8 + $0x2cc] sm:$0xf]
        %v3740 = vld [vmem:[#allocation8 + $0x2d0] sm:$0xff]
        %v3741 = vld [vmem:[#allocation8 + $0x2d8] sm:$0xf]
        %v3742 = vld [vmem:[#allocation8 + $0x2dc] sm:$0xff]
        %v3743 = vld [vmem:[#allocation8 + $0x2e4] sm:$0xf]
        %v3744 = vld [vmem:[#allocation8 + $0x2e8] sm:$0xff]
        %v3745 = vld [vmem:[#allocation8 + $0x2f0] sm:$0xf]
        %v3746 = vld [vmem:[#allocation8 + $0x2f4] sm:$0xff]
        %v3747 = vld [vmem:[#allocation8 + $0x2fc] sm:$0xf]
        %v3748 = vld [vmem:[%s12] sm:$0x7]
        %v3877 = vunpack.c.l.b16 %v3620
        %v3878 = vunpack.c.h.b16 %v3620
        %v3879 = vunpack.c.l.b16 %v3621
        %v3880 = vunpack.c.l.b16 %v3622
        %v3881 = vunpack.c.h.b16 %v3622
        %v3882 = vunpack.c.l.b16 %v3623
        %v3883 = vunpack.c.l.b16 %v3624
        %v3884 = vunpack.c.h.b16 %v3624
        %v3885 = vunpack.c.l.b16 %v3625
        %v3886 = vunpack.c.l.b16 %v3626
        %v3887 = vunpack.c.h.b16 %v3626
        %v3888 = vunpack.c.l.b16 %v3627
        %v3889 = vunpack.c.l.b16 %v3628
        %v3890 = vunpack.c.h.b16 %v3628
        %v3891 = vunpack.c.l.b16 %v3629
        %v3892 = vunpack.c.l.b16 %v3630
        %v3893 = vunpack.c.h.b16 %v3630
        %v3894 = vunpack.c.l.b16 %v3631
        %v3895 = vunpack.c.l.b16 %v3632
        %v3896 = vunpack.c.h.b16 %v3632
        %v3897 = vunpack.c.l.b16 %v3633
        %v3898 = vunpack.c.l.b16 %v3634
        %v3899 = vunpack.c.h.b16 %v3634
        %v3900 = vunpack.c.l.b16 %v3635
        %v3901 = vunpack.c.l.b16 %v3636
        %v3902 = vunpack.c.h.b16 %v3636
        %v3903 = vunpack.c.l.b16 %v3637
        %v3904 = vunpack.c.l.b16 %v3638
        %v3905 = vunpack.c.h.b16 %v3638
        %v3906 = vunpack.c.l.b16 %v3639
        %v3907 = vunpack.c.l.b16 %v3640
        %v3908 = vunpack.c.h.b16 %v3640
        %v3909 = vunpack.c.l.b16 %v3641
        %v3910 = vunpack.c.l.b16 %v3642
        %v3911 = vunpack.c.h.b16 %v3642
        %v3912 = vunpack.c.l.b16 %v3643
        %v3913 = vunpack.c.l.b16 %v3644
        %v3914 = vunpack.c.h.b16 %v3644
        %v3915 = vunpack.c.l.b16 %v3645
        %v3916 = vunpack.c.l.b16 %v3646
        %v3917 = vunpack.c.h.b16 %v3646
        %v3918 = vunpack.c.l.b16 %v3647
        %v3919 = vunpack.c.l.b16 %v3648
        %v3920 = vunpack.c.h.b16 %v3648
        %v3921 = vunpack.c.l.b16 %v3649
        %v3922 = vunpack.c.l.b16 %v3650
        %v3923 = vunpack.c.h.b16 %v3650
        %v3924 = vunpack.c.l.b16 %v3651
        %v3925 = vunpack.c.l.b16 %v3652
        %v3926 = vunpack.c.h.b16 %v3652
        %v3927 = vunpack.c.l.b16 %v3653
        %v3928 = vunpack.c.l.b16 %v3654
        %v3929 = vunpack.c.h.b16 %v3654
        %v3930 = vunpack.c.l.b16 %v3655
        %v3931 = vunpack.c.l.b16 %v3656
        %v3932 = vunpack.c.h.b16 %v3656
        %v3933 = vunpack.c.l.b16 %v3657
        %v3934 = vunpack.c.l.b16 %v3658
        %v3935 = vunpack.c.h.b16 %v3658
        %v3936 = vunpack.c.l.b16 %v3659
        %v3937 = vunpack.c.l.b16 %v3660
        %v3938 = vunpack.c.h.b16 %v3660
        %v3939 = vunpack.c.l.b16 %v3661
        %v3940 = vunpack.c.l.b16 %v3662
        %v3941 = vunpack.c.h.b16 %v3662
        %v3942 = vunpack.c.l.b16 %v3663
        %v3943 = vunpack.c.l.b16 %v3664
        %v3944 = vunpack.c.h.b16 %v3664
        %v3945 = vunpack.c.l.b16 %v3665
        %v3946 = vunpack.c.l.b16 %v3666
        %v3947 = vunpack.c.h.b16 %v3666
        %v3948 = vunpack.c.l.b16 %v3667
        %v3949 = vunpack.c.l.b16 %v3668
        %v3950 = vunpack.c.h.b16 %v3668
        %v3951 = vunpack.c.l.b16 %v3669
        %v3952 = vunpack.c.l.b16 %v3670
        %v3953 = vunpack.c.h.b16 %v3670
        %v3954 = vunpack.c.l.b16 %v3671
        %v3955 = vunpack.c.l.b16 %v3672
        %v3956 = vunpack.c.h.b16 %v3672
        %v3957 = vunpack.c.l.b16 %v3673
        %v3958 = vunpack.c.l.b16 %v3674
        %v3959 = vunpack.c.h.b16 %v3674
        %v3960 = vunpack.c.l.b16 %v3675
        %v3961 = vunpack.c.l.b16 %v3676
        %v3962 = vunpack.c.h.b16 %v3676
        %v3963 = vunpack.c.l.b16 %v3677
        %v3964 = vunpack.c.l.b16 %v3678
        %v3965 = vunpack.c.h.b16 %v3678
        %v3966 = vunpack.c.l.b16 %v3679
        %v3967 = vunpack.c.l.b16 %v3680
        %v3968 = vunpack.c.h.b16 %v3680
        %v3969 = vunpack.c.l.b16 %v3681
        %v3970 = vunpack.c.l.b16 %v3682
        %v3971 = vunpack.c.h.b16 %v3682
        %v3972 = vunpack.c.l.b16 %v3683
        %v3973 = vunpack.c.l.b16 %v3684
        %v3974 = vunpack.c.h.b16 %v3684
        %v3975 = vunpack.c.l.b16 %v3685
        %v3976 = vunpack.c.l.b16 %v3686
        %v3977 = vunpack.c.h.b16 %v3686
        %v3978 = vunpack.c.l.b16 %v3687
        %v3979 = vunpack.c.l.b16 %v3688
        %v3980 = vunpack.c.h.b16 %v3688
        %v3981 = vunpack.c.l.b16 %v3689
        %v3982 = vunpack.c.l.b16 %v3690
        %v3983 = vunpack.c.h.b16 %v3690
        %v3984 = vunpack.c.l.b16 %v3691
        %v3985 = vunpack.c.l.b16 %v3692
        %v3986 = vunpack.c.h.b16 %v3692
        %v3987 = vunpack.c.l.b16 %v3693
        %v3988 = vunpack.c.l.b16 %v3694
        %v3989 = vunpack.c.h.b16 %v3694
        %v3990 = vunpack.c.l.b16 %v3695
        %v3991 = vunpack.c.l.b16 %v3696
        %v3992 = vunpack.c.h.b16 %v3696
        %v3993 = vunpack.c.l.b16 %v3697
        %v3994 = vunpack.c.l.b16 %v3698
        %v3995 = vunpack.c.h.b16 %v3698
        %v3996 = vunpack.c.l.b16 %v3699
        %v3997 = vunpack.c.l.b16 %v3700
        %v3998 = vunpack.c.h.b16 %v3700
        %v3999 = vunpack.c.l.b16 %v3701
        %v4000 = vunpack.c.l.b16 %v3702
        %v4001 = vunpack.c.h.b16 %v3702
        %v4002 = vunpack.c.l.b16 %v3703
        %v4003 = vunpack.c.l.b16 %v3704
        %v4004 = vunpack.c.h.b16 %v3704
        %v4005 = vunpack.c.l.b16 %v3705
        %v4006 = vunpack.c.l.b16 %v3706
        %v4007 = vunpack.c.h.b16 %v3706
        %v4008 = vunpack.c.l.b16 %v3707
        %v4009 = vunpack.c.l.b16 %v3708
        %v4010 = vunpack.c.h.b16 %v3708
        %v4011 = vunpack.c.l.b16 %v3709
        %v4012 = vunpack.c.l.b16 %v3710
        %v4013 = vunpack.c.h.b16 %v3710
        %v4014 = vunpack.c.l.b16 %v3711
        %v4015 = vunpack.c.l.b16 %v3712
        %v4016 = vunpack.c.h.b16 %v3712
        %v4017 = vunpack.c.l.b16 %v3713
        %v4018 = vunpack.c.l.b16 %v3714
        %v4019 = vunpack.c.h.b16 %v3714
        %v4020 = vunpack.c.l.b16 %v3715
        %v4021 = vunpack.c.l.b16 %v3716
        %v4022 = vunpack.c.h.b16 %v3716
        %v4023 = vunpack.c.l.b16 %v3717
        %v4024 = vunpack.c.l.b16 %v3718
        %v4025 = vunpack.c.h.b16 %v3718
        %v4026 = vunpack.c.l.b16 %v3719
        %v4027 = vunpack.c.l.b16 %v3720
        %v4028 = vunpack.c.h.b16 %v3720
        %v4029 = vunpack.c.l.b16 %v3721
        %v4030 = vunpack.c.l.b16 %v3722
        %v4031 = vunpack.c.h.b16 %v3722
        %v4032 = vunpack.c.l.b16 %v3723
        %v4033 = vunpack.c.l.b16 %v3724
        %v4034 = vunpack.c.h.b16 %v3724
        %v4035 = vunpack.c.l.b16 %v3725
        %v4036 = vunpack.c.l.b16 %v3726
        %v4037 = vunpack.c.h.b16 %v3726
        %v4038 = vunpack.c.l.b16 %v3727
        %v4039 = vunpack.c.l.b16 %v3728
        %v4040 = vunpack.c.h.b16 %v3728
        %v4041 = vunpack.c.l.b16 %v3729
        %v4042 = vunpack.c.l.b16 %v3730
        %v4043 = vunpack.c.h.b16 %v3730
        %v4044 = vunpack.c.l.b16 %v3731
        %v4045 = vunpack.c.l.b16 %v3732
        %v4046 = vunpack.c.h.b16 %v3732
        %v4047 = vunpack.c.l.b16 %v3733
        %v4048 = vunpack.c.l.b16 %v3734
        %v4049 = vunpack.c.h.b16 %v3734
        %v4050 = vunpack.c.l.b16 %v3735
        %v4051 = vunpack.c.l.b16 %v3736
        %v4052 = vunpack.c.h.b16 %v3736
        %v4053 = vunpack.c.l.b16 %v3737
        %v4054 = vunpack.c.l.b16 %v3738
        %v4055 = vunpack.c.h.b16 %v3738
        %v4056 = vunpack.c.l.b16 %v3739
        %v4057 = vunpack.c.l.b16 %v3740
        %v4058 = vunpack.c.h.b16 %v3740
        %v4059 = vunpack.c.l.b16 %v3741
        %v4060 = vunpack.c.l.b16 %v3742
        %v4061 = vunpack.c.h.b16 %v3742
        %v4062 = vunpack.c.l.b16 %v3743
        %v4063 = vunpack.c.l.b16 %v3744
        %v4064 = vunpack.c.h.b16 %v3744
        %v4065 = vunpack.c.l.b16 %v3745
        %v4066 = vunpack.c.l.b16 %v3746
        %v4067 = vunpack.c.h.b16 %v3746
        %v4068 = vunpack.c.l.b16 %v3747
        %v4069 = vpack.c.b16 %v3880, %v3877
        %v4070 = vpack.c.b16 %v3881, %v3878
        %v4071 = vpack.c.b16 %v3882, %v3879
        %v4072 = vpack.c.b16 %v3886, %v3883
        %v4073 = vpack.c.b16 %v3887, %v3884
        %v4074 = vpack.c.b16 %v3888, %v3885
        %v4075 = vpack.c.b16 %v3892, %v3889
        %v4076 = vpack.c.b16 %v3893, %v3890
        %v4077 = vpack.c.b16 %v3894, %v3891
        %v4078 = vpack.c.b16 %v3898, %v3895
        %v4079 = vpack.c.b16 %v3899, %v3896
        %v4080 = vpack.c.b16 %v3900, %v3897
        %v4081 = vpack.c.b16 %v3904, %v3901
        %v4082 = vpack.c.b16 %v3905, %v3902
        %v4083 = vpack.c.b16 %v3906, %v3903
        %v4084 = vpack.c.b16 %v3910, %v3907
        %v4085 = vpack.c.b16 %v3911, %v3908
        %v4086 = vpack.c.b16 %v3912, %v3909
        %v4087 = vpack.c.b16 %v3916, %v3913
        %v4088 = vpack.c.b16 %v3917, %v3914
        %v4089 = vpack.c.b16 %v3918, %v3915
        %v4090 = vpack.c.b16 %v3922, %v3919
        %v4091 = vpack.c.b16 %v3923, %v3920
        %v4092 = vpack.c.b16 %v3924, %v3921
        %v4093 = vpack.c.b16 %v3928, %v3925
        %v4094 = vpack.c.b16 %v3929, %v3926
        %v4095 = vpack.c.b16 %v3930, %v3927
        %v4096 = vpack.c.b16 %v3934, %v3931
        %v4097 = vpack.c.b16 %v3935, %v3932
        %v4098 = vpack.c.b16 %v3936, %v3933
        %v4099 = vpack.c.b16 %v3940, %v3937
        %v4100 = vpack.c.b16 %v3941, %v3938
        %v4101 = vpack.c.b16 %v3942, %v3939
        %v4102 = vpack.c.b16 %v3946, %v3943
        %v4103 = vpack.c.b16 %v3947, %v3944
        %v4104 = vpack.c.b16 %v3948, %v3945
        %v4105 = vpack.c.b16 %v3952, %v3949
        %v4106 = vpack.c.b16 %v3953, %v3950
        %v4107 = vpack.c.b16 %v3954, %v3951
        %v4108 = vpack.c.b16 %v3958, %v3955
        %v4109 = vpack.c.b16 %v3959, %v3956
        %v4110 = vpack.c.b16 %v3960, %v3957
        %v4111 = vpack.c.b16 %v3964, %v3961
        %v4112 = vpack.c.b16 %v3965, %v3962
        %v4113 = vpack.c.b16 %v3966, %v3963
        %v4114 = vpack.c.b16 %v3970, %v3967
        %v4115 = vpack.c.b16 %v3971, %v3968
        %v4116 = vpack.c.b16 %v3972, %v3969
        %v4117 = vpack.c.b16 %v3976, %v3973
        %v4118 = vpack.c.b16 %v3977, %v3974
        %v4119 = vpack.c.b16 %v3978, %v3975
        %v4120 = vpack.c.b16 %v3982, %v3979
        %v4121 = vpack.c.b16 %v3983, %v3980
        %v4122 = vpack.c.b16 %v3984, %v3981
        %v4123 = vpack.c.b16 %v3988, %v3985
        %v4124 = vpack.c.b16 %v3989, %v3986
        %v4125 = vpack.c.b16 %v3990, %v3987
        %v4126 = vpack.c.b16 %v3994, %v3991
        %v4127 = vpack.c.b16 %v3995, %v3992
        %v4128 = vpack.c.b16 %v3996, %v3993
        %v4129 = vpack.c.b16 %v4000, %v3997
        %v4130 = vpack.c.b16 %v4001, %v3998
        %v4131 = vpack.c.b16 %v4002, %v3999
        %v4132 = vpack.c.b16 %v4006, %v4003
        %v4133 = vpack.c.b16 %v4007, %v4004
        %v4134 = vpack.c.b16 %v4008, %v4005
        %v4135 = vpack.c.b16 %v4012, %v4009
        %v4136 = vpack.c.b16 %v4013, %v4010
        %v4137 = vpack.c.b16 %v4014, %v4011
        %v4138 = vpack.c.b16 %v4018, %v4015
        %v4139 = vpack.c.b16 %v4019, %v4016
        %v4140 = vpack.c.b16 %v4020, %v4017
        %v4141 = vpack.c.b16 %v4024, %v4021
        %v4142 = vpack.c.b16 %v4025, %v4022
        %v4143 = vpack.c.b16 %v4026, %v4023
        %v4144 = vpack.c.b16 %v4030, %v4027
        %v4145 = vpack.c.b16 %v4031, %v4028
        %v4146 = vpack.c.b16 %v4032, %v4029
        %v4147 = vpack.c.b16 %v4036, %v4033
        %v4148 = vpack.c.b16 %v4037, %v4034
        %v4149 = vpack.c.b16 %v4038, %v4035
        %v4150 = vpack.c.b16 %v4042, %v4039
        %v4151 = vpack.c.b16 %v4043, %v4040
        %v4152 = vpack.c.b16 %v4044, %v4041
        %v4153 = vpack.c.b16 %v4048, %v4045
        %v4154 = vpack.c.b16 %v4049, %v4046
        %v4155 = vpack.c.b16 %v4050, %v4047
        %v4156 = vpack.c.b16 %v4054, %v4051
        %v4157 = vpack.c.b16 %v4055, %v4052
        %v4158 = vpack.c.b16 %v4056, %v4053
        %v4159 = vpack.c.b16 %v4060, %v4057
        %v4160 = vpack.c.b16 %v4061, %v4058
        %v4161 = vpack.c.b16 %v4062, %v4059
        %v4162 = vpack.c.b16 %v4066, %v4063
        %v4163 = vpack.c.b16 %v4067, %v4064
        %v4164 = vpack.c.b16 %v4068, %v4065
        %v4262 = vlaneseq
        %v4263 = vshrl.u32 %v4262, 7
        %v4264 = vsub.s32 0, %v4263
        %v4265 = vrot.slane %v3748, %v4264
        %v4266 = vlaneseq
        %v4267 = vshrl.u32 %v4266, 7
        %v4268 = vsub.s32 1, %v4267
        %v4269 = vrot.slane %v3748, %v4268
        %v4270 = vlaneseq
        %v4271 = vshrl.u32 %v4270, 7
        %v4272 = vsub.s32 2, %v4271
        %v4273 = vrot.slane %v3748, %v4272
        %4277 = vmatprep.subr.bf16.mxu0 %v4091
        %4278 = vmatpush1.bf16.msra.mxu0 %v4090
        %4279 = vmatprep.subr.bf16.mxu0 %v4088
        %4280 = vmatpush1.bf16.msra.mxu0 %v4087
        %4281 = vmatprep.subr.bf16.mxu0 %v4085
        %4282 = vmatpush1.bf16.msra.mxu0 %v4084
        %4283 = vmatprep.subr.bf16.mxu0 %v4082
        %4284 = vmatpush1.bf16.msra.mxu0 %v4081
        %4285 = vmatprep.subr.bf16.mxu0 %v4079
        %4286 = vmatpush1.bf16.msra.mxu0 %v4078
        %4287 = vmatprep.subr.bf16.mxu0 %v4076
        %4288 = vmatpush1.bf16.msra.mxu0 %v4075
        %4289 = vmatprep.subr.bf16.mxu0 %v4073
        %4290 = vmatpush1.bf16.msra.mxu0 %v4072
        %4291 = vmatprep.subr.bf16.mxu0 %v4070
        %4292 = vmatpush1.bf16.msra.mxu0 %v4069
        %4293 = vmatprep.subr.bf16.mxu0 %v4115
        %4294 = vmatpush2.bf16.msra.mxu0 %v4114
        %4295 = vmatprep.subr.bf16.mxu0 %v4112
        %4296 = vmatpush2.bf16.msra.mxu0 %v4111
        %4297 = vmatprep.subr.bf16.mxu0 %v4109
        %4298 = vmatpush2.bf16.msra.mxu0 %v4108
        %4299 = vmatprep.subr.bf16.mxu0 %v4106
        %4300 = vmatpush2.bf16.msra.mxu0 %v4105
        %4301 = vmatprep.subr.bf16.mxu0 %v4103
        %4302 = vmatpush2.bf16.msra.mxu0 %v4102
        %4303 = vmatprep.subr.bf16.mxu0 %v4100
        %4304 = vmatpush2.bf16.msra.mxu0 %v4099
        %4305 = vmatprep.subr.bf16.mxu0 %v4097
        %4306 = vmatpush2.bf16.msra.mxu0 %v4096
        %4307 = vmatprep.subr.bf16.mxu0 %v4094
        %4308 = vmatpush2.bf16.msra.mxu0 %v4093
        %4309 = vmatprep.mubr.bf16.mxu0 %v3617
        %4310 = vmatmul.mubr.bf16.gmra.mxu0 %v3616
        %v4311 = vpop.f32.mrf.mxu0
        %v4312 = vadd.f32 %v4265, %v4311
        %v4313 = vpop.f32.mrf.mxu0
        %v4314 = vadd.f32 %v4269, %v4313
        %v4315 = vpop.f32.mrf.mxu0
        %v4316 = vpop.f32.mrf.mxu0
        %4317 = vdwg.mxu0
        %4318 = vmatprep.subr.bf16.mxu0 %v4139
        %4319 = vmatpush1.bf16.msra.mxu0 %v4138
        %4320 = vmatprep.subr.bf16.mxu0 %v4136
        %4321 = vmatpush1.bf16.msra.mxu0 %v4135
        %4322 = vmatprep.subr.bf16.mxu0 %v4133
        %4323 = vmatpush1.bf16.msra.mxu0 %v4132
        %4324 = vmatprep.subr.bf16.mxu0 %v4130
        %4325 = vmatpush1.bf16.msra.mxu0 %v4129
        %4326 = vmatprep.subr.bf16.mxu0 %v4127
        %4327 = vmatpush1.bf16.msra.mxu0 %v4126
        %4328 = vmatprep.subr.bf16.mxu0 %v4124
        %4329 = vmatpush1.bf16.msra.mxu0 %v4123
        %4330 = vmatprep.subr.bf16.mxu0 %v4121
        %4331 = vmatpush1.bf16.msra.mxu0 %v4120
        %4332 = vmatprep.subr.bf16.mxu0 %v4118
        %4333 = vmatpush1.bf16.msra.mxu0 %v4117
        %4334 = vmatprep.subr.bf16.mxu0 %v4163
        %4335 = vmatpush2.bf16.msra.mxu0 %v4162
        %4336 = vmatprep.subr.bf16.mxu0 %v4160
        %4337 = vmatpush2.bf16.msra.mxu0 %v4159
        %4338 = vmatprep.subr.bf16.mxu0 %v4157
        %4339 = vmatpush2.bf16.msra.mxu0 %v4156
        %4340 = vmatprep.subr.bf16.mxu0 %v4154
        %4341 = vmatpush2.bf16.msra.mxu0 %v4153
        %4342 = vmatprep.subr.bf16.mxu0 %v4151
        %4343 = vmatpush2.bf16.msra.mxu0 %v4150
        %4344 = vmatprep.subr.bf16.mxu0 %v4148
        %4345 = vmatpush2.bf16.msra.mxu0 %v4147
        %4346 = vmatprep.subr.bf16.mxu0 %v4145
        %4347 = vmatpush2.bf16.msra.mxu0 %v4144
        %4348 = vmatprep.subr.bf16.mxu0 %v4142
        %4349 = vmatpush2.bf16.msra.mxu0 %v4141
        %4350 = vmatprep.mubr.bf16.mxu0 %v3619
        %4351 = vmatmul.mubr.bf16.gmra.mxu0 %v3618
        %v4352 = vpop.f32.mrf.mxu0
        %v4353 = vadd.f32 %v4312, %v4352
        %v4354 = vpop.f32.mrf.mxu0
        %v4355 = vadd.f32 %v4314, %v4354
        %v4356 = vpop.f32.mrf.mxu0
        %v4357 = vpop.f32.mrf.mxu0
        %4358 = vdwg.mxu0
        %4359 = vmatprep.subr.bf16.mxu0 0
        %4360 = vmatpush1.bf16.msra.mxu0 %v4092
        %4361 = vmatprep.subr.bf16.mxu0 0
        %4362 = vmatpush1.bf16.msra.mxu0 %v4089
        %4363 = vmatprep.subr.bf16.mxu0 0
        %4364 = vmatpush1.bf16.msra.mxu0 %v4086
        %4365 = vmatprep.subr.bf16.mxu0 0
        %4366 = vmatpush1.bf16.msra.mxu0 %v4083
        %4367 = vmatprep.subr.bf16.mxu0 0
        %4368 = vmatpush1.bf16.msra.mxu0 %v4080
        %4369 = vmatprep.subr.bf16.mxu0 0
        %4370 = vmatpush1.bf16.msra.mxu0 %v4077
        %4371 = vmatprep.subr.bf16.mxu0 0
        %4372 = vmatpush1.bf16.msra.mxu0 %v4074
        %4373 = vmatprep.subr.bf16.mxu0 0
        %4374 = vmatpush1.bf16.msra.mxu0 %v4071
        %4375 = vmatprep.subr.bf16.mxu0 0
        %4376 = vmatpush2.bf16.msra.mxu0 %v4116
        %4377 = vmatprep.subr.bf16.mxu0 0
        %4378 = vmatpush2.bf16.msra.mxu0 %v4113
        %4379 = vmatprep.subr.bf16.mxu0 0
        %4380 = vmatpush2.bf16.msra.mxu0 %v4110
        %4381 = vmatprep.subr.bf16.mxu0 0
        %4382 = vmatpush2.bf16.msra.mxu0 %v4107
        %4383 = vmatprep.subr.bf16.mxu0 0
        %4384 = vmatpush2.bf16.msra.mxu0 %v4104
        %4385 = vmatprep.subr.bf16.mxu0 0
        %4386 = vmatpush2.bf16.msra.mxu0 %v4101
        %4387 = vmatprep.subr.bf16.mxu0 0
        %4388 = vmatpush2.bf16.msra.mxu0 %v4098
        %4389 = vmatprep.subr.bf16.mxu0 0
        %4390 = vmatpush2.bf16.msra.mxu0 %v4095
        %4391 = vmatprep.mubr.bf16.mxu0 %v3617
        %4392 = vmatmul.mubr.bf16.gmra.mxu0 %v3616
        %v4393 = vpop.f32.mrf.mxu0
        %v4394 = vadd.f32 %v4273, %v4393
        %v4395 = vpop.f32.mrf.mxu0
        %v4396 = vpop.f32.mrf.mxu0
        %v4397 = vpop.f32.mrf.mxu0
        %4398 = vdwg.mxu0
        %4399 = vmatprep.subr.bf16.mxu0 0
        %4400 = vmatpush1.bf16.msra.mxu0 %v4140
        %4401 = vmatprep.subr.bf16.mxu0 0
        %4402 = vmatpush1.bf16.msra.mxu0 %v4137
        %4403 = vmatprep.subr.bf16.mxu0 0
        %4404 = vmatpush1.bf16.msra.mxu0 %v4134
        %4405 = vmatprep.subr.bf16.mxu0 0
        %4406 = vmatpush1.bf16.msra.mxu0 %v4131
        %4407 = vmatprep.subr.bf16.mxu0 0
        %4408 = vmatpush1.bf16.msra.mxu0 %v4128
        %4409 = vmatprep.subr.bf16.mxu0 0
        %4410 = vmatpush1.bf16.msra.mxu0 %v4125
        %4411 = vmatprep.subr.bf16.mxu0 0
        %4412 = vmatpush1.bf16.msra.mxu0 %v4122
        %4413 = vmatprep.subr.bf16.mxu0 0
        %4414 = vmatpush1.bf16.msra.mxu0 %v4119
        %4415 = vmatprep.subr.bf16.mxu0 0
        %4416 = vmatpush2.bf16.msra.mxu0 %v4164
        %4417 = vmatprep.subr.bf16.mxu0 0
        %4418 = vmatpush2.bf16.msra.mxu0 %v4161
        %4419 = vmatprep.subr.bf16.mxu0 0
        %4420 = vmatpush2.bf16.msra.mxu0 %v4158
        %4421 = vmatprep.subr.bf16.mxu0 0
        %4422 = vmatpush2.bf16.msra.mxu0 %v4155
        %4423 = vmatprep.subr.bf16.mxu0 0
        %4424 = vmatpush2.bf16.msra.mxu0 %v4152
        %4425 = vmatprep.subr.bf16.mxu0 0
        %4426 = vmatpush2.bf16.msra.mxu0 %v4149
        %4427 = vmatprep.subr.bf16.mxu0 0
        %4428 = vmatpush2.bf16.msra.mxu0 %v4146
        %4429 = vmatprep.subr.bf16.mxu0 0
        %4430 = vmatpush2.bf16.msra.mxu0 %v4143
        %4431 = vmatprep.mubr.bf16.mxu0 %v3619
        %4432 = vmatmul.mubr.bf16.gmra.mxu0 %v3618
        %v4433 = vpop.f32.mrf.mxu0
        %v4434 = vadd.f32 %v4394, %v4433
        %v4435 = vpop.f32.mrf.mxu0
        %v4436 = vpop.f32.mrf.mxu0
        %v4437 = vpop.f32.mrf.mxu0
        %4438 = vdwg.mxu0
        %v4439 = vmax.f32 %v4353, 0.0
        %v4440 = vmax.f32 %v4355, 0.0
        %v4441 = vmax.f32 %v4434, 0.0
        %v4442 = vld [vmem:[#allocation10] sm:$0xff]
        %v4443 = vld [vmem:[#allocation10 + $0x8] sm:$0xff]
        %v4444 = vld [vmem:[#allocation10 + $0x10] sm:$0xff]
        %v4445 = vld [vmem:[#allocation10 + $0x18] sm:$0xff]
        %v4446 = vld [vmem:[#allocation10 + $0x20] sm:$0xff]
        %v4447 = vld [vmem:[#allocation10 + $0x28] sm:$0xff]
        %v4448 = vld [vmem:[#allocation10 + $0x30] sm:$0xff]
        %v4449 = vld [vmem:[#allocation10 + $0x38] sm:$0xff]
        %v4450 = vld [vmem:[#allocation10 + $0x40] sm:$0xff]
        %v4451 = vld [vmem:[#allocation10 + $0x48] sm:$0xff]
        %v4452 = vld [vmem:[#allocation10 + $0x50] sm:$0xff]
        %v4453 = vld [vmem:[#allocation10 + $0x58] sm:$0xff]
        %v4454 = vld [vmem:[#allocation10 + $0x60] sm:$0xff]
        %v4455 = vld [vmem:[#allocation10 + $0x68] sm:$0xff]
        %v4456 = vld [vmem:[#allocation10 + $0x70] sm:$0xff]
        %v4457 = vld [vmem:[#allocation10 + $0x78] sm:$0xff]
        %v4458 = vld [vmem:[#allocation10 + $0x80] sm:$0xff]
        %v4459 = vld [vmem:[#allocation10 + $0x88] sm:$0xff]
        %v4460 = vld [vmem:[#allocation10 + $0x90] sm:$0xff]
        %v4461 = vld [vmem:[#allocation10 + $0x98] sm:$0xff]
        %v4462 = vld [vmem:[#allocation10 + $0xa0] sm:$0xff]
        %v4463 = vld [vmem:[#allocation10 + $0xa8] sm:$0xff]
        %v4464 = vld [vmem:[#allocation10 + $0xb0] sm:$0xff]
        %v4465 = vld [vmem:[#allocation10 + $0xb8] sm:$0xff]
        %v4466 = vld [vmem:[#allocation10 + $0xc0] sm:$0xff]
        %v4467 = vld [vmem:[#allocation10 + $0xc8] sm:$0xff]
        %v4468 = vld [vmem:[#allocation10 + $0xd0] sm:$0xff]
        %v4469 = vld [vmem:[#allocation10 + $0xd8] sm:$0xff]
        %v4470 = vld [vmem:[#allocation10 + $0xe0] sm:$0xff]
        %v4471 = vld [vmem:[#allocation10 + $0xe8] sm:$0xff]
        %v4472 = vld [vmem:[#allocation10 + $0xf0] sm:$0xff]
        %v4473 = vld [vmem:[#allocation10 + $0xf8] sm:$0xff]
        %v4474 = vld [vmem:[#allocation10 + $0x100] sm:$0xff]
        %v4475 = vld [vmem:[#allocation10 + $0x108] sm:$0xff]
        %v4476 = vld [vmem:[#allocation10 + $0x110] sm:$0xff]
        %v4477 = vld [vmem:[#allocation10 + $0x118] sm:$0xff]
        %v4478 = vld [vmem:[#allocation10 + $0x120] sm:$0xff]
        %v4479 = vld [vmem:[#allocation10 + $0x128] sm:$0xff]
        %v4480 = vld [vmem:[#allocation10 + $0x130] sm:$0xff]
        %v4481 = vld [vmem:[#allocation10 + $0x138] sm:$0xff]
        %v4482 = vld [vmem:[#allocation10 + $0x140] sm:$0xff]
        %v4483 = vld [vmem:[#allocation10 + $0x148] sm:$0xff]
        %v4484 = vld [vmem:[#allocation10 + $0x150] sm:$0xff]
        %v4485 = vld [vmem:[#allocation10 + $0x158] sm:$0xff]
        %v4486 = vld [vmem:[#allocation10 + $0x160] sm:$0xff]
        %v4487 = vld [vmem:[#allocation10 + $0x168] sm:$0xff]
        %v4488 = vld [vmem:[#allocation10 + $0x170] sm:$0xff]
        %v4489 = vld [vmem:[#allocation10 + $0x178] sm:$0xff]
        %v4490 = vld [vmem:[#allocation10 + $0x180] sm:$0xff]
        %v4491 = vld [vmem:[#allocation10 + $0x188] sm:$0xff]
        %v4492 = vld [vmem:[#allocation10 + $0x190] sm:$0xff]
        %v4493 = vld [vmem:[#allocation10 + $0x198] sm:$0xff]
        %v4494 = vld [vmem:[#allocation10 + $0x1a0] sm:$0xff]
        %v4495 = vld [vmem:[#allocation10 + $0x1a8] sm:$0xff]
        %v4496 = vld [vmem:[#allocation10 + $0x1b0] sm:$0xff]
        %v4497 = vld [vmem:[#allocation10 + $0x1b8] sm:$0xff]
        %v4498 = vld [vmem:[#allocation10 + $0x1c0] sm:$0xff]
        %v4499 = vld [vmem:[#allocation10 + $0x1c8] sm:$0xff]
        %v4500 = vld [vmem:[#allocation10 + $0x1d0] sm:$0xff]
        %v4501 = vld [vmem:[#allocation10 + $0x1d8] sm:$0xff]
        %v4502 = vld [vmem:[#allocation10 + $0x1e0] sm:$0xff]
        %v4503 = vld [vmem:[#allocation10 + $0x1e8] sm:$0xff]
        %v4504 = vld [vmem:[#allocation10 + $0x1f0] sm:$0xff]
        %v4505 = vld [vmem:[#allocation10 + $0x1f8] sm:$0xff]
        %v4506 = vld [vmem:[#allocation10 + $0x200] sm:$0xff]
        %v4507 = vld [vmem:[#allocation10 + $0x208] sm:$0xff]
        %v4508 = vld [vmem:[#allocation10 + $0x210] sm:$0xff]
        %v4509 = vld [vmem:[#allocation10 + $0x218] sm:$0xff]
        %v4510 = vld [vmem:[#allocation10 + $0x220] sm:$0xff]
        %v4511 = vld [vmem:[#allocation10 + $0x228] sm:$0xff]
        %v4512 = vld [vmem:[#allocation10 + $0x230] sm:$0xff]
        %v4513 = vld [vmem:[#allocation10 + $0x238] sm:$0xff]
        %v4514 = vld [vmem:[#allocation10 + $0x240] sm:$0xff]
        %v4515 = vld [vmem:[#allocation10 + $0x248] sm:$0xff]
        %v4516 = vld [vmem:[#allocation10 + $0x250] sm:$0xff]
        %v4517 = vld [vmem:[#allocation10 + $0x258] sm:$0xff]
        %v4518 = vld [vmem:[#allocation10 + $0x260] sm:$0xff]
        %v4519 = vld [vmem:[#allocation10 + $0x268] sm:$0xff]
        %v4520 = vld [vmem:[#allocation10 + $0x270] sm:$0xff]
        %v4521 = vld [vmem:[#allocation10 + $0x278] sm:$0xff]
        %v4522 = vld [vmem:[#allocation10 + $0x280] sm:$0xff]
        %v4523 = vld [vmem:[#allocation10 + $0x288] sm:$0xff]
        %v4524 = vld [vmem:[#allocation10 + $0x290] sm:$0xff]
        %v4525 = vld [vmem:[#allocation10 + $0x298] sm:$0xff]
        %v4526 = vld [vmem:[#allocation10 + $0x2a0] sm:$0xff]
        %v4527 = vld [vmem:[#allocation10 + $0x2a8] sm:$0xff]
        %v4528 = vld [vmem:[#allocation10 + $0x2b0] sm:$0xff]
        %v4529 = vld [vmem:[#allocation10 + $0x2b8] sm:$0xff]
        %v4530 = vld [vmem:[#allocation10 + $0x2c0] sm:$0xff]
        %v4531 = vld [vmem:[#allocation10 + $0x2c8] sm:$0xff]
        %v4532 = vld [vmem:[#allocation10 + $0x2d0] sm:$0xff]
        %v4533 = vld [vmem:[#allocation10 + $0x2d8] sm:$0xff]
        %v4534 = vld [vmem:[#allocation10 + $0x2e0] sm:$0xff]
        %v4535 = vld [vmem:[#allocation10 + $0x2e8] sm:$0xff]
        %v4536 = vld [vmem:[#allocation10 + $0x2f0] sm:$0xff]
        %v4537 = vld [vmem:[#allocation10 + $0x2f8] sm:$0xff]
        %4538 = vmatprep.subr.mxu0 0.0
        %4539 = vmatpush1.msra.mxu0 %v4505
        %4540 = vmatprep.subr.mxu0 0.0
        %4541 = vmatpush1.msra.mxu0 %v4504
        %4542 = vmatprep.subr.mxu0 0.0
        %4543 = vmatpush1.msra.mxu0 %v4503
        %4544 = vmatprep.subr.mxu0 0.0
        %4545 = vmatpush1.msra.mxu0 %v4502
        %4546 = vmatprep.subr.mxu0 0.0
        %4547 = vmatpush1.msra.mxu0 %v4501
        %4548 = vmatprep.subr.mxu0 0.0
        %4549 = vmatpush1.msra.mxu0 %v4500
        %4550 = vmatprep.subr.mxu0 0.0
        %4551 = vmatpush1.msra.mxu0 %v4499
        %4552 = vmatprep.subr.mxu0 0.0
        %4553 = vmatpush1.msra.mxu0 %v4498
        %4554 = vmatprep.subr.mxu0 0.0
        %4555 = vmatpush1.msra.mxu0 %v4497
        %4556 = vmatprep.subr.mxu0 0.0
        %4557 = vmatpush1.msra.mxu0 %v4496
        %4558 = vmatprep.subr.mxu0 0.0
        %4559 = vmatpush1.msra.mxu0 %v4495
        %4560 = vmatprep.subr.mxu0 0.0
        %4561 = vmatpush1.msra.mxu0 %v4494
        %4562 = vmatprep.subr.mxu0 0.0
        %4563 = vmatpush1.msra.mxu0 %v4493
        %4564 = vmatprep.subr.mxu0 0.0
        %4565 = vmatpush1.msra.mxu0 %v4492
        %4566 = vmatprep.subr.mxu0 0.0
        %4567 = vmatpush1.msra.mxu0 %v4491
        %4568 = vmatprep.subr.mxu0 0.0
        %4569 = vmatpush1.msra.mxu0 %v4490
        %4570 = vmatprep.subr.mxu0 0.0
        %4571 = vmatpush2.msra.mxu0 %v4521
        %4572 = vmatprep.subr.mxu0 0.0
        %4573 = vmatpush2.msra.mxu0 %v4520
        %4574 = vmatprep.subr.mxu0 0.0
        %4575 = vmatpush2.msra.mxu0 %v4519
        %4576 = vmatprep.subr.mxu0 0.0
        %4577 = vmatpush2.msra.mxu0 %v4518
        %4578 = vmatprep.subr.mxu0 0.0
        %4579 = vmatpush2.msra.mxu0 %v4517
        %4580 = vmatprep.subr.mxu0 0.0
        %4581 = vmatpush2.msra.mxu0 %v4516
        %4582 = vmatprep.subr.mxu0 0.0
        %4583 = vmatpush2.msra.mxu0 %v4515
        %4584 = vmatprep.subr.mxu0 0.0
        %4585 = vmatpush2.msra.mxu0 %v4514
        %4586 = vmatprep.subr.mxu0 0.0
        %4587 = vmatpush2.msra.mxu0 %v4513
        %4588 = vmatprep.subr.mxu0 0.0
        %4589 = vmatpush2.msra.mxu0 %v4512
        %4590 = vmatprep.subr.mxu0 0.0
        %4591 = vmatpush2.msra.mxu0 %v4511
        %4592 = vmatprep.subr.mxu0 0.0
        %4593 = vmatpush2.msra.mxu0 %v4510
        %4594 = vmatprep.subr.mxu0 0.0
        %4595 = vmatpush2.msra.mxu0 %v4509
        %4596 = vmatprep.subr.mxu0 0.0
        %4597 = vmatpush2.msra.mxu0 %v4508
        %4598 = vmatprep.subr.mxu0 0.0
        %4599 = vmatpush2.msra.mxu0 %v4507
        %4600 = vmatprep.subr.mxu0 0.0
        %4601 = vmatpush2.msra.mxu0 %v4506
        %4602 = vmatprep.mubr.f32.mxu0 %v4440
        %4603 = vmatmul.mubr.f32.gmra.mxu0 %v4439
        %v4604 = vpop.f32.mrf.mxu0
        %v4605 = vadd.f32 0.0, %v4604
        %v4606 = vpop.f32.mrf.mxu0
        %4607 = vdwg.mxu0
        %4608 = vmatprep.subr.mxu0 0.0
        %4609 = vmatpush1.msra.mxu0 %v4537
        %4610 = vmatprep.subr.mxu0 0.0
        %4611 = vmatpush1.msra.mxu0 %v4536
        %4612 = vmatprep.subr.mxu0 0.0
        %4613 = vmatpush1.msra.mxu0 %v4535
        %4614 = vmatprep.subr.mxu0 0.0
        %4615 = vmatpush1.msra.mxu0 %v4534
        %4616 = vmatprep.subr.mxu0 0.0
        %4617 = vmatpush1.msra.mxu0 %v4533
        %4618 = vmatprep.subr.mxu0 0.0
        %4619 = vmatpush1.msra.mxu0 %v4532
        %4620 = vmatprep.subr.mxu0 0.0
        %4621 = vmatpush1.msra.mxu0 %v4531
        %4622 = vmatprep.subr.mxu0 0.0
        %4623 = vmatpush1.msra.mxu0 %v4530
        %4624 = vmatprep.subr.mxu0 0.0
        %4625 = vmatpush1.msra.mxu0 %v4529
        %4626 = vmatprep.subr.mxu0 0.0
        %4627 = vmatpush1.msra.mxu0 %v4528
        %4628 = vmatprep.subr.mxu0 0.0
        %4629 = vmatpush1.msra.mxu0 %v4527
        %4630 = vmatprep.subr.mxu0 0.0
        %4631 = vmatpush1.msra.mxu0 %v4526
        %4632 = vmatprep.subr.mxu0 0.0
        %4633 = vmatpush1.msra.mxu0 %v4525
        %4634 = vmatprep.subr.mxu0 0.0
        %4635 = vmatpush1.msra.mxu0 %v4524
        %4636 = vmatprep.subr.mxu0 0.0
        %4637 = vmatpush1.msra.mxu0 %v4523
        %4638 = vmatprep.subr.mxu0 0.0
        %4639 = vmatpush1.msra.mxu0 %v4522
        %4640 = vmatprep.subr.mxu0 0.0
        %4641 = vmatpush2.msra.mxu0 0.0
        %4642 = vmatprep.subr.mxu0 0.0
        %4643 = vmatpush2.msra.mxu0 0.0
        %4644 = vmatprep.subr.mxu0 0.0
        %4645 = vmatpush2.msra.mxu0 0.0
        %4646 = vmatprep.subr.mxu0 0.0
        %4647 = vmatpush2.msra.mxu0 0.0
        %4648 = vmatprep.subr.mxu0 0.0
        %4649 = vmatpush2.msra.mxu0 0.0
        %4650 = vmatprep.subr.mxu0 0.0
        %4651 = vmatpush2.msra.mxu0 0.0
        %4652 = vmatprep.subr.mxu0 0.0
        %4653 = vmatpush2.msra.mxu0 0.0
        %4654 = vmatprep.subr.mxu0 0.0
        %4655 = vmatpush2.msra.mxu0 0.0
        %4656 = vmatprep.subr.mxu0 0.0
        %4657 = vmatpush2.msra.mxu0 0.0
        %4658 = vmatprep.subr.mxu0 0.0
        %4659 = vmatpush2.msra.mxu0 0.0
        %4660 = vmatprep.subr.mxu0 0.0
        %4661 = vmatpush2.msra.mxu0 0.0
        %4662 = vmatprep.subr.mxu0 0.0
        %4663 = vmatpush2.msra.mxu0 0.0
        %4664 = vmatprep.subr.mxu0 0.0
        %4665 = vmatpush2.msra.mxu0 0.0
        %4666 = vmatprep.subr.mxu0 0.0
        %4667 = vmatpush2.msra.mxu0 0.0
        %4668 = vmatprep.subr.mxu0 0.0
        %4669 = vmatpush2.msra.mxu0 0.0
        %4670 = vmatprep.subr.mxu0 0.0
        %4671 = vmatpush2.msra.mxu0 0.0
        %4672 = vmatprep.mubr.f32.mxu0 0.0
        %4673 = vmatmul.mubr.f32.gmra.mxu0 %v4441
        %v4674 = vpop.f32.mrf.mxu0
        %v4675 = vadd.f32 %v4605, %v4674
        %v4676 = vpop.f32.mrf.mxu0
        %4677 = vdwg.mxu0
        %4678 = vmatprep.subr.mxu0 0.0
        %4679 = vmatpush1.msra.mxu0 %v4457
        %4680 = vmatprep.subr.mxu0 0.0
        %4681 = vmatpush1.msra.mxu0 %v4456
        %4682 = vmatprep.subr.mxu0 0.0
        %4683 = vmatpush1.msra.mxu0 %v4455
        %4684 = vmatprep.subr.mxu0 0.0
        %4685 = vmatpush1.msra.mxu0 %v4454
        %4686 = vmatprep.subr.mxu0 0.0
        %4687 = vmatpush1.msra.mxu0 %v4453
        %4688 = vmatprep.subr.mxu0 0.0
        %4689 = vmatpush1.msra.mxu0 %v4452
        %4690 = vmatprep.subr.mxu0 0.0
        %4691 = vmatpush1.msra.mxu0 %v4451
        %4692 = vmatprep.subr.mxu0 0.0
        %4693 = vmatpush1.msra.mxu0 %v4450
        %4694 = vmatprep.subr.mxu0 0.0
        %4695 = vmatpush1.msra.mxu0 %v4449
        %4696 = vmatprep.subr.mxu0 0.0
        %4697 = vmatpush1.msra.mxu0 %v4448
        %4698 = vmatprep.subr.mxu0 0.0
        %4699 = vmatpush1.msra.mxu0 %v4447
        %4700 = vmatprep.subr.mxu0 0.0
        %4701 = vmatpush1.msra.mxu0 %v4446
        %4702 = vmatprep.subr.mxu0 0.0
        %4703 = vmatpush1.msra.mxu0 %v4445
        %4704 = vmatprep.subr.mxu0 0.0
        %4705 = vmatpush1.msra.mxu0 %v4444
        %4706 = vmatprep.subr.mxu0 0.0
        %4707 = vmatpush1.msra.mxu0 %v4443
        %4708 = vmatprep.subr.mxu0 0.0
        %4709 = vmatpush1.msra.mxu0 %v4442
        %4710 = vmatprep.subr.mxu0 0.0
        %4711 = vmatpush2.msra.mxu0 %v4473
        %4712 = vmatprep.subr.mxu0 0.0
        %4713 = vmatpush2.msra.mxu0 %v4472
        %4714 = vmatprep.subr.mxu0 0.0
        %4715 = vmatpush2.msra.mxu0 %v4471
        %4716 = vmatprep.subr.mxu0 0.0
        %4717 = vmatpush2.msra.mxu0 %v4470
        %4718 = vmatprep.subr.mxu0 0.0
        %4719 = vmatpush2.msra.mxu0 %v4469
        %4720 = vmatprep.subr.mxu0 0.0
        %4721 = vmatpush2.msra.mxu0 %v4468
        %4722 = vmatprep.subr.mxu0 0.0
        %4723 = vmatpush2.msra.mxu0 %v4467
        %4724 = vmatprep.subr.mxu0 0.0
        %4725 = vmatpush2.msra.mxu0 %v4466
        %4726 = vmatprep.subr.mxu0 0.0
        %4727 = vmatpush2.msra.mxu0 %v4465
        %4728 = vmatprep.subr.mxu0 0.0
        %4729 = vmatpush2.msra.mxu0 %v4464
        %4730 = vmatprep.subr.mxu0 0.0
        %4731 = vmatpush2.msra.mxu0 %v4463
        %4732 = vmatprep.subr.mxu0 0.0
        %4733 = vmatpush2.msra.mxu0 %v4462
        %4734 = vmatprep.subr.mxu0 0.0
        %4735 = vmatpush2.msra.mxu0 %v4461
        %4736 = vmatprep.subr.mxu0 0.0
        %4737 = vmatpush2.msra.mxu0 %v4460
        %4738 = vmatprep.subr.mxu0 0.0
        %4739 = vmatpush2.msra.mxu0 %v4459
        %4740 = vmatprep.subr.mxu0 0.0
        %4741 = vmatpush2.msra.mxu0 %v4458
        %4742 = vmatprep.mubr.f32.mxu0 %v3614
        %4743 = vmatmul.mubr.f32.gmra.mxu0 %v3613
        %v4744 = vpop.f32.mrf.mxu0
        %v4745 = vadd.f32 %v4675, %v4744
        %v4746 = vpop.f32.mrf.mxu0
        %4747 = vdwg.mxu0
        %4748 = vmatprep.subr.mxu0 0.0
        %4749 = vmatpush1.msra.mxu0 %v4489
        %4750 = vmatprep.subr.mxu0 0.0
        %4751 = vmatpush1.msra.mxu0 %v4488
        %4752 = vmatprep.subr.mxu0 0.0
        %4753 = vmatpush1.msra.mxu0 %v4487
        %4754 = vmatprep.subr.mxu0 0.0
        %4755 = vmatpush1.msra.mxu0 %v4486
        %4756 = vmatprep.subr.mxu0 0.0
        %4757 = vmatpush1.msra.mxu0 %v4485
        %4758 = vmatprep.subr.mxu0 0.0
        %4759 = vmatpush1.msra.mxu0 %v4484
        %4760 = vmatprep.subr.mxu0 0.0
        %4761 = vmatpush1.msra.mxu0 %v4483
        %4762 = vmatprep.subr.mxu0 0.0
        %4763 = vmatpush1.msra.mxu0 %v4482
        %4764 = vmatprep.subr.mxu0 0.0
        %4765 = vmatpush1.msra.mxu0 %v4481
        %4766 = vmatprep.subr.mxu0 0.0
        %4767 = vmatpush1.msra.mxu0 %v4480
        %4768 = vmatprep.subr.mxu0 0.0
        %4769 = vmatpush1.msra.mxu0 %v4479
        %4770 = vmatprep.subr.mxu0 0.0
        %4771 = vmatpush1.msra.mxu0 %v4478
        %4772 = vmatprep.subr.mxu0 0.0
        %4773 = vmatpush1.msra.mxu0 %v4477
        %4774 = vmatprep.subr.mxu0 0.0
        %4775 = vmatpush1.msra.mxu0 %v4476
        %4776 = vmatprep.subr.mxu0 0.0
        %4777 = vmatpush1.msra.mxu0 %v4475
        %4778 = vmatprep.subr.mxu0 0.0
        %4779 = vmatpush1.msra.mxu0 %v4474
        %4780 = vmatprep.subr.mxu0 0.0
        %4781 = vmatpush2.msra.mxu0 0.0
        %4782 = vmatprep.subr.mxu0 0.0
        %4783 = vmatpush2.msra.mxu0 0.0
        %4784 = vmatprep.subr.mxu0 0.0
        %4785 = vmatpush2.msra.mxu0 0.0
        %4786 = vmatprep.subr.mxu0 0.0
        %4787 = vmatpush2.msra.mxu0 0.0
        %4788 = vmatprep.subr.mxu0 0.0
        %4789 = vmatpush2.msra.mxu0 0.0
        %4790 = vmatprep.subr.mxu0 0.0
        %4791 = vmatpush2.msra.mxu0 0.0
        %4792 = vmatprep.subr.mxu0 0.0
        %4793 = vmatpush2.msra.mxu0 0.0
        %4794 = vmatprep.subr.mxu0 0.0
        %4795 = vmatpush2.msra.mxu0 0.0
        %4796 = vmatprep.subr.mxu0 0.0
        %4797 = vmatpush2.msra.mxu0 0.0
        %4798 = vmatprep.subr.mxu0 0.0
        %4799 = vmatpush2.msra.mxu0 0.0
        %4800 = vmatprep.subr.mxu0 0.0
        %4801 = vmatpush2.msra.mxu0 0.0
        %4802 = vmatprep.subr.mxu0 0.0
        %4803 = vmatpush2.msra.mxu0 0.0
        %4804 = vmatprep.subr.mxu0 0.0
        %4805 = vmatpush2.msra.mxu0 0.0
        %4806 = vmatprep.subr.mxu0 0.0
        %4807 = vmatpush2.msra.mxu0 0.0
        %4808 = vmatprep.subr.mxu0 0.0
        %4809 = vmatpush2.msra.mxu0 0.0
        %4810 = vmatprep.subr.mxu0 0.0
        %4811 = vmatpush2.msra.mxu0 0.0
        %4812 = vmatprep.mubr.f32.mxu0 0.0
        %4813 = vmatmul.mubr.f32.gmra.mxu0 %v3615
        %v4814 = vpop.f32.mrf.mxu0
        %v4815 = vadd.f32 %v4745, %v4814
        %v4816 = vpop.f32.mrf.mxu0
        %4817 = vdwg.mxu0
        %v4818 = vld [vmem:[%s14] sm:$0x1]
        %v4819 = vadd.f32 %v4815, %v4818
        %v4820 = vld [vmem:[#allocation11] sm:$0xff]
        %v4821 = vld [vmem:[#allocation11 + $0x8] sm:$0xff]
        %v4822 = vld [vmem:[#allocation11 + $0x10] sm:$0xff]
        %v4823 = vld [vmem:[#allocation11 + $0x18] sm:$0xff]
        %v4824 = vld [vmem:[#allocation11 + $0x20] sm:$0xff]
        %v4825 = vld [vmem:[#allocation11 + $0x28] sm:$0xff]
        %v4826 = vld [vmem:[#allocation11 + $0x30] sm:$0xff]
        %v4827 = vld [vmem:[#allocation11 + $0x38] sm:$0xff]
        %v4828 = vld [vmem:[#allocation11 + $0x40] sm:$0xff]
        %v4829 = vld [vmem:[#allocation11 + $0x48] sm:$0xff]
        %v4830 = vld [vmem:[#allocation11 + $0x50] sm:$0xff]
        %v4831 = vld [vmem:[#allocation11 + $0x58] sm:$0xff]
        %v4832 = vld [vmem:[#allocation11 + $0x60] sm:$0xff]
        %v4833 = vld [vmem:[#allocation11 + $0x68] sm:$0xff]
        %v4834 = vld [vmem:[#allocation11 + $0x70] sm:$0xff]
        %v4835 = vld [vmem:[#allocation11 + $0x78] sm:$0xff]
        %v4836 = vld [vmem:[#allocation11 + $0x80] sm:$0xff]
        %v4837 = vld [vmem:[#allocation11 + $0x88] sm:$0xff]
        %v4838 = vld [vmem:[#allocation11 + $0x90] sm:$0xff]
        %v4839 = vld [vmem:[#allocation11 + $0x98] sm:$0xff]
        %v4840 = vld [vmem:[#allocation11 + $0xa0] sm:$0xff]
        %v4841 = vld [vmem:[#allocation11 + $0xa8] sm:$0xff]
        %v4842 = vld [vmem:[#allocation11 + $0xb0] sm:$0xff]
        %v4843 = vld [vmem:[#allocation11 + $0xb8] sm:$0xff]
        %v4844 = vld [vmem:[#allocation11 + $0xc0] sm:$0xff]
        %v4845 = vld [vmem:[#allocation11 + $0xc8] sm:$0xff]
        %v4846 = vld [vmem:[#allocation11 + $0xd0] sm:$0xff]
        %v4847 = vld [vmem:[#allocation11 + $0xd8] sm:$0xff]
        %v4848 = vld [vmem:[#allocation11 + $0xe0] sm:$0xff]
        %v4849 = vld [vmem:[#allocation11 + $0xe8] sm:$0xff]
        %v4850 = vld [vmem:[#allocation11 + $0xf0] sm:$0xff]
        %v4851 = vld [vmem:[#allocation11 + $0xf8] sm:$0xff]
        %v4852 = vld [vmem:[#allocation11 + $0x100] sm:$0xff]
        %v4853 = vld [vmem:[#allocation11 + $0x108] sm:$0xff]
        %v4854 = vld [vmem:[#allocation11 + $0x110] sm:$0xff]
        %v4855 = vld [vmem:[#allocation11 + $0x118] sm:$0xff]
        %v4856 = vld [vmem:[#allocation11 + $0x120] sm:$0xff]
        %v4857 = vld [vmem:[#allocation11 + $0x128] sm:$0xff]
        %v4858 = vld [vmem:[#allocation11 + $0x130] sm:$0xff]
        %v4859 = vld [vmem:[#allocation11 + $0x138] sm:$0xff]
        %v4860 = vld [vmem:[#allocation11 + $0x140] sm:$0xff]
        %v4861 = vld [vmem:[#allocation11 + $0x148] sm:$0xff]
        %v4862 = vld [vmem:[#allocation11 + $0x150] sm:$0xff]
        %v4863 = vld [vmem:[#allocation11 + $0x158] sm:$0xff]
        %v4864 = vld [vmem:[#allocation11 + $0x160] sm:$0xff]
        %v4865 = vld [vmem:[#allocation11 + $0x168] sm:$0xff]
        %v4866 = vld [vmem:[#allocation11 + $0x170] sm:$0xff]
        %v4867 = vld [vmem:[#allocation11 + $0x178] sm:$0xff]
        %v4868 = vld [vmem:[%s16] sm:$0x1]
        %4869 = vmatprep.subr.mxu0 0.0
        %4870 = vmatpush1.msra.mxu0 %v4835
        %4871 = vmatprep.subr.mxu0 0.0
        %4872 = vmatpush1.msra.mxu0 %v4834
        %4873 = vmatprep.subr.mxu0 0.0
        %4874 = vmatpush1.msra.mxu0 %v4833
        %4875 = vmatprep.subr.mxu0 0.0
        %4876 = vmatpush1.msra.mxu0 %v4832
        %4877 = vmatprep.subr.mxu0 0.0
        %4878 = vmatpush1.msra.mxu0 %v4831
        %4879 = vmatprep.subr.mxu0 0.0
        %4880 = vmatpush1.msra.mxu0 %v4830
        %4881 = vmatprep.subr.mxu0 0.0
        %4882 = vmatpush1.msra.mxu0 %v4829
        %4883 = vmatprep.subr.mxu0 0.0
        %4884 = vmatpush1.msra.mxu0 %v4828
        %4885 = vmatprep.subr.mxu0 0.0
        %4886 = vmatpush1.msra.mxu0 %v4827
        %4887 = vmatprep.subr.mxu0 0.0
        %4888 = vmatpush1.msra.mxu0 %v4826
        %4889 = vmatprep.subr.mxu0 0.0
        %4890 = vmatpush1.msra.mxu0 %v4825
        %4891 = vmatprep.subr.mxu0 0.0
        %4892 = vmatpush1.msra.mxu0 %v4824
        %4893 = vmatprep.subr.mxu0 0.0
        %4894 = vmatpush1.msra.mxu0 %v4823
        %4895 = vmatprep.subr.mxu0 0.0
        %4896 = vmatpush1.msra.mxu0 %v4822
        %4897 = vmatprep.subr.mxu0 0.0
        %4898 = vmatpush1.msra.mxu0 %v4821
        %4899 = vmatprep.subr.mxu0 0.0
        %4900 = vmatpush1.msra.mxu0 %v4820
        %4901 = vmatprep.subr.mxu0 0.0
        %4902 = vmatpush2.msra.mxu0 %v4851
        %4903 = vmatprep.subr.mxu0 0.0
        %4904 = vmatpush2.msra.mxu0 %v4850
        %4905 = vmatprep.subr.mxu0 0.0
        %4906 = vmatpush2.msra.mxu0 %v4849
        %4907 = vmatprep.subr.mxu0 0.0
        %4908 = vmatpush2.msra.mxu0 %v4848
        %4909 = vmatprep.subr.mxu0 0.0
        %4910 = vmatpush2.msra.mxu0 %v4847
        %4911 = vmatprep.subr.mxu0 0.0
        %4912 = vmatpush2.msra.mxu0 %v4846
        %4913 = vmatprep.subr.mxu0 0.0
        %4914 = vmatpush2.msra.mxu0 %v4845
        %4915 = vmatprep.subr.mxu0 0.0
        %4916 = vmatpush2.msra.mxu0 %v4844
        %4917 = vmatprep.subr.mxu0 0.0
        %4918 = vmatpush2.msra.mxu0 %v4843
        %4919 = vmatprep.subr.mxu0 0.0
        %4920 = vmatpush2.msra.mxu0 %v4842
        %4921 = vmatprep.subr.mxu0 0.0
        %4922 = vmatpush2.msra.mxu0 %v4841
        %4923 = vmatprep.subr.mxu0 0.0
        %4924 = vmatpush2.msra.mxu0 %v4840
        %4925 = vmatprep.subr.mxu0 0.0
        %4926 = vmatpush2.msra.mxu0 %v4839
        %4927 = vmatprep.subr.mxu0 0.0
        %4928 = vmatpush2.msra.mxu0 %v4838
        %4929 = vmatprep.subr.mxu0 0.0
        %4930 = vmatpush2.msra.mxu0 %v4837
        %4931 = vmatprep.subr.mxu0 0.0
        %4932 = vmatpush2.msra.mxu0 %v4836
        %4933 = vmatprep.mubr.f32.mxu0 %v3614
        %4934 = vmatmul.mubr.f32.gmra.mxu0 %v3613
        %v4935 = vpop.f32.mrf.mxu0
        %v4936 = vadd.f32 %v4868, %v4935
        %v4937 = vpop.f32.mrf.mxu0
        %4938 = vdwg.mxu0
        %4939 = vmatprep.subr.mxu0 0.0
        %4940 = vmatpush1.msra.mxu0 %v4867
        %4941 = vmatprep.subr.mxu0 0.0
        %4942 = vmatpush1.msra.mxu0 %v4866
        %4943 = vmatprep.subr.mxu0 0.0
        %4944 = vmatpush1.msra.mxu0 %v4865
        %4945 = vmatprep.subr.mxu0 0.0
        %4946 = vmatpush1.msra.mxu0 %v4864
        %4947 = vmatprep.subr.mxu0 0.0
        %4948 = vmatpush1.msra.mxu0 %v4863
        %4949 = vmatprep.subr.mxu0 0.0
        %4950 = vmatpush1.msra.mxu0 %v4862
        %4951 = vmatprep.subr.mxu0 0.0
        %4952 = vmatpush1.msra.mxu0 %v4861
        %4953 = vmatprep.subr.mxu0 0.0
        %4954 = vmatpush1.msra.mxu0 %v4860
        %4955 = vmatprep.subr.mxu0 0.0
        %4956 = vmatpush1.msra.mxu0 %v4859
        %4957 = vmatprep.subr.mxu0 0.0
        %4958 = vmatpush1.msra.mxu0 %v4858
        %4959 = vmatprep.subr.mxu0 0.0
        %4960 = vmatpush1.msra.mxu0 %v4857
        %4961 = vmatprep.subr.mxu0 0.0
        %4962 = vmatpush1.msra.mxu0 %v4856
        %4963 = vmatprep.subr.mxu0 0.0
        %4964 = vmatpush1.msra.mxu0 %v4855
        %4965 = vmatprep.subr.mxu0 0.0
        %4966 = vmatpush1.msra.mxu0 %v4854
        %4967 = vmatprep.subr.mxu0 0.0
        %4968 = vmatpush1.msra.mxu0 %v4853
        %4969 = vmatprep.subr.mxu0 0.0
        %4970 = vmatpush1.msra.mxu0 %v4852
        %4971 = vmatprep.subr.mxu0 0.0
        %4972 = vmatpush2.msra.mxu0 0.0
        %4973 = vmatprep.subr.mxu0 0.0
        %4974 = vmatpush2.msra.mxu0 0.0
        %4975 = vmatprep.subr.mxu0 0.0
        %4976 = vmatpush2.msra.mxu0 0.0
        %4977 = vmatprep.subr.mxu0 0.0
        %4978 = vmatpush2.msra.mxu0 0.0
        %4979 = vmatprep.subr.mxu0 0.0
        %4980 = vmatpush2.msra.mxu0 0.0
        %4981 = vmatprep.subr.mxu0 0.0
        %4982 = vmatpush2.msra.mxu0 0.0
        %4983 = vmatprep.subr.mxu0 0.0
        %4984 = vmatpush2.msra.mxu0 0.0
        %4985 = vmatprep.subr.mxu0 0.0
        %4986 = vmatpush2.msra.mxu0 0.0
        %4987 = vmatprep.subr.mxu0 0.0
        %4988 = vmatpush2.msra.mxu0 0.0
        %4989 = vmatprep.subr.mxu0 0.0
        %4990 = vmatpush2.msra.mxu0 0.0
        %4991 = vmatprep.subr.mxu0 0.0
        %4992 = vmatpush2.msra.mxu0 0.0
        %4993 = vmatprep.subr.mxu0 0.0
        %4994 = vmatpush2.msra.mxu0 0.0
        %4995 = vmatprep.subr.mxu0 0.0
        %4996 = vmatpush2.msra.mxu0 0.0
        %4997 = vmatprep.subr.mxu0 0.0
        %4998 = vmatpush2.msra.mxu0 0.0
        %4999 = vmatprep.subr.mxu0 0.0
        %5000 = vmatpush2.msra.mxu0 0.0
        %5001 = vmatprep.subr.mxu0 0.0
        %5002 = vmatpush2.msra.mxu0 0.0
        %5003 = vmatprep.mubr.f32.mxu0 0.0
        %5004 = vmatmul.mubr.f32.gmra.mxu0 %v3615
        %v5005 = vpop.f32.mrf.mxu0
        %v5006 = vadd.f32 %v4936, %v5005
        %v5007 = vpop.f32.mrf.mxu0
        %5008 = vdwg.mxu0
        %v5009 = vld [vmem:[%s17] sm:$0xff]
        %v5010 = vld [vmem:[%s17 + $0x8] sm:$0xff]
        %v5011 = vld [vmem:[%s17 + $0x10] sm:$0xff]
        %v5012 = vld [vmem:[%s17 + $0x18] sm:$0xff]
        %v5013 = vld [vmem:[%s17 + $0x20] sm:$0xff]
        %v5014 = vld [vmem:[%s17 + $0x28] sm:$0xff]
        %v5015 = vld [vmem:[%s17 + $0x30] sm:$0xff]
        %v5016 = vld [vmem:[%s17 + $0x38] sm:$0xff]
        %v5017 = vld [vmem:[%s17 + $0x40] sm:$0xff]
        %v5018 = vld [vmem:[%s17 + $0x48] sm:$0xff]
        %v5019 = vld [vmem:[%s17 + $0x50] sm:$0xff]
        %v5020 = vld [vmem:[%s17 + $0x58] sm:$0xff]
        %v5021 = vld [vmem:[%s17 + $0x60] sm:$0xff]
        %v5022 = vld [vmem:[%s17 + $0x68] sm:$0xff]
        %v5023 = vld [vmem:[%s17 + $0x70] sm:$0xff]
        %v5024 = vld [vmem:[%s17 + $0x78] sm:$0xff]
        %v5025 = vld [vmem:[%s17 + $0x80] sm:$0xff]
        %v5026 = vld [vmem:[%s17 + $0x88] sm:$0xff]
        %v5027 = vld [vmem:[%s17 + $0x90] sm:$0xff]
        %v5028 = vld [vmem:[%s17 + $0x98] sm:$0xff]
        %v5029 = vld [vmem:[%s17 + $0xa0] sm:$0xff]
        %v5030 = vld [vmem:[%s17 + $0xa8] sm:$0xff]
        %v5031 = vld [vmem:[%s17 + $0xb0] sm:$0xff]
        %v5032 = vld [vmem:[%s17 + $0xb8] sm:$0xff]
        %v5033 = vld [vmem:[%s17 + $0xc0] sm:$0xff]
        %v5034 = vld [vmem:[%s17 + $0xc8] sm:$0xff]
        %v5035 = vld [vmem:[%s17 + $0xd0] sm:$0xff]
        %v5036 = vld [vmem:[%s17 + $0xd8] sm:$0xff]
        %v5037 = vld [vmem:[%s17 + $0xe0] sm:$0xff]
        %v5038 = vld [vmem:[%s17 + $0xe8] sm:$0xff]
        %v5039 = vld [vmem:[%s17 + $0xf0] sm:$0xff]
        %v5040 = vld [vmem:[%s17 + $0xf8] sm:$0xff]
        %v5041 = vld [vmem:[%s17 + $0x100] sm:$0xff]
        %v5042 = vld [vmem:[%s17 + $0x108] sm:$0xff]
        %v5043 = vld [vmem:[%s17 + $0x110] sm:$0xff]
        %v5044 = vld [vmem:[%s17 + $0x118] sm:$0xff]
        %v5045 = vld [vmem:[%s17 + $0x120] sm:$0xff]
        %v5046 = vld [vmem:[%s17 + $0x128] sm:$0xff]
        %v5047 = vld [vmem:[%s17 + $0x130] sm:$0xff]
        %v5048 = vld [vmem:[%s17 + $0x138] sm:$0xff]
        %v5049 = vld [vmem:[%s17 + $0x140] sm:$0xff]
        %v5050 = vld [vmem:[%s17 + $0x148] sm:$0xff]
        %v5051 = vld [vmem:[%s17 + $0x150] sm:$0xff]
        %v5052 = vld [vmem:[%s17 + $0x158] sm:$0xff]
        %v5053 = vld [vmem:[%s17 + $0x160] sm:$0xff]
        %v5054 = vld [vmem:[%s17 + $0x168] sm:$0xff]
        %v5055 = vld [vmem:[%s17 + $0x170] sm:$0xff]
        %v5056 = vld [vmem:[%s17 + $0x178] sm:$0xff]
        %v5057 = vld [vmem:[%s18] sm:$0x1]
        %5058 = vmatprep.subr.mxu0 0.0
        %5059 = vmatpush1.msra.mxu0 %v5024
        %5060 = vmatprep.subr.mxu0 0.0
        %5061 = vmatpush1.msra.mxu0 %v5023
        %5062 = vmatprep.subr.mxu0 0.0
        %5063 = vmatpush1.msra.mxu0 %v5022
        %5064 = vmatprep.subr.mxu0 0.0
        %5065 = vmatpush1.msra.mxu0 %v5021
        %5066 = vmatprep.subr.mxu0 0.0
        %5067 = vmatpush1.msra.mxu0 %v5020
        %5068 = vmatprep.subr.mxu0 0.0
        %5069 = vmatpush1.msra.mxu0 %v5019
        %5070 = vmatprep.subr.mxu0 0.0
        %5071 = vmatpush1.msra.mxu0 %v5018
        %5072 = vmatprep.subr.mxu0 0.0
        %5073 = vmatpush1.msra.mxu0 %v5017
        %5074 = vmatprep.subr.mxu0 0.0
        %5075 = vmatpush1.msra.mxu0 %v5016
        %5076 = vmatprep.subr.mxu0 0.0
        %5077 = vmatpush1.msra.mxu0 %v5015
        %5078 = vmatprep.subr.mxu0 0.0
        %5079 = vmatpush1.msra.mxu0 %v5014
        %5080 = vmatprep.subr.mxu0 0.0
        %5081 = vmatpush1.msra.mxu0 %v5013
        %5082 = vmatprep.subr.mxu0 0.0
        %5083 = vmatpush1.msra.mxu0 %v5012
        %5084 = vmatprep.subr.mxu0 0.0
        %5085 = vmatpush1.msra.mxu0 %v5011
        %5086 = vmatprep.subr.mxu0 0.0
        %5087 = vmatpush1.msra.mxu0 %v5010
        %5088 = vmatprep.subr.mxu0 0.0
        %5089 = vmatpush1.msra.mxu0 %v5009
        %5090 = vmatprep.subr.mxu0 0.0
        %5091 = vmatpush2.msra.mxu0 %v5040
        %5092 = vmatprep.subr.mxu0 0.0
        %5093 = vmatpush2.msra.mxu0 %v5039
        %5094 = vmatprep.subr.mxu0 0.0
        %5095 = vmatpush2.msra.mxu0 %v5038
        %5096 = vmatprep.subr.mxu0 0.0
        %5097 = vmatpush2.msra.mxu0 %v5037
        %5098 = vmatprep.subr.mxu0 0.0
        %5099 = vmatpush2.msra.mxu0 %v5036
        %5100 = vmatprep.subr.mxu0 0.0
        %5101 = vmatpush2.msra.mxu0 %v5035
        %5102 = vmatprep.subr.mxu0 0.0
        %5103 = vmatpush2.msra.mxu0 %v5034
        %5104 = vmatprep.subr.mxu0 0.0
        %5105 = vmatpush2.msra.mxu0 %v5033
        %5106 = vmatprep.subr.mxu0 0.0
        %5107 = vmatpush2.msra.mxu0 %v5032
        %5108 = vmatprep.subr.mxu0 0.0
        %5109 = vmatpush2.msra.mxu0 %v5031
        %5110 = vmatprep.subr.mxu0 0.0
        %5111 = vmatpush2.msra.mxu0 %v5030
        %5112 = vmatprep.subr.mxu0 0.0
        %5113 = vmatpush2.msra.mxu0 %v5029
        %5114 = vmatprep.subr.mxu0 0.0
        %5115 = vmatpush2.msra.mxu0 %v5028
        %5116 = vmatprep.subr.mxu0 0.0
        %5117 = vmatpush2.msra.mxu0 %v5027
        %5118 = vmatprep.subr.mxu0 0.0
        %5119 = vmatpush2.msra.mxu0 %v5026
        %5120 = vmatprep.subr.mxu0 0.0
        %5121 = vmatpush2.msra.mxu0 %v5025
        %5122 = vmatprep.mubr.f32.mxu0 %v4440
        %5123 = vmatmul.mubr.f32.gmra.mxu0 %v4439
        %v5124 = vpop.f32.mrf.mxu0
        %v5125 = vadd.f32 %v5057, %v5124
        %v5126 = vpop.f32.mrf.mxu0
        %5127 = vdwg.mxu0
        %5128 = vmatprep.subr.mxu0 0.0
        %5129 = vmatpush1.msra.mxu0 %v5056
        %5130 = vmatprep.subr.mxu0 0.0
        %5131 = vmatpush1.msra.mxu0 %v5055
        %5132 = vmatprep.subr.mxu0 0.0
        %5133 = vmatpush1.msra.mxu0 %v5054
        %5134 = vmatprep.subr.mxu0 0.0
        %5135 = vmatpush1.msra.mxu0 %v5053
        %5136 = vmatprep.subr.mxu0 0.0
        %5137 = vmatpush1.msra.mxu0 %v5052
        %5138 = vmatprep.subr.mxu0 0.0
        %5139 = vmatpush1.msra.mxu0 %v5051
        %5140 = vmatprep.subr.mxu0 0.0
        %5141 = vmatpush1.msra.mxu0 %v5050
        %5142 = vmatprep.subr.mxu0 0.0
        %5143 = vmatpush1.msra.mxu0 %v5049
        %5144 = vmatprep.subr.mxu0 0.0
        %5145 = vmatpush1.msra.mxu0 %v5048
        %5146 = vmatprep.subr.mxu0 0.0
        %5147 = vmatpush1.msra.mxu0 %v5047
        %5148 = vmatprep.subr.mxu0 0.0
        %5149 = vmatpush1.msra.mxu0 %v5046
        %5150 = vmatprep.subr.mxu0 0.0
        %5151 = vmatpush1.msra.mxu0 %v5045
        %5152 = vmatprep.subr.mxu0 0.0
        %5153 = vmatpush1.msra.mxu0 %v5044
        %5154 = vmatprep.subr.mxu0 0.0
        %5155 = vmatpush1.msra.mxu0 %v5043
        %5156 = vmatprep.subr.mxu0 0.0
        %5157 = vmatpush1.msra.mxu0 %v5042
        %5158 = vmatprep.subr.mxu0 0.0
        %5159 = vmatpush1.msra.mxu0 %v5041
        %5160 = vmatprep.subr.mxu0 0.0
        %5161 = vmatpush2.msra.mxu0 0.0
        %5162 = vmatprep.subr.mxu0 0.0
        %5163 = vmatpush2.msra.mxu0 0.0
        %5164 = vmatprep.subr.mxu0 0.0
        %5165 = vmatpush2.msra.mxu0 0.0
        %5166 = vmatprep.subr.mxu0 0.0
        %5167 = vmatpush2.msra.mxu0 0.0
        %5168 = vmatprep.subr.mxu0 0.0
        %5169 = vmatpush2.msra.mxu0 0.0
        %5170 = vmatprep.subr.mxu0 0.0
        %5171 = vmatpush2.msra.mxu0 0.0
        %5172 = vmatprep.subr.mxu0 0.0
        %5173 = vmatpush2.msra.mxu0 0.0
        %5174 = vmatprep.subr.mxu0 0.0
        %5175 = vmatpush2.msra.mxu0 0.0
        %5176 = vmatprep.subr.mxu0 0.0
        %5177 = vmatpush2.msra.mxu0 0.0
        %5178 = vmatprep.subr.mxu0 0.0
        %5179 = vmatpush2.msra.mxu0 0.0
        %5180 = vmatprep.subr.mxu0 0.0
        %5181 = vmatpush2.msra.mxu0 0.0
        %5182 = vmatprep.subr.mxu0 0.0
        %5183 = vmatpush2.msra.mxu0 0.0
        %5184 = vmatprep.subr.mxu0 0.0
        %5185 = vmatpush2.msra.mxu0 0.0
        %5186 = vmatprep.subr.mxu0 0.0
        %5187 = vmatpush2.msra.mxu0 0.0
        %5188 = vmatprep.subr.mxu0 0.0
        %5189 = vmatpush2.msra.mxu0 0.0
        %5190 = vmatprep.subr.mxu0 0.0
        %5191 = vmatpush2.msra.mxu0 0.0
        %5192 = vmatprep.mubr.f32.mxu0 0.0
        %5193 = vmatmul.mubr.f32.gmra.mxu0 %v4441
        %v5194 = vpop.f32.mrf.mxu0
        %v5195 = vadd.f32 %v5125, %v5194
        %v5196 = vpop.f32.mrf.mxu0
        %5197 = vdwg.mxu0
        %v5198 = vadd.f32 %v4819, %v5006
        %v5199 = vadd.f32 %v5198, %v5195
        %v5200 = vmul.f32 %v5199, 0.33333334
        %v5204 = vcombine.low %v5200, %v5006
        %v5206 = vunpack.c.l.s4 1966171168
        %v5207 = vunpack.c.0.s8 %v5206
        %v5208 = vlaneseq
        %v5209 = vshrl.u32 %v5208, 7
        %v5210 = vsub.s32 %v5207, %v5209
        %v5211 = vrot.slane %v5204, %v5210
        %v5213 = vunpack.c.l.s4 1966171168
        %v5214 = vunpack.c.0.s8 %v5213
        %v5215 = vlaneseq
        %v5216 = vshrl.u32 %v5215, 7
        %v5217 = vsub.s32 %v5214, %v5216
        %v5218 = vrot.slane %v5195, %v5217
        %v5219 = vcombine.low %v5211, %v5218
        %v5221 = vunpack.c.l.s4 1966171168
        %v5222 = vunpack.c.0.s8 %v5221
        %v5223 = vlaneseq
        %v5224 = vshrl.u32 %v5223, 7
        %v5225 = vsub.s32 %v5222, %v5224
        %v5226 = vrot.slane %v5219, %v5225
        %v5228 = vlaneseq
        %vm5229 = vcmp.ge.s32.totalorder %v5228, 0
        %vm5230 = vcmp.lt.s32.totalorder %v5228, 384
        %vm5231 = vmand %vm5229, %vm5230
        %5232 = vst.msk [vmem:[%s743] sm:$0x7] %vm5231, %v5226
        %v5239 = vcombine.low %v3613, %v3614
        %v5240 = vcombine.low %v3615, %v4439
        %v5241 = vcombine.low %v4440, %v4441
        %v5243 = vunpack.c.l.s4 1966171168
        %v5244 = vunpack.c.0.s8 %v5243
        %v5245 = vlaneseq
        %v5246 = vshrl.u32 %v5245, 7
        %v5247 = vsub.s32 %v5244, %v5246
        %v5248 = vrot.slane %v5239, %v5247
        %v5250 = vunpack.c.l.s4 1966171168
        %v5251 = vunpack.c.0.s8 %v5250
        %v5252 = vlaneseq
        %v5253 = vshrl.u32 %v5252, 7
        %v5254 = vsub.s32 %v5251, %v5253
        %v5255 = vrot.slane %v5240, %v5254
        %v5257 = vunpack.c.l.s4 1966171168
        %v5258 = vunpack.c.0.s8 %v5257
        %v5259 = vlaneseq
        %v5260 = vshrl.u32 %v5259, 7
        %v5261 = vsub.s32 %v5258, %v5260
        %v5262 = vrot.slane %v5241, %v5261
        %v5263 = vcombine.low %v5248, %v5255
        %v5265 = vunpack.c.l.s4 1966171168
        %v5266 = vunpack.c.0.s8 %v5265
        %v5267 = vlaneseq
        %v5268 = vshrl.u32 %v5267, 7
        %v5269 = vsub.s32 %v5266, %v5268
        %v5270 = vrot.slane %v5263, %v5269
        %v5272 = vunpack.c.l.s4 1966171168
        %v5273 = vunpack.c.0.s8 %v5272
        %v5274 = vlaneseq
        %v5275 = vshrl.u32 %v5274, 7
        %v5276 = vsub.s32 %v5273, %v5275
        %v5277 = vrot.slane %v5262, %v5276
        %v5278 = vcombine.low %v5270, %v5277
        %vm5280 = vcmp.lt.s32.totalorder %v5228, 768
        %vm5281 = vmand %vm5229, %vm5280
        %5282 = vst.msk [vmem:[%s747] sm:$0x3f] %vm5281, %v5278
        %p5283 = scmp.lt.s32.totalorder %s37, 1
        %s5284 = scalar_select %p5283, %s37, 1
        %s5285 = smul.addr %s5284, 3
        %s5286 = scalar_lea.vmem %s19, %s5285
        %p5287 = scmp.lt.s32.totalorder %s37, 1
        %s5288 = scalar_select %p5287, %s37, 1
        %s5289 = smul.addr %s5288, 6
        %s5290 = scalar_lea.vmem %s20, %s5289
        // Predicated region
        $region121: #{network_forward.1} parent=95 // pred_check
          %p5291 = pneg %p464
        $region122: #{network_forward.1} parent=95 // pred_check_branch
          %5293 = sbr.rel (%p5291) target = $region124
        $region123: #{network_forward.1} parent=95 // pred_region
          _
        $region124: #{network_forward.1} parent=95 // pred_fallthru
          _
        // Predicated region
        $region125: #{network_forward.1} parent=95 // pred_check
          %p5294 = pneg %p490
        $region126: #{network_forward.1} parent=95 // pred_check_branch
          %5296 = sbr.rel (%p5294) target = $region128
        $region127: #{network_forward.1} parent=95 // pred_region
          _
        $region128: #{network_forward.1} parent=95 // pred_fallthru
          _
      $region96: #{network_forward.1} parent=5 // pred_fallthru
        _
      %p5297 = scmp.le.s32.totalorder 2, %s32
      // Predicated region
      $region129: #{network_forward.1} parent=5 // pred_check
        %p5298 = pneg %p5297
      $region130: #{network_forward.1} parent=5 // pred_check_branch
        %5300 = sbr.rel (%p5298) target = $region132
      $region131: #{network_forward.1} parent=5 // pred_region
        %s5301 = ssub.s32 %s32, 2
        // Predicated region
        $region133: #{network_forward.1} parent=131 // pred_check
          %p5302 = pneg %p470
        $region134: #{network_forward.1} parent=131 // pred_check_branch
          %5304 = sbr.rel (%p5302) target = $region136
        $region135: #{network_forward.1} parent=131 // pred_region
          %p5305 = scmp.lt.s32.totalorder %s38, 1
          %s5306 = scalar_select %p5305, %s38, 1
          %s5307 = smul.addr %s5306, 3
          %s5308 = scalar_lea.vmem %s19, %s5307
        $region136: #{network_forward.1} parent=131 // pred_fallthru
          _
        // Predicated region
        $region137: #{network_forward.1} parent=131 // pred_check
          %p5309 = pneg %p496
        $region138: #{network_forward.1} parent=131 // pred_check_branch
          %5311 = sbr.rel (%p5309) target = $region140
        $region139: #{network_forward.1} parent=131 // pred_region
          %p5312 = scmp.lt.s32.totalorder %s38, 1
          %s5313 = scalar_select %p5312, %s38, 1
          %s5314 = smul.addr %s5313, 6
          %s5315 = scalar_lea.vmem %s20, %s5314
        $region140: #{network_forward.1} parent=131 // pred_fallthru
          _
      $region132: #{network_forward.1} parent=5 // pred_fallthru
        _
    $region6: #{network_forward.1} parent=1 // loop_footer
      %s36 = sadd.s32 1, %s32
    $region7: #{network_forward.1} parent=1 // loop_footer_branch
      %31 = sbr.rel target = $region3
    $region8: #{network_forward.1} parent=1 // loop_exit
      _
    %5316 = vsyncpa [#allocation4], 1
    %s5317 = scalar_lea.sflag [#allocation4], 1
    %5318 = vsyncpa %s5317, 1
    %5319 = vsyncpa [#allocation6], 1
    %5320 = vsyncpa [#allocation9], 1
    %5321 = vsyncpa [#allocation12], 1

</llo_original>
